<compile_context>
chip_gen: v6e
topology: v6e:2x2x1
jax: 0.10.0
libtpu: 0.0.40
codegen_flags: <defaults>
</compile_context>

<pallas_src>
import functools

import jax
import jax.numpy as jnp
from jax.experimental import pallas as pl
from jax.experimental.pallas import tpu as pltpu

LANE = 128                    # vreg lane width
VMEM_LIMIT = 64 * 1024 * 1024 # >= scoped defaults on v5e/v6e/v7x, <= v7x physical


def _round_up(x, m):
    return ((x + m - 1) // m) * m


# ----------------------------------------------------------------------------
# Activations (applied inside the Pallas kernels)
# ----------------------------------------------------------------------------
def _apply_activation(x, activation):
    if activation == "relu":
        return jnp.maximum(x, 0.0)
    if activation == "leaky_relu":
        return jnp.where(x >= 0, x, 0.01 * x)
    if activation == "selu":
        alpha = 1.6732632423543772
        scale = 1.0507009873554805
        return scale * jnp.where(x > 0, x, alpha * (jnp.exp(x) - 1.0))
    if activation == "siren":
        # TODO(synk): Siren module source not provided in the reference; implemented as sin(x).
        return jnp.sin(x)
    if activation == "none":
        return x
    raise ValueError(f"unknown activation {activation}")


# ----------------------------------------------------------------------------
# Pallas kernels
# ----------------------------------------------------------------------------
def _matmul_bn_act_kernel(p_ref, w_ref, shift_ref, o_ref, *, activation):
    # BN scale is pre-folded into the (bf16) weight columns; epilogue is add + act.
    acc = jnp.dot(p_ref[...], w_ref[...], preferred_element_type=jnp.float32)
    y = acc + shift_ref[...]
    o_ref[...] = _apply_activation(y, activation).astype(o_ref.dtype)


def _matmul_bn_act_res_kernel(p_ref, w_ref, shift_ref, r_ref, o_ref, *, activation):
    acc = jnp.dot(p_ref[...], w_ref[...], preferred_element_type=jnp.float32)
    y = acc + shift_ref[...]
    # residual add last, no activation after the add (matches ResidualBlock.forward)
    o_ref[...] = (_apply_activation(y, activation) + r_ref[...]).astype(o_ref.dtype)


def _maxpool_kernel(p_ref, o_ref):
    # p_ref: (kh*kw, tm, Cp) window patches -> max over the window axis
    o_ref[...] = jnp.max(p_ref[...], axis=0)


def _avgpool_kernel(x_ref, o_ref):
    # x_ref: (1, H*W, Cp) -> mean over spatial axis (AdaptiveAvgPool2d((1,1)))
    o_ref[...] = jnp.mean(x_ref[...], axis=1, keepdims=True)


# ----------------------------------------------------------------------------
# Pallas wrappers
# ----------------------------------------------------------------------------
def fused_matmul_bn_act(patches, w_mat, shift, out_cols, activation="none",
                        residual=None):
    """act((M, K) @ (K, Cout_p) + shift) (+ residual).  Cout_p is lane-padded.

    Returns the (M, out_cols) slice of the padded result.
    """
    M, K = patches.shape
    cout_p = w_mat.shape[1]

    # Large M tiles amortize the ~0.35us per-grid-step overhead; pad M so the
    # grid divides evenly.  bf16 LHS -> keep row counts multiples of 16.
    m_pad = _round_up(M, 16)
    if m_pad > 512:
        tm = 512
        m_pad = _round_up(m_pad, tm)
    else:
        tm = m_pad
    grid = (m_pad // tm,)

    p = patches.astype(jnp.bfloat16)
    if m_pad != M:
        p = jnp.pad(p, ((0, m_pad - M), (0, 0)))

    in_specs = [
        pl.BlockSpec((tm, K), lambda i: (i, 0)),
        pl.BlockSpec((K, cout_p), lambda i: (0, 0)),
        pl.BlockSpec((1, cout_p), lambda i: (0, 0)),
    ]
    args = [p, w_mat, shift]
    if residual is not None:
        r = residual.astype(jnp.float32)
        r = jnp.pad(r, ((0, m_pad - M), (0, cout_p - r.shape[1])))
        in_specs.append(pl.BlockSpec((tm, cout_p), lambda i: (i, 0)))
        args.append(r)
        kernel = functools.partial(_matmul_bn_act_res_kernel, activation=activation)
    else:
        kernel = functools.partial(_matmul_bn_act_kernel, activation=activation)

    out = pl.pallas_call(
        kernel,
        grid=grid,
        in_specs=in_specs,
        out_specs=pl.BlockSpec((tm, cout_p), lambda i: (i, 0)),
        out_shape=jax.ShapeDtypeStruct((m_pad, cout_p), jnp.float32),
        compiler_params=pltpu.CompilerParams(
            dimension_semantics=("parallel",),
            vmem_limit_bytes=VMEM_LIMIT),
    )(*args)
    return out[:M, :out_cols]


def _im2col(x_nhwc, kh, kw, stride, pad):
    """Plain-JAX glue: extract conv patches.  K-axis order is (kh, kw, Cin)."""
    # TODO(synk): patch extraction for k>1 convs could be fused in-kernel with halo
    # tiles to cut HBM traffic further; kept as glue for robustness.
    N, H, W, C = x_nhwc.shape
    xp = jnp.pad(x_nhwc, ((0, 0), (pad, pad), (pad, pad), (0, 0)))
    Ho = (H + 2 * pad - kh) // stride + 1
    Wo = (W + 2 * pad - kw) // stride + 1
    cols = []
    for i in range(kh):
        for j in range(kw):
            cols.append(
                xp[:, i:i + (Ho - 1) * stride + 1:stride,
                      j:j + (Wo - 1) * stride + 1:stride, :])
    patches = jnp.stack(cols, axis=3)                    # (N, Ho, Wo, kh*kw, C)
    return patches.reshape(N * Ho * Wo, kh * kw * C), (N, Ho, Wo)


def conv_bn_act(x_nhwc, p, stride, activation, residual=None):
    """conv_bn(...) + activation_func(activation), Conv2dAuto padding = k // 2."""
    k, cin, cout = p["ksize"], p["cin"], p["cout"]
    if k == 1:
        # 1x1 conv: no im2col — apply stride by slicing, reshape to (M, Cin).
        xs = x_nhwc[:, ::stride, ::stride, :] if stride > 1 else x_nhwc
        N, Ho, Wo, _ = xs.shape
        patches = xs.astype(jnp.bfloat16).reshape(N * Ho * Wo, cin)
    else:
        pad = k // 2
        patches, (N, Ho, Wo) = _im2col(x_nhwc.astype(jnp.bfloat16), k, k, stride, pad)
    M = N * Ho * Wo
    res_flat = None if residual is None else residual.reshape(M, cout)
    out = fused_matmul_bn_act(patches, p["w_mat"], p["shift"], cout,
                              activation=activation, residual=res_flat)
    return out.reshape(N, Ho, Wo, cout)


def maxpool2d_3x3_s2_p1(x_nhwc):
    N, H, W, C = x_nhwc.shape
    k, stride, pad = 3, 2, 1
    Ho = (H + 2 * pad - k) // stride + 1
    Wo = (W + 2 * pad - k) // stride + 1
    xp = jnp.pad(x_nhwc, ((0, 0), (pad, pad), (pad, pad), (0, 0)),
                 constant_values=-jnp.inf)
    cols = []
    for i in range(k):
        for j in range(k):
            cols.append(
                xp[:, i:i + (Ho - 1) * stride + 1:stride,
                      j:j + (Wo - 1) * stride + 1:stride, :])
    patches = jnp.stack(cols, axis=0).reshape(k * k, N * Ho * Wo, C)

    M = N * Ho * Wo
    cp = _round_up(C, LANE)
    m_pad = _round_up(M, 8)
    if m_pad > 512:
        tm = 512
        m_pad = _round_up(m_pad, tm)
    else:
        tm = m_pad
    patches = jnp.pad(patches, ((0, 0), (0, m_pad - M), (0, cp - C)),
                      constant_values=-jnp.inf)

    out = pl.pallas_call(
        _maxpool_kernel,
        grid=(m_pad // tm,),
        in_specs=[pl.BlockSpec((k * k, tm, cp), lambda i: (0, i, 0))],
        out_specs=pl.BlockSpec((tm, cp), lambda i: (i, 0)),
        out_shape=jax.ShapeDtypeStruct((m_pad, cp), jnp.float32),
        compiler_params=pltpu.CompilerParams(
            dimension_semantics=("parallel",),
            vmem_limit_bytes=VMEM_LIMIT),
    )(patches)
    return out[:M, :C].reshape(N, Ho, Wo, C)


def adaptive_avgpool_1x1(x_nhwc):
    N, H, W, C = x_nhwc.shape
    cp = _round_up(C, LANE)
    xf = x_nhwc.reshape(N, H * W, C)
    if cp != C:
        xf = jnp.pad(xf, ((0, 0), (0, 0), (0, cp - C)))
    # TODO(synk): for very large H*W, tile the spatial axis with an f32 accumulator.
    out = pl.pallas_call(
        _avgpool_kernel,
        grid=(N,),
        in_specs=[pl.BlockSpec((1, H * W, cp), lambda n: (n, 0, 0))],
        out_specs=pl.BlockSpec((1, 1, cp), lambda n: (n, 0, 0)),
        out_shape=jax.ShapeDtypeStruct((N, 1, cp), jnp.float32),
        compiler_params=pltpu.CompilerParams(
            dimension_semantics=("parallel",),
            vmem_limit_bytes=VMEM_LIMIT),
    )(xf)
    return out[:, :, :C]                                  # (N, 1, C)


# ----------------------------------------------------------------------------
# Parameter construction (deterministic, mirrors the PyTorch module structure)
# ----------------------------------------------------------------------------
def _init_conv_bn(key, cin, cout, k):
    kconv, kbn = jax.random.split(key)
    fan_in = cin * k * k
    w = jax.random.normal(kconv, (cout, cin, k, k), jnp.float32) / jnp.sqrt(float(fan_in))
    k1, k2, k3, k4 = jax.random.split(kbn, 4)
    gamma = 1.0 + 0.1 * jax.random.normal(k1, (cout,), jnp.float32)
    beta = 0.1 * jax.random.normal(k2, (cout,), jnp.float32)
    running_mean = 0.1 * jax.random.normal(k3, (cout,), jnp.float32)
    running_var = 1.0 + 0.1 * jax.random.uniform(k4, (cout,), jnp.float32)
    eps = 1e-5
    scale = gamma / jnp.sqrt(running_var + eps)
    shift = beta - running_mean * scale

    # Pre-transpose to matmul layout (K, Cout) with im2col K-order (kh, kw, Cin),
    # fold the BN scale into the weight columns, lane-pad Cout, cast to bf16.
    w_mat = jnp.transpose(w, (2, 3, 1, 0)).reshape(k * k * cin, cout) * scale[None, :]
    cout_p = _round_up(cout, LANE)
    if cout_p != cout:
        w_mat = jnp.pad(w_mat, ((0, 0), (0, cout_p - cout)))
        shift = jnp.pad(shift, (0, cout_p - cout))
    return {
        "w_mat": w_mat.astype(jnp.bfloat16),
        "shift": shift.reshape(1, cout_p).astype(jnp.float32),
        "ksize": k,
        "cin": cin,
        "cout": cout,
    }


def build_resnet_encoder_params(key, in_channels, blocks_sizes, depths, expansion=4):
    keys = iter(jax.random.split(key, 256))
    params = {"gate": _init_conv_bn(next(keys), in_channels, blocks_sizes[0], 7)}

    # ResNetEncoder layer configs
    layer_cfgs = [(blocks_sizes[0], blocks_sizes[0], depths[0])]
    for (cin, cout), n in zip(zip(blocks_sizes, blocks_sizes[1:]), depths[1:]):
        layer_cfgs.append((cin * expansion, cout, n))

    layers = []
    for lin, lout, n in layer_cfgs:
        downsampling = 2 if lin != lout else 1
        blocks = []
        bin_, d = lin, downsampling
        for _ in range(n):
            expanded = lout * expansion
            block = {
                "downsampling": d,
                "conv1": _init_conv_bn(next(keys), bin_, lout, 1),      # 1x1
                "conv2": _init_conv_bn(next(keys), lout, lout, 3),      # 3x3, stride d
                "conv3": _init_conv_bn(next(keys), lout, expanded, 1),  # 1x1
                "shortcut": (_init_conv_bn(next(keys), bin_, expanded, 1)
                             if bin_ != expanded else None),            # 1x1, stride d
            }
            blocks.append(block)
            bin_, d = expanded, 1
        layers.append(blocks)
    params["layers"] = layers
    return params


# ----------------------------------------------------------------------------
# Forward pass (ResNetEncoder.forward)
# ----------------------------------------------------------------------------
def bottleneck_block_forward(x, block, activation):
    d = block["downsampling"]
    if block["shortcut"] is not None:
        residual = conv_bn_act(x, block["shortcut"], stride=d, activation="none")
    else:
        residual = x
    y = conv_bn_act(x, block["conv1"], stride=1, activation=activation)
    y = conv_bn_act(y, block["conv2"], stride=d, activation=activation)
    # last conv_bn has no activation; residual add is fused into the kernel
    y = conv_bn_act(y, block["conv3"], stride=1, activation="none", residual=residual)
    return y


def resnet_encoder_forward(x_nchw, params, activation="siren"):
    x = jnp.transpose(x_nchw, (0, 2, 3, 1))  # NCHW -> NHWC (kernel layout)
    # gate: conv7x7 s2 p3 -> BN -> activation -> maxpool3x3 s2 p1
    x = conv_bn_act(x, params["gate"], stride=2, activation=activation)
    x = maxpool2d_3x3_s2_p1(x)
    for layer in params["layers"]:
        for block in layer:
            x = bottleneck_block_forward(x, block, activation)
    pooled = adaptive_avgpool_1x1(x)               # (N, 1, C)
    N, _, C = pooled.shape
    return jnp.transpose(pooled.reshape(N, 1, 1, C), (0, 3, 1, 2))  # NCHW (N, C, 1, 1)


# ----------------------------------------------------------------------------
if __name__ == "__main__":
    key = jax.random.PRNGKey(0)
    kx, kp = jax.random.split(key)

    # Small config consistent with the module structure.
    in_channels = 4
    blocks_sizes = (8, 16)
    depths = (2, 2)
    expansion = 4  # ResNetBottleNeckBlock.expansion

    x = jax.random.normal(kx, (2, in_channels, 16, 16), jnp.float32)  # NCHW input
    params = build_resnet_encoder_params(kp, in_channels, blocks_sizes, depths,
                                         expansion=expansion)

    fwd = jax.jit(lambda inp: resnet_encoder_forward(inp, params, activation="siren"))
    out = jax.block_until_ready(fwd(x))

    expected_c = blocks_sizes[-1] * expansion
    assert out.shape == (2, expected_c, 1, 1), out.shape
    assert jnp.all(jnp.isfinite(out))
    print("KERNEL_OK")
</pallas_src>

<mosaic_0001>
module attributes {stable_mosaic.version = 11 : i64} {
  func.func @_matmul_bn_act_kernel(%arg0: i32, %arg1: memref<128x196xbf16, #tpu.memory_space<vmem>>, %arg2: memref<196x128xbf16, #tpu.memory_space<vmem>>, %arg3: memref<1x128xf32, #tpu.memory_space<vmem>>, %arg4: memref<128x128xf32, #tpu.memory_space<vmem>>) attributes {dimension_semantics = [#tpu.dimension_semantics<parallel>], iteration_bounds = array<i64: 1>, scalar_prefetch = 0 : i64, scratch_operands = 0 : i64, tpu.core_type = #tpu.core_type<tc>, window_params = [{transform_indices = @transform_0, window_bounds = array<i64: 128, 196>}, {pipeline_mode = #tpu.pipeline_mode<synchronous>, transform_indices = @transform_1, window_bounds = array<i64: 196, 128>}, {pipeline_mode = #tpu.pipeline_mode<synchronous>, transform_indices = @transform_2, window_bounds = array<i64: 1, 128>}, {transform_indices = @transform_3, window_bounds = array<i64: 128, 128>}]} {
    %c0 = arith.constant 0 : index
    %c0_0 = arith.constant 0 : index
    %0 = vector.load %arg1[%c0, %c0_0] : memref<128x196xbf16, #tpu.memory_space<vmem>>, vector<128x196xbf16>
    %c0_1 = arith.constant 0 : index
    %c0_2 = arith.constant 0 : index
    %1 = vector.load %arg2[%c0_1, %c0_2] : memref<196x128xbf16, #tpu.memory_space<vmem>>, vector<196x128xbf16>
    %cst = arith.constant dense<0.000000e+00> : vector<128x128xf32>
    %2 = tpu.matmul %0, %1, %cst {dimension_numbers = #tpu.dot_dimension_numbers<[1], [0], [0], [1], [0, 0, 1, 1], [], []>} : vector<128x196xbf16>, vector<196x128xbf16>, vector<128x128xf32> -> vector<128x128xf32>
    %c0_3 = arith.constant 0 : index
    %c0_4 = arith.constant 0 : index
    %3 = vector.load %arg3[%c0_3, %c0_4] : memref<1x128xf32, #tpu.memory_space<vmem>>, vector<1x128xf32>
    %4 = vector.broadcast %3 : vector<1x128xf32> to vector<128x128xf32>
    %5 = arith.addf %2, %4 : vector<128x128xf32>
    %6 = math.sin %5 : vector<128x128xf32>
    %c0_5 = arith.constant 0 : index
    %c0_6 = arith.constant 0 : index
    %7 = vector.load %arg4[%c0_5, %c0_6] : memref<128x128xf32, #tpu.memory_space<vmem>>, vector<128x128xf32>
    tpu.vector_store %arg4[%c0_5, %c0_6], %6 {strides = array<i32>} : memref<128x128xf32, #tpu.memory_space<vmem>>, vector<128x128xf32>,
    return
  }
  func.func @transform_0(%arg0: i32) -> (i32, i32) {
    %c0_i32 = arith.constant 0 : i32
    %c0_i32_0 = arith.constant 0 : i32
    return %arg0, %c0_i32 : i32, i32
  }
  func.func @transform_1(%arg0: i32) -> (i32, i32) {
    %c0_i32 = arith.constant 0 : i32
    %c0_i32_0 = arith.constant 0 : i32
    %c0_i32_1 = arith.constant 0 : i32
    return %c0_i32, %c0_i32_0 : i32, i32
  }
  func.func @transform_2(%arg0: i32) -> (i32, i32) {
    %c0_i32 = arith.constant 0 : i32
    %c0_i32_0 = arith.constant 0 : i32
    %c0_i32_1 = arith.constant 0 : i32
    return %c0_i32, %c0_i32_0 : i32, i32
  }
  func.func @transform_3(%arg0: i32) -> (i32, i32) {
    %c0_i32 = arith.constant 0 : i32
    %c0_i32_0 = arith.constant 0 : i32
    return %arg0, %c0_i32 : i32, i32
  }
}

module attributes {stable_mosaic.version = 11 : i64} {
  func.func @_maxpool_kernel(%arg0: i32, %arg1: memref<9x32x128xf32, #tpu.memory_space<vmem>>, %arg2: memref<32x128xf32, #tpu.memory_space<vmem>>) attributes {dimension_semantics = [#tpu.dimension_semantics<parallel>], iteration_bounds = array<i64: 1>, scalar_prefetch = 0 : i64, scratch_operands = 0 : i64, tpu.core_type = #tpu.core_type<tc>, window_params = [{transform_indices = @transform_0, window_bounds = array<i64: 9, 32, 128>}, {transform_indices = @transform_1, window_bounds = array<i64: 32, 128>}]} {
    %c0 = arith.constant 0 : index
    %c0_0 = arith.constant 0 : index
    %c0_1 = arith.constant 0 : index
    %0 = vector.load %arg1[%c0, %c0_0, %c0_1] : memref<9x32x128xf32, #tpu.memory_space<vmem>>, vector<9x32x128xf32>
    %cst = arith.constant dense<0xFF800000> : vector<32x128xf32>
    %1 = vector.multi_reduction <maximumf>, %0, %cst [0] : vector<9x32x128xf32> to vector<32x128xf32>
    %c0_2 = arith.constant 0 : index
    %c0_3 = arith.constant 0 : index
    %2 = vector.load %arg2[%c0_2, %c0_3] : memref<32x128xf32, #tpu.memory_space<vmem>>, vector<32x128xf32>
    tpu.vector_store %arg2[%c0_2, %c0_3], %1 {strides = array<i32>} : memref<32x128xf32, #tpu.memory_space<vmem>>, vector<32x128xf32>,
    return
  }
  func.func @transform_0(%arg0: i32) -> (i32, i32, i32) {
    %c0_i32 = arith.constant 0 : i32
    %c0_i32_0 = arith.constant 0 : i32
    %c0_i32_1 = arith.constant 0 : i32
    return %c0_i32, %arg0, %c0_i32_0 : i32, i32, i32
  }
  func.func @transform_1(%arg0: i32) -> (i32, i32) {
    %c0_i32 = arith.constant 0 : i32
    %c0_i32_0 = arith.constant 0 : i32
    return %arg0, %c0_i32 : i32, i32
  }
}

module attributes {stable_mosaic.version = 11 : i64} {
  func.func @_matmul_bn_act_kernel(%arg0: i32, %arg1: memref<32x8xbf16, #tpu.memory_space<vmem>>, %arg2: memref<8x128xbf16, #tpu.memory_space<vmem>>, %arg3: memref<1x128xf32, #tpu.memory_space<vmem>>, %arg4: memref<32x128xf32, #tpu.memory_space<vmem>>) attributes {dimension_semantics = [#tpu.dimension_semantics<parallel>], iteration_bounds = array<i64: 1>, scalar_prefetch = 0 : i64, scratch_operands = 0 : i64, tpu.core_type = #tpu.core_type<tc>, window_params = [{transform_indices = @transform_0, window_bounds = array<i64: 32, 8>}, {pipeline_mode = #tpu.pipeline_mode<synchronous>, transform_indices = @transform_1, window_bounds = array<i64: 8, 128>}, {pipeline_mode = #tpu.pipeline_mode<synchronous>, transform_indices = @transform_2, window_bounds = array<i64: 1, 128>}, {transform_indices = @transform_3, window_bounds = array<i64: 32, 128>}]} {
    %c0 = arith.constant 0 : index
    %c0_0 = arith.constant 0 : index
    %0 = vector.load %arg1[%c0, %c0_0] : memref<32x8xbf16, #tpu.memory_space<vmem>>, vector<32x8xbf16>
    %c0_1 = arith.constant 0 : index
    %c0_2 = arith.constant 0 : index
    %1 = vector.load %arg2[%c0_1, %c0_2] : memref<8x128xbf16, #tpu.memory_space<vmem>>, vector<8x128xbf16>
    %cst = arith.constant dense<0.000000e+00> : vector<32x128xf32>
    %2 = tpu.matmul %0, %1, %cst {dimension_numbers = #tpu.dot_dimension_numbers<[1], [0], [0], [1], [0, 0, 1, 1], [], []>} : vector<32x8xbf16>, vector<8x128xbf16>, vector<32x128xf32> -> vector<32x128xf32>
    %c0_3 = arith.constant 0 : index
    %c0_4 = arith.constant 0 : index
    %3 = vector.load %arg3[%c0_3, %c0_4] : memref<1x128xf32, #tpu.memory_space<vmem>>, vector<1x128xf32>
    %4 = vector.broadcast %3 : vector<1x128xf32> to vector<32x128xf32>
    %5 = arith.addf %2, %4 : vector<32x128xf32>
    %6 = math.sin %5 : vector<32x128xf32>
    %c0_5 = arith.constant 0 : index
    %c0_6 = arith.constant 0 : index
    %7 = vector.load %arg4[%c0_5, %c0_6] : memref<32x128xf32, #tpu.memory_space<vmem>>, vector<32x128xf32>
    tpu.vector_store %arg4[%c0_5, %c0_6], %6 {strides = array<i32>} : memref<32x128xf32, #tpu.memory_space<vmem>>, vector<32x128xf32>,
    return
  }
  func.func @transform_0(%arg0: i32) -> (i32, i32) {
    %c0_i32 = arith.constant 0 : i32
    %c0_i32_0 = arith.constant 0 : i32
    return %arg0, %c0_i32 : i32, i32
  }
  func.func @transform_1(%arg0: i32) -> (i32, i32) {
    %c0_i32 = arith.constant 0 : i32
    %c0_i32_0 = arith.constant 0 : i32
    %c0_i32_1 = arith.constant 0 : i32
    return %c0_i32, %c0_i32_0 : i32, i32
  }
  func.func @transform_2(%arg0: i32) -> (i32, i32) {
    %c0_i32 = arith.constant 0 : i32
    %c0_i32_0 = arith.constant 0 : i32
    %c0_i32_1 = arith.constant 0 : i32
    return %c0_i32, %c0_i32_0 : i32, i32
  }
  func.func @transform_3(%arg0: i32) -> (i32, i32) {
    %c0_i32 = arith.constant 0 : i32
    %c0_i32_0 = arith.constant 0 : i32
    return %arg0, %c0_i32 : i32, i32
  }
}

module attributes {stable_mosaic.version = 11 : i64} {
  func.func @_matmul_bn_act_kernel(%arg0: i32, %arg1: memref<32x72xbf16, #tpu.memory_space<vmem>>, %arg2: memref<72x128xbf16, #tpu.memory_space<vmem>>, %arg3: memref<1x128xf32, #tpu.memory_space<vmem>>, %arg4: memref<32x128xf32, #tpu.memory_space<vmem>>) attributes {dimension_semantics = [#tpu.dimension_semantics<parallel>], iteration_bounds = array<i64: 1>, scalar_prefetch = 0 : i64, scratch_operands = 0 : i64, tpu.core_type = #tpu.core_type<tc>, window_params = [{transform_indices = @transform_0, window_bounds = array<i64: 32, 72>}, {pipeline_mode = #tpu.pipeline_mode<synchronous>, transform_indices = @transform_1, window_bounds = array<i64: 72, 128>}, {pipeline_mode = #tpu.pipeline_mode<synchronous>, transform_indices = @transform_2, window_bounds = array<i64: 1, 128>}, {transform_indices = @transform_3, window_bounds = array<i64: 32, 128>}]} {
    %c0 = arith.constant 0 : index
    %c0_0 = arith.constant 0 : index
    %0 = vector.load %arg1[%c0, %c0_0] : memref<32x72xbf16, #tpu.memory_space<vmem>>, vector<32x72xbf16>
    %c0_1 = arith.constant 0 : index
    %c0_2 = arith.constant 0 : index
    %1 = vector.load %arg2[%c0_1, %c0_2] : memref<72x128xbf16, #tpu.memory_space<vmem>>, vector<72x128xbf16>
    %cst = arith.constant dense<0.000000e+00> : vector<32x128xf32>
    %2 = tpu.matmul %0, %1, %cst {dimension_numbers = #tpu.dot_dimension_numbers<[1], [0], [0], [1], [0, 0, 1, 1], [], []>} : vector<32x72xbf16>, vector<72x128xbf16>, vector<32x128xf32> -> vector<32x128xf32>
    %c0_3 = arith.constant 0 : index
    %c0_4 = arith.constant 0 : index
    %3 = vector.load %arg3[%c0_3, %c0_4] : memref<1x128xf32, #tpu.memory_space<vmem>>, vector<1x128xf32>
    %4 = vector.broadcast %3 : vector<1x128xf32> to vector<32x128xf32>
    %5 = arith.addf %2, %4 : vector<32x128xf32>
    %6 = math.sin %5 : vector<32x128xf32>
    %c0_5 = arith.constant 0 : index
    %c0_6 = arith.constant 0 : index
    %7 = vector.load %arg4[%c0_5, %c0_6] : memref<32x128xf32, #tpu.memory_space<vmem>>, vector<32x128xf32>
    tpu.vector_store %arg4[%c0_5, %c0_6], %6 {strides = array<i32>} : memref<32x128xf32, #tpu.memory_space<vmem>>, vector<32x128xf32>,
    return
  }
  func.func @transform_0(%arg0: i32) -> (i32, i32) {
    %c0_i32 = arith.constant 0 : i32
    %c0_i32_0 = arith.constant 0 : i32
    return %arg0, %c0_i32 : i32, i32
  }
  func.func @transform_1(%arg0: i32) -> (i32, i32) {
    %c0_i32 = arith.constant 0 : i32
    %c0_i32_0 = arith.constant 0 : i32
    %c0_i32_1 = arith.constant 0 : i32
    return %c0_i32, %c0_i32_0 : i32, i32
  }
  func.func @transform_2(%arg0: i32) -> (i32, i32) {
    %c0_i32 = arith.constant 0 : i32
    %c0_i32_0 = arith.constant 0 : i32
    %c0_i32_1 = arith.constant 0 : i32
    return %c0_i32, %c0_i32_0 : i32, i32
  }
  func.func @transform_3(%arg0: i32) -> (i32, i32) {
    %c0_i32 = arith.constant 0 : i32
    %c0_i32_0 = arith.constant 0 : i32
    return %arg0, %c0_i32 : i32, i32
  }
}

module attributes {stable_mosaic.version = 11 : i64} {
  func.func @_matmul_bn_act_kernel(%arg0: i32, %arg1: memref<32x8xbf16, #tpu.memory_space<vmem>>, %arg2: memref<8x128xbf16, #tpu.memory_space<vmem>>, %arg3: memref<1x128xf32, #tpu.memory_space<vmem>>, %arg4: memref<32x128xf32, #tpu.memory_space<vmem>>) attributes {dimension_semantics = [#tpu.dimension_semantics<parallel>], iteration_bounds = array<i64: 1>, scalar_prefetch = 0 : i64, scratch_operands = 0 : i64, tpu.core_type = #tpu.core_type<tc>, window_params = [{transform_indices = @transform_0, window_bounds = array<i64: 32, 8>}, {pipeline_mode = #tpu.pipeline_mode<synchronous>, transform_indices = @transform_1, window_bounds = array<i64: 8, 128>}, {pipeline_mode = #tpu.pipeline_mode<synchronous>, transform_indices = @transform_2, window_bounds = array<i64: 1, 128>}, {transform_indices = @transform_3, window_bounds = array<i64: 32, 128>}]} {
    %c0 = arith.constant 0 : index
    %c0_0 = arith.constant 0 : index
    %0 = vector.load %arg1[%c0, %c0_0] : memref<32x8xbf16, #tpu.memory_space<vmem>>, vector<32x8xbf16>
    %c0_1 = arith.constant 0 : index
    %c0_2 = arith.constant 0 : index
    %1 = vector.load %arg2[%c0_1, %c0_2] : memref<8x128xbf16, #tpu.memory_space<vmem>>, vector<8x128xbf16>
    %cst = arith.constant dense<0.000000e+00> : vector<32x128xf32>
    %2 = tpu.matmul %0, %1, %cst {dimension_numbers = #tpu.dot_dimension_numbers<[1], [0], [0], [1], [0, 0, 1, 1], [], []>} : vector<32x8xbf16>, vector<8x128xbf16>, vector<32x128xf32> -> vector<32x128xf32>
    %c0_3 = arith.constant 0 : index
    %c0_4 = arith.constant 0 : index
    %3 = vector.load %arg3[%c0_3, %c0_4] : memref<1x128xf32, #tpu.memory_space<vmem>>, vector<1x128xf32>
    %4 = vector.broadcast %3 : vector<1x128xf32> to vector<32x128xf32>
    %5 = arith.addf %2, %4 : vector<32x128xf32>
    %c0_5 = arith.constant 0 : index
    %c0_6 = arith.constant 0 : index
    %6 = vector.load %arg4[%c0_5, %c0_6] : memref<32x128xf32, #tpu.memory_space<vmem>>, vector<32x128xf32>
    tpu.vector_store %arg4[%c0_5, %c0_6], %5 {strides = array<i32>} : memref<32x128xf32, #tpu.memory_space<vmem>>, vector<32x128xf32>,
    return
  }
  func.func @transform_0(%arg0: i32) -> (i32, i32) {
    %c0_i32 = arith.constant 0 : i32
    %c0_i32_0 = arith.constant 0 : i32
    return %arg0, %c0_i32 : i32, i32
  }
  func.func @transform_1(%arg0: i32) -> (i32, i32) {
    %c0_i32 = arith.constant 0 : i32
    %c0_i32_0 = arith.constant 0 : i32
    %c0_i32_1 = arith.constant 0 : i32
    return %c0_i32, %c0_i32_0 : i32, i32
  }
  func.func @transform_2(%arg0: i32) -> (i32, i32) {
    %c0_i32 = arith.constant 0 : i32
    %c0_i32_0 = arith.constant 0 : i32
    %c0_i32_1 = arith.constant 0 : i32
    return %c0_i32, %c0_i32_0 : i32, i32
  }
  func.func @transform_3(%arg0: i32) -> (i32, i32) {
    %c0_i32 = arith.constant 0 : i32
    %c0_i32_0 = arith.constant 0 : i32
    return %arg0, %c0_i32 : i32, i32
  }
}

module attributes {stable_mosaic.version = 11 : i64} {
  func.func @_matmul_bn_act_res_kernel(%arg0: i32, %arg1: memref<32x8xbf16, #tpu.memory_space<vmem>>, %arg2: memref<8x128xbf16, #tpu.memory_space<vmem>>, %arg3: memref<1x128xf32, #tpu.memory_space<vmem>>, %arg4: memref<32x128xf32, #tpu.memory_space<vmem>>, %arg5: memref<32x128xf32, #tpu.memory_space<vmem>>) attributes {dimension_semantics = [#tpu.dimension_semantics<parallel>], iteration_bounds = array<i64: 1>, scalar_prefetch = 0 : i64, scratch_operands = 0 : i64, tpu.core_type = #tpu.core_type<tc>, window_params = [{transform_indices = @transform_0, window_bounds = array<i64: 32, 8>}, {pipeline_mode = #tpu.pipeline_mode<synchronous>, transform_indices = @transform_1, window_bounds = array<i64: 8, 128>}, {pipeline_mode = #tpu.pipeline_mode<synchronous>, transform_indices = @transform_2, window_bounds = array<i64: 1, 128>}, {transform_indices = @transform_3, window_bounds = array<i64: 32, 128>}, {transform_indices = @transform_4, window_bounds = array<i64: 32, 128>}]} {
    %c0 = arith.constant 0 : index
    %c0_0 = arith.constant 0 : index
    %0 = vector.load %arg1[%c0, %c0_0] : memref<32x8xbf16, #tpu.memory_space<vmem>>, vector<32x8xbf16>
    %c0_1 = arith.constant 0 : index
    %c0_2 = arith.constant 0 : index
    %1 = vector.load %arg2[%c0_1, %c0_2] : memref<8x128xbf16, #tpu.memory_space<vmem>>, vector<8x128xbf16>
    %cst = arith.constant dense<0.000000e+00> : vector<32x128xf32>
    %2 = tpu.matmul %0, %1, %cst {dimension_numbers = #tpu.dot_dimension_numbers<[1], [0], [0], [1], [0, 0, 1, 1], [], []>} : vector<32x8xbf16>, vector<8x128xbf16>, vector<32x128xf32> -> vector<32x128xf32>
    %c0_3 = arith.constant 0 : index
    %c0_4 = arith.constant 0 : index
    %3 = vector.load %arg3[%c0_3, %c0_4] : memref<1x128xf32, #tpu.memory_space<vmem>>, vector<1x128xf32>
    %4 = vector.broadcast %3 : vector<1x128xf32> to vector<32x128xf32>
    %5 = arith.addf %2, %4 : vector<32x128xf32>
    %c0_5 = arith.constant 0 : index
    %c0_6 = arith.constant 0 : index
    %6 = vector.load %arg4[%c0_5, %c0_6] : memref<32x128xf32, #tpu.memory_space<vmem>>, vector<32x128xf32>
    %7 = arith.addf %5, %6 : vector<32x128xf32>
    %c0_7 = arith.constant 0 : index
    %c0_8 = arith.constant 0 : index
    %8 = vector.load %arg5[%c0_7, %c0_8] : memref<32x128xf32, #tpu.memory_space<vmem>>, vector<32x128xf32>
    tpu.vector_store %arg5[%c0_7, %c0_8], %7 {strides = array<i32>} : memref<32x128xf32, #tpu.memory_space<vmem>>, vector<32x128xf32>,
    return
  }
  func.func @transform_0(%arg0: i32) -> (i32, i32) {
    %c0_i32 = arith.constant 0 : i32
    %c0_i32_0 = arith.constant 0 : i32
    return %arg0, %c0_i32 : i32, i32
  }
  func.func @transform_1(%arg0: i32) -> (i32, i32) {
    %c0_i32 = arith.constant 0 : i32
    %c0_i32_0 = arith.constant 0 : i32
    %c0_i32_1 = arith.constant 0 : i32
    return %c0_i32, %c0_i32_0 : i32, i32
  }
  func.func @transform_2(%arg0: i32) -> (i32, i32) {
    %c0_i32 = arith.constant 0 : i32
    %c0_i32_0 = arith.constant 0 : i32
    %c0_i32_1 = arith.constant 0 : i32
    return %c0_i32, %c0_i32_0 : i32, i32
  }
  func.func @transform_3(%arg0: i32) -> (i32, i32) {
    %c0_i32 = arith.constant 0 : i32
    %c0_i32_0 = arith.constant 0 : i32
    return %arg0, %c0_i32 : i32, i32
  }
  func.func @transform_4(%arg0: i32) -> (i32, i32) {
    %c0_i32 = arith.constant 0 : i32
    %c0_i32_0 = arith.constant 0 : i32
    return %arg0, %c0_i32 : i32, i32
  }
}

module attributes {stable_mosaic.version = 11 : i64} {
  func.func @_matmul_bn_act_kernel(%arg0: i32, %arg1: memref<32x32xbf16, #tpu.memory_space<vmem>>, %arg2: memref<32x128xbf16, #tpu.memory_space<vmem>>, %arg3: memref<1x128xf32, #tpu.memory_space<vmem>>, %arg4: memref<32x128xf32, #tpu.memory_space<vmem>>) attributes {dimension_semantics = [#tpu.dimension_semantics<parallel>], iteration_bounds = array<i64: 1>, scalar_prefetch = 0 : i64, scratch_operands = 0 : i64, tpu.core_type = #tpu.core_type<tc>, window_params = [{transform_indices = @transform_0, window_bounds = array<i64: 32, 32>}, {pipeline_mode = #tpu.pipeline_mode<synchronous>, transform_indices = @transform_1, window_bounds = array<i64: 32, 128>}, {pipeline_mode = #tpu.pipeline_mode<synchronous>, transform_indices = @transform_2, window_bounds = array<i64: 1, 128>}, {transform_indices = @transform_3, window_bounds = array<i64: 32, 128>}]} {
    %c0 = arith.constant 0 : index
    %c0_0 = arith.constant 0 : index
    %0 = vector.load %arg1[%c0, %c0_0] : memref<32x32xbf16, #tpu.memory_space<vmem>>, vector<32x32xbf16>
    %c0_1 = arith.constant 0 : index
    %c0_2 = arith.constant 0 : index
    %1 = vector.load %arg2[%c0_1, %c0_2] : memref<32x128xbf16, #tpu.memory_space<vmem>>, vector<32x128xbf16>
    %cst = arith.constant dense<0.000000e+00> : vector<32x128xf32>
    %2 = tpu.matmul %0, %1, %cst {dimension_numbers = #tpu.dot_dimension_numbers<[1], [0], [0], [1], [0, 0, 1, 1], [], []>} : vector<32x32xbf16>, vector<32x128xbf16>, vector<32x128xf32> -> vector<32x128xf32>
    %c0_3 = arith.constant 0 : index
    %c0_4 = arith.constant 0 : index
    %3 = vector.load %arg3[%c0_3, %c0_4] : memref<1x128xf32, #tpu.memory_space<vmem>>, vector<1x128xf32>
    %4 = vector.broadcast %3 : vector<1x128xf32> to vector<32x128xf32>
    %5 = arith.addf %2, %4 : vector<32x128xf32>
    %6 = math.sin %5 : vector<32x128xf32>
    %c0_5 = arith.constant 0 : index
    %c0_6 = arith.constant 0 : index
    %7 = vector.load %arg4[%c0_5, %c0_6] : memref<32x128xf32, #tpu.memory_space<vmem>>, vector<32x128xf32>
    tpu.vector_store %arg4[%c0_5, %c0_6], %6 {strides = array<i32>} : memref<32x128xf32, #tpu.memory_space<vmem>>, vector<32x128xf32>,
    return
  }
  func.func @transform_0(%arg0: i32) -> (i32, i32) {
    %c0_i32 = arith.constant 0 : i32
    %c0_i32_0 = arith.constant 0 : i32
    return %arg0, %c0_i32 : i32, i32
  }
  func.func @transform_1(%arg0: i32) -> (i32, i32) {
    %c0_i32 = arith.constant 0 : i32
    %c0_i32_0 = arith.constant 0 : i32
    %c0_i32_1 = arith.constant 0 : i32
    return %c0_i32, %c0_i32_0 : i32, i32
  }
  func.func @transform_2(%arg0: i32) -> (i32, i32) {
    %c0_i32 = arith.constant 0 : i32
    %c0_i32_0 = arith.constant 0 : i32
    %c0_i32_1 = arith.constant 0 : i32
    return %c0_i32, %c0_i32_0 : i32, i32
  }
  func.func @transform_3(%arg0: i32) -> (i32, i32) {
    %c0_i32 = arith.constant 0 : i32
    %c0_i32_0 = arith.constant 0 : i32
    return %arg0, %c0_i32 : i32, i32
  }
}

module attributes {stable_mosaic.version = 11 : i64} {
  func.func @_matmul_bn_act_kernel(%arg0: i32, %arg1: memref<16x144xbf16, #tpu.memory_space<vmem>>, %arg2: memref<144x128xbf16, #tpu.memory_space<vmem>>, %arg3: memref<1x128xf32, #tpu.memory_space<vmem>>, %arg4: memref<16x128xf32, #tpu.memory_space<vmem>>) attributes {dimension_semantics = [#tpu.dimension_semantics<parallel>], iteration_bounds = array<i64: 1>, scalar_prefetch = 0 : i64, scratch_operands = 0 : i64, tpu.core_type = #tpu.core_type<tc>, window_params = [{transform_indices = @transform_0, window_bounds = array<i64: 16, 144>}, {pipeline_mode = #tpu.pipeline_mode<synchronous>, transform_indices = @transform_1, window_bounds = array<i64: 144, 128>}, {pipeline_mode = #tpu.pipeline_mode<synchronous>, transform_indices = @transform_2, window_bounds = array<i64: 1, 128>}, {transform_indices = @transform_3, window_bounds = array<i64: 16, 128>}]} {
    %c0 = arith.constant 0 : index
    %c0_0 = arith.constant 0 : index
    %0 = vector.load %arg1[%c0, %c0_0] : memref<16x144xbf16, #tpu.memory_space<vmem>>, vector<16x144xbf16>
    %c0_1 = arith.constant 0 : index
    %c0_2 = arith.constant 0 : index
    %1 = vector.load %arg2[%c0_1, %c0_2] : memref<144x128xbf16, #tpu.memory_space<vmem>>, vector<144x128xbf16>
    %cst = arith.constant dense<0.000000e+00> : vector<16x128xf32>
    %2 = tpu.matmul %0, %1, %cst {dimension_numbers = #tpu.dot_dimension_numbers<[1], [0], [0], [1], [0, 0, 1, 1], [], []>} : vector<16x144xbf16>, vector<144x128xbf16>, vector<16x128xf32> -> vector<16x128xf32>
    %c0_3 = arith.constant 0 : index
    %c0_4 = arith.constant 0 : index
    %3 = vector.load %arg3[%c0_3, %c0_4] : memref<1x128xf32, #tpu.memory_space<vmem>>, vector<1x128xf32>
    %4 = vector.broadcast %3 : vector<1x128xf32> to vector<16x128xf32>
    %5 = arith.addf %2, %4 : vector<16x128xf32>
    %6 = math.sin %5 : vector<16x128xf32>
    %c0_5 = arith.constant 0 : index
    %c0_6 = arith.constant 0 : index
    %7 = vector.load %arg4[%c0_5, %c0_6] : memref<16x128xf32, #tpu.memory_space<vmem>>, vector<16x128xf32>
    tpu.vector_store %arg4[%c0_5, %c0_6], %6 {strides = array<i32>} : memref<16x128xf32, #tpu.memory_space<vmem>>, vector<16x128xf32>,
    return
  }
  func.func @transform_0(%arg0: i32) -> (i32, i32) {
    %c0_i32 = arith.constant 0 : i32
    %c0_i32_0 = arith.constant 0 : i32
    return %arg0, %c0_i32 : i32, i32
  }
  func.func @transform_1(%arg0: i32) -> (i32, i32) {
    %c0_i32 = arith.constant 0 : i32
    %c0_i32_0 = arith.constant 0 : i32
    %c0_i32_1 = arith.constant 0 : i32
    return %c0_i32, %c0_i32_0 : i32, i32
  }
  func.func @transform_2(%arg0: i32) -> (i32, i32) {
    %c0_i32 = arith.constant 0 : i32
    %c0_i32_0 = arith.constant 0 : i32
    %c0_i32_1 = arith.constant 0 : i32
    return %c0_i32, %c0_i32_0 : i32, i32
  }
  func.func @transform_3(%arg0: i32) -> (i32, i32) {
    %c0_i32 = arith.constant 0 : i32
    %c0_i32_0 = arith.constant 0 : i32
    return %arg0, %c0_i32 : i32, i32
  }
}

module attributes {stable_mosaic.version = 11 : i64} {
  func.func @_matmul_bn_act_res_kernel(%arg0: i32, %arg1: memref<16x16xbf16, #tpu.memory_space<vmem>>, %arg2: memref<16x128xbf16, #tpu.memory_space<vmem>>, %arg3: memref<1x128xf32, #tpu.memory_space<vmem>>, %arg4: memref<16x128xf32, #tpu.memory_space<vmem>>, %arg5: memref<16x128xf32, #tpu.memory_space<vmem>>) attributes {dimension_semantics = [#tpu.dimension_semantics<parallel>], iteration_bounds = array<i64: 1>, scalar_prefetch = 0 : i64, scratch_operands = 0 : i64, tpu.core_type = #tpu.core_type<tc>, window_params = [{transform_indices = @transform_0, window_bounds = array<i64: 16, 16>}, {pipeline_mode = #tpu.pipeline_mode<synchronous>, transform_indices = @transform_1, window_bounds = array<i64: 16, 128>}, {pipeline_mode = #tpu.pipeline_mode<synchronous>, transform_indices = @transform_2, window_bounds = array<i64: 1, 128>}, {transform_indices = @transform_3, window_bounds = array<i64: 16, 128>}, {transform_indices = @transform_4, window_bounds = array<i64: 16, 128>}]} {
    %c0 = arith.constant 0 : index
    %c0_0 = arith.constant 0 : index
    %0 = vector.load %arg1[%c0, %c0_0] : memref<16x16xbf16, #tpu.memory_space<vmem>>, vector<16x16xbf16>
    %c0_1 = arith.constant 0 : index
    %c0_2 = arith.constant 0 : index
    %1 = vector.load %arg2[%c0_1, %c0_2] : memref<16x128xbf16, #tpu.memory_space<vmem>>, vector<16x128xbf16>
    %cst = arith.constant dense<0.000000e+00> : vector<16x128xf32>
    %2 = tpu.matmul %0, %1, %cst {dimension_numbers = #tpu.dot_dimension_numbers<[1], [0], [0], [1], [0, 0, 1, 1], [], []>} : vector<16x16xbf16>, vector<16x128xbf16>, vector<16x128xf32> -> vector<16x128xf32>
    %c0_3 = arith.constant 0 : index
    %c0_4 = arith.constant 0 : index
    %3 = vector.load %arg3[%c0_3, %c0_4] : memref<1x128xf32, #tpu.memory_space<vmem>>, vector<1x128xf32>
    %4 = vector.broadcast %3 : vector<1x128xf32> to vector<16x128xf32>
    %5 = arith.addf %2, %4 : vector<16x128xf32>
    %c0_5 = arith.constant 0 : index
    %c0_6 = arith.constant 0 : index
    %6 = vector.load %arg4[%c0_5, %c0_6] : memref<16x128xf32, #tpu.memory_space<vmem>>, vector<16x128xf32>
    %7 = arith.addf %5, %6 : vector<16x128xf32>
    %c0_7 = arith.constant 0 : index
    %c0_8 = arith.constant 0 : index
    %8 = vector.load %arg5[%c0_7, %c0_8] : memref<16x128xf32, #tpu.memory_space<vmem>>, vector<16x128xf32>
    tpu.vector_store %arg5[%c0_7, %c0_8], %7 {strides = array<i32>} : memref<16x128xf32, #tpu.memory_space<vmem>>, vector<16x128xf32>,
    return
  }
  func.func @transform_0(%arg0: i32) -> (i32, i32) {
    %c0_i32 = arith.constant 0 : i32
    %c0_i32_0 = arith.constant 0 : i32
    return %arg0, %c0_i32 : i32, i32
  }
  func.func @transform_1(%arg0: i32) -> (i32, i32) {
    %c0_i32 = arith.constant 0 : i32
    %c0_i32_0 = arith.constant 0 : i32
    %c0_i32_1 = arith.constant 0 : i32
    return %c0_i32, %c0_i32_0 : i32, i32
  }
  func.func @transform_2(%arg0: i32) -> (i32, i32) {
    %c0_i32 = arith.constant 0 : i32
    %c0_i32_0 = arith.constant 0 : i32
    %c0_i32_1 = arith.constant 0 : i32
    return %c0_i32, %c0_i32_0 : i32, i32
  }
  func.func @transform_3(%arg0: i32) -> (i32, i32) {
    %c0_i32 = arith.constant 0 : i32
    %c0_i32_0 = arith.constant 0 : i32
    return %arg0, %c0_i32 : i32, i32
  }
  func.func @transform_4(%arg0: i32) -> (i32, i32) {
    %c0_i32 = arith.constant 0 : i32
    %c0_i32_0 = arith.constant 0 : i32
    return %arg0, %c0_i32 : i32, i32
  }
}

module attributes {stable_mosaic.version = 11 : i64} {
  func.func @_matmul_bn_act_kernel(%arg0: i32, %arg1: memref<16x32xbf16, #tpu.memory_space<vmem>>, %arg2: memref<32x128xbf16, #tpu.memory_space<vmem>>, %arg3: memref<1x128xf32, #tpu.memory_space<vmem>>, %arg4: memref<16x128xf32, #tpu.memory_space<vmem>>) attributes {dimension_semantics = [#tpu.dimension_semantics<parallel>], iteration_bounds = array<i64: 1>, scalar_prefetch = 0 : i64, scratch_operands = 0 : i64, tpu.core_type = #tpu.core_type<tc>, window_params = [{transform_indices = @transform_0, window_bounds = array<i64: 16, 32>}, {pipeline_mode = #tpu.pipeline_mode<synchronous>, transform_indices = @transform_1, window_bounds = array<i64: 32, 128>}, {pipeline_mode = #tpu.pipeline_mode<synchronous>, transform_indices = @transform_2, window_bounds = array<i64: 1, 128>}, {transform_indices = @transform_3, window_bounds = array<i64: 16, 128>}]} {
    %c0 = arith.constant 0 : index
    %c0_0 = arith.constant 0 : index
    %0 = vector.load %arg1[%c0, %c0_0] : memref<16x32xbf16, #tpu.memory_space<vmem>>, vector<16x32xbf16>
    %c0_1 = arith.constant 0 : index
    %c0_2 = arith.constant 0 : index
    %1 = vector.load %arg2[%c0_1, %c0_2] : memref<32x128xbf16, #tpu.memory_space<vmem>>, vector<32x128xbf16>
    %cst = arith.constant dense<0.000000e+00> : vector<16x128xf32>
    %2 = tpu.matmul %0, %1, %cst {dimension_numbers = #tpu.dot_dimension_numbers<[1], [0], [0], [1], [0, 0, 1, 1], [], []>} : vector<16x32xbf16>, vector<32x128xbf16>, vector<16x128xf32> -> vector<16x128xf32>
    %c0_3 = arith.constant 0 : index
    %c0_4 = arith.constant 0 : index
    %3 = vector.load %arg3[%c0_3, %c0_4] : memref<1x128xf32, #tpu.memory_space<vmem>>, vector<1x128xf32>
    %4 = vector.broadcast %3 : vector<1x128xf32> to vector<16x128xf32>
    %5 = arith.addf %2, %4 : vector<16x128xf32>
    %c0_5 = arith.constant 0 : index
    %c0_6 = arith.constant 0 : index
    %6 = vector.load %arg4[%c0_5, %c0_6] : memref<16x128xf32, #tpu.memory_space<vmem>>, vector<16x128xf32>
    tpu.vector_store %arg4[%c0_5, %c0_6], %5 {strides = array<i32>} : memref<16x128xf32, #tpu.memory_space<vmem>>, vector<16x128xf32>,
    return
  }
  func.func @transform_0(%arg0: i32) -> (i32, i32) {
    %c0_i32 = arith.constant 0 : i32
    %c0_i32_0 = arith.constant 0 : i32
    return %arg0, %c0_i32 : i32, i32
  }
  func.func @transform_1(%arg0: i32) -> (i32, i32) {
    %c0_i32 = arith.constant 0 : i32
    %c0_i32_0 = arith.constant 0 : i32
    %c0_i32_1 = arith.constant 0 : i32
    return %c0_i32, %c0_i32_0 : i32, i32
  }
  func.func @transform_2(%arg0: i32) -> (i32, i32) {
    %c0_i32 = arith.constant 0 : i32
    %c0_i32_0 = arith.constant 0 : i32
    %c0_i32_1 = arith.constant 0 : i32
    return %c0_i32, %c0_i32_0 : i32, i32
  }
  func.func @transform_3(%arg0: i32) -> (i32, i32) {
    %c0_i32 = arith.constant 0 : i32
    %c0_i32_0 = arith.constant 0 : i32
    return %arg0, %c0_i32 : i32, i32
  }
}

module attributes {stable_mosaic.version = 11 : i64} {
  func.func @_matmul_bn_act_kernel(%arg0: i32, %arg1: memref<16x64xbf16, #tpu.memory_space<vmem>>, %arg2: memref<64x128xbf16, #tpu.memory_space<vmem>>, %arg3: memref<1x128xf32, #tpu.memory_space<vmem>>, %arg4: memref<16x128xf32, #tpu.memory_space<vmem>>) attributes {dimension_semantics = [#tpu.dimension_semantics<parallel>], iteration_bounds = array<i64: 1>, scalar_prefetch = 0 : i64, scratch_operands = 0 : i64, tpu.core_type = #tpu.core_type<tc>, window_params = [{transform_indices = @transform_0, window_bounds = array<i64: 16, 64>}, {pipeline_mode = #tpu.pipeline_mode<synchronous>, transform_indices = @transform_1, window_bounds = array<i64: 64, 128>}, {pipeline_mode = #tpu.pipeline_mode<synchronous>, transform_indices = @transform_2, window_bounds = array<i64: 1, 128>}, {transform_indices = @transform_3, window_bounds = array<i64: 16, 128>}]} {
    %c0 = arith.constant 0 : index
    %c0_0 = arith.constant 0 : index
    %0 = vector.load %arg1[%c0, %c0_0] : memref<16x64xbf16, #tpu.memory_space<vmem>>, vector<16x64xbf16>
    %c0_1 = arith.constant 0 : index
    %c0_2 = arith.constant 0 : index
    %1 = vector.load %arg2[%c0_1, %c0_2] : memref<64x128xbf16, #tpu.memory_space<vmem>>, vector<64x128xbf16>
    %cst = arith.constant dense<0.000000e+00> : vector<16x128xf32>
    %2 = tpu.matmul %0, %1, %cst {dimension_numbers = #tpu.dot_dimension_numbers<[1], [0], [0], [1], [0, 0, 1, 1], [], []>} : vector<16x64xbf16>, vector<64x128xbf16>, vector<16x128xf32> -> vector<16x128xf32>
    %c0_3 = arith.constant 0 : index
    %c0_4 = arith.constant 0 : index
    %3 = vector.load %arg3[%c0_3, %c0_4] : memref<1x128xf32, #tpu.memory_space<vmem>>, vector<1x128xf32>
    %4 = vector.broadcast %3 : vector<1x128xf32> to vector<16x128xf32>
    %5 = arith.addf %2, %4 : vector<16x128xf32>
    %6 = math.sin %5 : vector<16x128xf32>
    %c0_5 = arith.constant 0 : index
    %c0_6 = arith.constant 0 : index
    %7 = vector.load %arg4[%c0_5, %c0_6] : memref<16x128xf32, #tpu.memory_space<vmem>>, vector<16x128xf32>
    tpu.vector_store %arg4[%c0_5, %c0_6], %6 {strides = array<i32>} : memref<16x128xf32, #tpu.memory_space<vmem>>, vector<16x128xf32>,
    return
  }
  func.func @transform_0(%arg0: i32) -> (i32, i32) {
    %c0_i32 = arith.constant 0 : i32
    %c0_i32_0 = arith.constant 0 : i32
    return %arg0, %c0_i32 : i32, i32
  }
  func.func @transform_1(%arg0: i32) -> (i32, i32) {
    %c0_i32 = arith.constant 0 : i32
    %c0_i32_0 = arith.constant 0 : i32
    %c0_i32_1 = arith.constant 0 : i32
    return %c0_i32, %c0_i32_0 : i32, i32
  }
  func.func @transform_2(%arg0: i32) -> (i32, i32) {
    %c0_i32 = arith.constant 0 : i32
    %c0_i32_0 = arith.constant 0 : i32
    %c0_i32_1 = arith.constant 0 : i32
    return %c0_i32, %c0_i32_0 : i32, i32
  }
  func.func @transform_3(%arg0: i32) -> (i32, i32) {
    %c0_i32 = arith.constant 0 : i32
    %c0_i32_0 = arith.constant 0 : i32
    return %arg0, %c0_i32 : i32, i32
  }
}

module attributes {stable_mosaic.version = 11 : i64} {
  func.func @_avgpool_kernel(%arg0: i32, %arg1: memref<1x4x128xf32, #tpu.memory_space<vmem>>, %arg2: memref<1x1x128xf32, #tpu.memory_space<vmem>>) attributes {dimension_semantics = [#tpu.dimension_semantics<parallel>], iteration_bounds = array<i64: 2>, scalar_prefetch = 0 : i64, scratch_operands = 0 : i64, tpu.core_type = #tpu.core_type<tc>, window_params = [{transform_indices = @transform_0, window_bounds = array<i64: 1, 4, 128>}, {transform_indices = @transform_1, window_bounds = array<i64: 1, 1, 128>}]} {
    %c0 = arith.constant 0 : index
    %c0_0 = arith.constant 0 : index
    %c0_1 = arith.constant 0 : index
    %0 = vector.load %arg1[%c0, %c0_0, %c0_1] : memref<1x4x128xf32, #tpu.memory_space<vmem>>, vector<1x4x128xf32>
    %cst = arith.constant dense<0.000000e+00> : vector<1x128xf32>
    %1 = vector.multi_reduction <add>, %0, %cst [1] : vector<1x4x128xf32> to vector<1x128xf32>
    %2 = vector.shape_cast %1 : vector<1x128xf32> to vector<1x1x128xf32>
    %cst_2 = arith.constant 4.000000e+00 : f32
    %3 = vector.broadcast %cst_2 : f32 to vector<1x1x128xf32>
    %4 = arith.divf %2, %3 : vector<1x1x128xf32>
    %c0_3 = arith.constant 0 : index
    %c0_4 = arith.constant 0 : index
    %c0_5 = arith.constant 0 : index
    %5 = vector.load %arg2[%c0_3, %c0_4, %c0_5] : memref<1x1x128xf32, #tpu.memory_space<vmem>>, vector<1x1x128xf32>
    tpu.vector_store %arg2[%c0_3, %c0_4, %c0_5], %4 {strides = array<i32>} : memref<1x1x128xf32, #tpu.memory_space<vmem>>, vector<1x1x128xf32>,
    return
  }
  func.func @transform_0(%arg0: i32) -> (i32, i32, i32) {
    %c0_i32 = arith.constant 0 : i32
    %c0_i32_0 = arith.constant 0 : i32
    %c0_i32_1 = arith.constant 0 : i32
    return %arg0, %c0_i32, %c0_i32_0 : i32, i32, i32
  }
  func.func @transform_1(%arg0: i32) -> (i32, i32, i32) {
    %c0_i32 = arith.constant 0 : i32
    %c0_i32_0 = arith.constant 0 : i32
    %c0_i32_1 = arith.constant 0 : i32
    return %arg0, %c0_i32, %c0_i32_0 : i32, i32, i32
  }
}

</mosaic_0001>

<llo_original>
// kernel: _lambda_.17
$region0: #{_lambda_.17}
  #allocation0 [shape = 'u32[]', space=smem, size = 0x4, offset = 0x4, fixed_abs, tag = 'smem constant byte address 0x4 - core index']
  #allocation1 [shape = 'u32[144,128]{1,0:T(1,128)}', space=vmem, size = 0x12000, scoped, tag = 'internal scratch']
  %s0 = inlined_call_operand.vmem [shape: bf16[128,196], index: 0, kind: input, shape index: {}]
  %s1 = inlined_call_operand.vmem [shape: bf16[196,128], index: 1, kind: input, shape index: {}]
  %s2 = inlined_call_operand.vmem [shape: f32[1,128], index: 2, kind: input, shape index: {}]
  %s3 = inlined_call_operand.vmem [shape: f32[128,128], index: 3, kind: output, shape index: {}]
  %s4 = sld [smem:[#allocation0]]
  $region22: #{_lambda_.17} parent=0
    _
  %s6 = ssub.s32 1, %s4
  %s7 = scalar_select 0, %s6, %s4
  // Predicated region
  $region2: #{_lambda_.17} parent=0 // pred_check
    _
  $region3: #{_lambda_.17} parent=0 // pred_check_branch
    %9 = sbr.rel (0) target = $region5
  $region4: #{_lambda_.17} parent=0 // pred_region
    _
  $region5: #{_lambda_.17} parent=0 // pred_fallthru
    _
  // Predicated region
  $region6: #{_lambda_.17} parent=0 // pred_check
    _
  $region7: #{_lambda_.17} parent=0 // pred_check_branch
    %11 = sbr.rel (0) target = $region9
  $region8: #{_lambda_.17} parent=0 // pred_region
    _
  $region9: #{_lambda_.17} parent=0 // pred_fallthru
    _
  // Predicated region
  $region10: #{_lambda_.17} parent=0 // pred_check
    _
  $region11: #{_lambda_.17} parent=0 // pred_check_branch
    %13 = sbr.rel (0) target = $region13
  $region12: #{_lambda_.17} parent=0 // pred_region
    _
  $region13: #{_lambda_.17} parent=0 // pred_fallthru
    _
  %v15 = vld [vmem:[%s0] sm:$0xff]
  %v16 = vld [vmem:[%s0 + $0x8] sm:$0xff]
  %v17 = vld [vmem:[%s0 + $0x10] sm:$0xff]
  %v18 = vld [vmem:[%s0 + $0x18] sm:$0xff]
  %v19 = vld [vmem:[%s0 + $0x20] sm:$0xff]
  %v20 = vld [vmem:[%s0 + $0x28] sm:$0xff]
  %v21 = vld [vmem:[%s0 + $0x30] sm:$0xff]
  %v22 = vld [vmem:[%s0 + $0x38] sm:$0xff]
  %v23 = vld [vmem:[%s0 + $0x40] sm:$0xff]
  %v24 = vld [vmem:[%s0 + $0x48] sm:$0xff]
  %v25 = vld [vmem:[%s0 + $0x50] sm:$0xff]
  %v26 = vld [vmem:[%s0 + $0x58] sm:$0xff]
  %v27 = vld [vmem:[%s0 + $0x60] sm:$0xff]
  %v28 = vld [vmem:[%s0 + $0x68] sm:$0xff]
  %v29 = vld [vmem:[%s0 + $0x70] sm:$0xff]
  %v30 = vld [vmem:[%s0 + $0x78] sm:$0xff]
  %v31 = vld [vmem:[%s1] sm:$0xf]
  %v32 = vld [vmem:[%s1 + $0x4] sm:$0xf]
  %v33 = vld [vmem:[%s1 + $0x8] sm:$0xf]
  %v34 = vld [vmem:[%s1 + $0xc] sm:$0xf]
  %v35 = vld [vmem:[%s1 + $0x10] sm:$0xf]
  %v36 = vld [vmem:[%s1 + $0x14] sm:$0xf]
  %v37 = vld [vmem:[%s1 + $0x18] sm:$0xf]
  %v38 = vld [vmem:[%s1 + $0x1c] sm:$0xf]
  %v39 = vld [vmem:[%s1 + $0x20] sm:$0xf]
  %v40 = vld [vmem:[%s1 + $0x24] sm:$0xf]
  %v41 = vld [vmem:[%s1 + $0x28] sm:$0xf]
  %v42 = vld [vmem:[%s1 + $0x2c] sm:$0xf]
  %v43 = vld [vmem:[%s1 + $0x30] sm:$0xf]
  %v44 = vld [vmem:[%s1 + $0x34] sm:$0xf]
  %v45 = vld [vmem:[%s1 + $0x38] sm:$0xf]
  %v46 = vld [vmem:[%s1 + $0x3c] sm:$0xf]
  %v47 = vld [vmem:[%s1 + $0x40] sm:$0xf]
  %v48 = vld [vmem:[%s1 + $0x44] sm:$0xf]
  %v49 = vld [vmem:[%s1 + $0x48] sm:$0xf]
  %v50 = vld [vmem:[%s1 + $0x4c] sm:$0xf]
  %v51 = vld [vmem:[%s1 + $0x50] sm:$0xf]
  %v52 = vld [vmem:[%s1 + $0x54] sm:$0xf]
  %v53 = vld [vmem:[%s1 + $0x58] sm:$0xf]
  %v54 = vld [vmem:[%s1 + $0x5c] sm:$0xf]
  %v55 = vld [vmem:[%s1 + $0x60] sm:$0x3]
  %v56 = vld [vmem:[%s2] sm:$0x1]
  %v58 = vlaneseq
  %v59 = vshrl.u32 %v58, 7
  %v60 = vsub.s32 0, %v59
  %v61 = vrot.slane %v56, %v60
  %v79 = vunpack.c.l.b16 %v15
  %v80 = vunpack.c.h.b16 %v15
  %v81 = vunpack.c.l.b16 %v16
  %v82 = vunpack.c.h.b16 %v16
  %v83 = vunpack.c.l.b16 %v17
  %v84 = vunpack.c.h.b16 %v17
  %v85 = vunpack.c.l.b16 %v18
  %v86 = vunpack.c.h.b16 %v18
  %v87 = vunpack.c.l.b16 %v19
  %v88 = vunpack.c.h.b16 %v19
  %v89 = vunpack.c.l.b16 %v20
  %v90 = vunpack.c.h.b16 %v20
  %v91 = vunpack.c.l.b16 %v21
  %v92 = vunpack.c.h.b16 %v21
  %v93 = vunpack.c.l.b16 %v22
  %v94 = vunpack.c.h.b16 %v22
  %v95 = vunpack.c.l.b16 %v23
  %v96 = vunpack.c.h.b16 %v23
  %v97 = vunpack.c.l.b16 %v24
  %v98 = vunpack.c.h.b16 %v24
  %v99 = vunpack.c.l.b16 %v25
  %v100 = vunpack.c.h.b16 %v25
  %v101 = vunpack.c.l.b16 %v26
  %v102 = vunpack.c.h.b16 %v26
  %v103 = vunpack.c.l.b16 %v27
  %v104 = vunpack.c.h.b16 %v27
  %v105 = vunpack.c.l.b16 %v28
  %v106 = vunpack.c.h.b16 %v28
  %v107 = vunpack.c.l.b16 %v29
  %v108 = vunpack.c.h.b16 %v29
  %v109 = vunpack.c.l.b16 %v30
  %v110 = vunpack.c.h.b16 %v30
  %v111 = vpack.c.b16 %v81, %v79
  %v112 = vpack.c.b16 %v82, %v80
  %v113 = vpack.c.b16 %v85, %v83
  %v114 = vpack.c.b16 %v86, %v84
  %v115 = vpack.c.b16 %v89, %v87
  %v116 = vpack.c.b16 %v90, %v88
  %v117 = vpack.c.b16 %v93, %v91
  %v118 = vpack.c.b16 %v94, %v92
  %v119 = vpack.c.b16 %v97, %v95
  %v120 = vpack.c.b16 %v98, %v96
  %v121 = vpack.c.b16 %v101, %v99
  %v122 = vpack.c.b16 %v102, %v100
  %v123 = vpack.c.b16 %v105, %v103
  %v124 = vpack.c.b16 %v106, %v104
  %v125 = vpack.c.b16 %v109, %v107
  %v126 = vpack.c.b16 %v110, %v108
  %v160 = vunpack.c.l.b16 %v31
  %v161 = vunpack.c.l.b16 %v32
  %v162 = vunpack.c.l.b16 %v33
  %v163 = vunpack.c.l.b16 %v34
  %v164 = vunpack.c.l.b16 %v35
  %v165 = vunpack.c.l.b16 %v36
  %v166 = vunpack.c.l.b16 %v37
  %v167 = vunpack.c.l.b16 %v38
  %v168 = vunpack.c.l.b16 %v39
  %v169 = vunpack.c.l.b16 %v40
  %v170 = vunpack.c.l.b16 %v41
  %v171 = vunpack.c.l.b16 %v42
  %v172 = vunpack.c.l.b16 %v43
  %v173 = vunpack.c.l.b16 %v44
  %v174 = vunpack.c.l.b16 %v45
  %v175 = vunpack.c.l.b16 %v46
  %v176 = vunpack.c.l.b16 %v47
  %v177 = vunpack.c.l.b16 %v48
  %v178 = vunpack.c.l.b16 %v49
  %v179 = vunpack.c.l.b16 %v50
  %v180 = vunpack.c.l.b16 %v51
  %v181 = vunpack.c.l.b16 %v52
  %v182 = vunpack.c.l.b16 %v53
  %v183 = vunpack.c.l.b16 %v54
  %v184 = vunpack.c.l.b16 %v55
  %v185 = vpack.c.b16 %v161, %v160
  %v186 = vpack.c.b16 %v163, %v162
  %v187 = vpack.c.b16 %v165, %v164
  %v188 = vpack.c.b16 %v167, %v166
  %v189 = vpack.c.b16 %v169, %v168
  %v190 = vpack.c.b16 %v171, %v170
  %v191 = vpack.c.b16 %v173, %v172
  %v192 = vpack.c.b16 %v175, %v174
  %v193 = vpack.c.b16 %v177, %v176
  %v194 = vpack.c.b16 %v179, %v178
  %v195 = vpack.c.b16 %v181, %v180
  %v196 = vpack.c.b16 %v183, %v182
  %v197 = vpack.c.b16 %v184, %v184
  %vm210 = vcmask 556032
  %v212 = vsel %vm210, %v112, 0
  %v215 = vsel %vm210, %v114, 0
  %v218 = vsel %vm210, %v116, 0
  %v221 = vsel %vm210, %v118, 0
  %v224 = vsel %vm210, %v120, 0
  %v227 = vsel %vm210, %v122, 0
  %v230 = vsel %vm210, %v124, 0
  %v233 = vsel %vm210, %v126, 0
  %vm235 = vcmask 1041408
  %v237 = vsel %vm235, %v197, 0
  %239 = vmatprep.subr.bf16.mxu0 0
  %240 = vmatpush1.bf16.msra.mxu0 %v192
  %241 = vmatprep.subr.bf16.mxu0 0
  %242 = vmatpush1.bf16.msra.mxu0 %v191
  %243 = vmatprep.subr.bf16.mxu0 0
  %244 = vmatpush1.bf16.msra.mxu0 %v190
  %245 = vmatprep.subr.bf16.mxu0 0
  %246 = vmatpush1.bf16.msra.mxu0 %v189
  %247 = vmatprep.subr.bf16.mxu0 0
  %248 = vmatpush1.bf16.msra.mxu0 %v188
  %249 = vmatprep.subr.bf16.mxu0 0
  %250 = vmatpush1.bf16.msra.mxu0 %v187
  %251 = vmatprep.subr.bf16.mxu0 0
  %252 = vmatpush1.bf16.msra.mxu0 %v186
  %253 = vmatprep.subr.bf16.mxu0 0
  %254 = vmatpush1.bf16.msra.mxu0 %v185
  %255 = vmatprep.subr.bf16.mxu0 0
  %256 = vmatpush2.bf16.msra.mxu0 0
  %257 = vmatprep.subr.bf16.mxu0 0
  %258 = vmatpush2.bf16.msra.mxu0 0
  %259 = vmatprep.subr.bf16.mxu0 0
  %260 = vmatpush2.bf16.msra.mxu0 0
  %261 = vmatprep.subr.bf16.mxu0 0
  %262 = vmatpush2.bf16.msra.mxu0 %v237
  %263 = vmatprep.subr.bf16.mxu0 0
  %264 = vmatpush2.bf16.msra.mxu0 %v196
  %265 = vmatprep.subr.bf16.mxu0 0
  %266 = vmatpush2.bf16.msra.mxu0 %v195
  %267 = vmatprep.subr.bf16.mxu0 0
  %268 = vmatpush2.bf16.msra.mxu0 %v194
  %269 = vmatprep.subr.bf16.mxu0 0
  %270 = vmatpush2.bf16.msra.mxu0 %v193
  %271 = vmatprep.mubr.bf16.mxu0 %v212
  %272 = vmatmul.mubr.bf16.gmra.mxu0 %v111
  %v273 = vpop.f32.mrf.mxu0
  %v274 = vadd.f32 %v61, %v273
  %v275 = vpop.f32.mrf.mxu0
  %v276 = vpop.f32.mrf.mxu0
  %v277 = vadd.f32 %v61, %v276
  %v278 = vpop.f32.mrf.mxu0
  %279 = vmatprep.mubr.bf16.mxu0 %v215
  %280 = vmatmul.mubr.bf16.gmra.mxu0 %v113
  %v281 = vpop.f32.mrf.mxu0
  %v282 = vadd.f32 %v61, %v281
  %v283 = vpop.f32.mrf.mxu0
  %v284 = vpop.f32.mrf.mxu0
  %v285 = vadd.f32 %v61, %v284
  %v286 = vpop.f32.mrf.mxu0
  %287 = vmatprep.mubr.bf16.mxu0 %v218
  %288 = vmatmul.mubr.bf16.gmra.mxu0 %v115
  %v289 = vpop.f32.mrf.mxu0
  %v290 = vadd.f32 %v61, %v289
  %v291 = vpop.f32.mrf.mxu0
  %v292 = vpop.f32.mrf.mxu0
  %v293 = vadd.f32 %v61, %v292
  %v294 = vpop.f32.mrf.mxu0
  %295 = vmatprep.mubr.bf16.mxu0 %v221
  %296 = vmatmul.mubr.bf16.gmra.mxu0 %v117
  %v297 = vpop.f32.mrf.mxu0
  %v298 = vadd.f32 %v61, %v297
  %v299 = vpop.f32.mrf.mxu0
  %v300 = vpop.f32.mrf.mxu0
  %v301 = vadd.f32 %v61, %v300
  %v302 = vpop.f32.mrf.mxu0
  %303 = vmatprep.mubr.bf16.mxu0 %v224
  %304 = vmatmul.mubr.bf16.gmra.mxu0 %v119
  %v305 = vpop.f32.mrf.mxu0
  %v306 = vadd.f32 %v61, %v305
  %v307 = vpop.f32.mrf.mxu0
  %v308 = vpop.f32.mrf.mxu0
  %v309 = vadd.f32 %v61, %v308
  %v310 = vpop.f32.mrf.mxu0
  %311 = vmatprep.mubr.bf16.mxu0 %v227
  %312 = vmatmul.mubr.bf16.gmra.mxu0 %v121
  %v313 = vpop.f32.mrf.mxu0
  %v314 = vadd.f32 %v61, %v313
  %v315 = vpop.f32.mrf.mxu0
  %v316 = vpop.f32.mrf.mxu0
  %v317 = vadd.f32 %v61, %v316
  %v318 = vpop.f32.mrf.mxu0
  %319 = vmatprep.mubr.bf16.mxu0 %v230
  %320 = vmatmul.mubr.bf16.gmra.mxu0 %v123
  %v321 = vpop.f32.mrf.mxu0
  %v322 = vadd.f32 %v61, %v321
  %v323 = vpop.f32.mrf.mxu0
  %v324 = vpop.f32.mrf.mxu0
  %v325 = vadd.f32 %v61, %v324
  %v326 = vpop.f32.mrf.mxu0
  %327 = vmatprep.mubr.bf16.mxu0 %v233
  %328 = vmatmul.mubr.bf16.gmra.mxu0 %v125
  %v329 = vpop.f32.mrf.mxu0
  %v330 = vadd.f32 %v61, %v329
  %v331 = vpop.f32.mrf.mxu0
  %v332 = vpop.f32.mrf.mxu0
  %v333 = vadd.f32 %v61, %v332
  %v334 = vpop.f32.mrf.mxu0
  %335 = vdwg.mxu0
  %v336 = vand.u32 2147483647, %v274
  %vm337 = vcmp.le.f32.partialorder %v336, 0.7853982
  %vm338 = vcmp.lt.s32.totalorder %v274, 0
  %v339 = vand.u32 %v274, 2139095040
  %v340 = vshrl.u32 %v339, 23
  %v341 = vsub.s32 %v340, 127
  %v342 = vand.u32 2147483647, %v274
  %v343 = vand.u32 %v342, 8388607
  %v344 = vor.u32 %v343, 8388608
  %v345 = vsub.s32 0, %v344
  %v346 = vadd.s32 %v341, 1
  %vm347 = vcmp.gt.s32.totalorder %v346, 0
  %v348 = vsel %vm347, %v346, 0
  %v349 = vshrl.u32 %v348, 5
  %v350 = vand.u32 %v348, 31
  %v351 = vsub.s32 32, %v350
  %v352 = vshrl.u32 683565275, %v351
  %v353 = vshll.u32 683565275, %v350
  %v354 = vshrl.u32 2475754826, %v351
  %v355 = vor.u32 %v353, %v354
  %v356 = vshll.u32 2475754826, %v350
  %v357 = vshrl.u32 2131351028, %v351
  %v358 = vor.u32 %v356, %v357
  %v359 = vshll.u32 2131351028, %v350
  %v360 = vshrl.u32 2102212464, %v351
  %v361 = vor.u32 %v359, %v360
  %v362 = vshll.u32 2102212464, %v350
  %v363 = vshrl.u32 920167782, %v351
  %v364 = vor.u32 %v362, %v363
  %v365 = vshll.u32 920167782, %v350
  %v366 = vshrl.u32 1326507024, %v351
  %v367 = vor.u32 %v365, %v366
  %vm368 = vcmp.lt.s32.totalorder %v349, 1
  %vm369 = vcmp.lt.s32.totalorder %v349, 2
  %vm370 = vcmp.lt.s32.totalorder %v349, 3
  %vm371 = vcmp.lt.s32.totalorder %v349, 4
  %v372 = vsel %vm368, %v352, %v355
  %v373 = vsel %vm371, %v361, 2102212464
  %v374 = vsel %vm370, %v358, %v373
  %v375 = vsel %vm369, %v372, %v374
  %v376 = vsel %vm368, %v355, %v358
  %v377 = vsel %vm371, %v364, 920167782
  %v378 = vsel %vm370, %v361, %v377
  %v379 = vsel %vm369, %v376, %v378
  %v380 = vsel %vm368, %v358, %v361
  %v381 = vsel %vm371, %v367, 1326507024
  %v382 = vsel %vm370, %v364, %v381
  %v383 = vsel %vm369, %v380, %v382
  %v384 = vshll.u32 %v344, 8
  %v385 = vmul.u32.u64.compose %v384, %v383
  %v386 = vextract.low.u32 %v385
  %v387 = vextract.high.u32 %v385
  %v388 = vmul.u32.u64.compose %v384, %v379
  %v389 = vextract.low.u32 %v388
  %v390 = vextract.high.u32 %v388
  %v391 = vmul.u32 %v384, %v375
  %v392 = vadd.s32 %v387, %v389
  %vm393 = vc.u32 %v387, %v389
  %v394 = vadd.s32 %v390, 1
  %v395 = vsel %vm393, %v394, %v390
  %v396 = vadd.s32 %v391, %v395
  %v397 = vadd.s32 %v396, 536870912
  %v398 = vshrl.u32 %v397, 30
  %v399 = vshll.u32 %v398, 30
  %v400 = vsub.s32 %v396, %v399
  %vm401 = vcmp.lt.s32.totalorder %v400, 0
  %v402 = vsub.s32 0, %v400
  %v403 = vsel %vm401, %v402, %v400
  %v404 = vclz %v403
  %v405 = vsub.s32 %v404, 2
  %vm406 = vcmp.gt.s32.totalorder 0, %v405
  %v407 = vsel %vm406, 0, %v405
  %v408 = vsub.s32 32, %v407
  %v409 = vshll.u32 %v400, %v407
  %v410 = vshrl.u32 %v392, %v408
  %v411 = vor.u32 %v409, %v410
  %v412 = vsub.s32 4294967266, %v407
  %v413 = vadd.s32 %v412, 127
  %v414 = vshll.u32 %v413, 23
  %v415 = vor.u32 4788187, %v414
  %v416 = vand.u32 2147483647, %v415
  %v418 = vcvt.s32.f32 %v411
  %v419 = vmul.f32 %v418, %v416
  %v420 = vxor.u32 %v419, 2147483648
  %v421 = vsel %vm338, %v420, %v419
  %v422 = vsub.s32 4, %v398
  %v423 = vsel %vm338, %v422, %v398
  %v424 = vsel %vm337, %v274, %v421
  %v425 = vsel %vm337, 0, %v423
  %v426 = vcosq.f32.pop %v424
  %v427 = vsinq.f32.pop %v424
  %vm428 = vweird.f32 %v274
  %v429 = vadd.s32 %v425, 3
  %v430 = vand.u32 %v429, 3
  %vm431 = vcmp.lt.s32.totalorder %v430, 2
  %vm432 = vcmp.eq.s32.totalorder %v430, 0
  %v433 = vxor.u32 %v427, 2147483648
  %v434 = vsel %vm432, %v426, %v433
  %vm435 = vcmp.eq.s32.totalorder %v430, 2
  %v436 = vxor.u32 %v426, 2147483648
  %v437 = vsel %vm435, %v436, %v427
  %v438 = vsel %vm431, %v434, %v437
  %v439 = vsel %vm428, nan, %v438
  %v440 = vand.u32 2147483647, %v277
  %vm441 = vcmp.le.f32.partialorder %v440, 0.7853982
  %vm442 = vcmp.lt.s32.totalorder %v277, 0
  %v443 = vand.u32 %v277, 2139095040
  %v444 = vshrl.u32 %v443, 23
  %v445 = vsub.s32 %v444, 127
  %v446 = vand.u32 2147483647, %v277
  %v447 = vand.u32 %v446, 8388607
  %v448 = vor.u32 %v447, 8388608
  %v449 = vsub.s32 0, %v448
  %v450 = vadd.s32 %v445, 1
  %vm451 = vcmp.gt.s32.totalorder %v450, 0
  %v452 = vsel %vm451, %v450, 0
  %v453 = vshrl.u32 %v452, 5
  %v454 = vand.u32 %v452, 31
  %v455 = vsub.s32 32, %v454
  %v456 = vshrl.u32 683565275, %v455
  %v457 = vshll.u32 683565275, %v454
  %v458 = vshrl.u32 2475754826, %v455
  %v459 = vor.u32 %v457, %v458
  %v460 = vshll.u32 2475754826, %v454
  %v461 = vshrl.u32 2131351028, %v455
  %v462 = vor.u32 %v460, %v461
  %v463 = vshll.u32 2131351028, %v454
  %v464 = vshrl.u32 2102212464, %v455
  %v465 = vor.u32 %v463, %v464
  %v466 = vshll.u32 2102212464, %v454
  %v467 = vshrl.u32 920167782, %v455
  %v468 = vor.u32 %v466, %v467
  %v469 = vshll.u32 920167782, %v454
  %v470 = vshrl.u32 1326507024, %v455
  %v471 = vor.u32 %v469, %v470
  %vm472 = vcmp.lt.s32.totalorder %v453, 1
  %vm473 = vcmp.lt.s32.totalorder %v453, 2
  %vm474 = vcmp.lt.s32.totalorder %v453, 3
  %vm475 = vcmp.lt.s32.totalorder %v453, 4
  %v476 = vsel %vm472, %v456, %v459
  %v477 = vsel %vm475, %v465, 2102212464
  %v478 = vsel %vm474, %v462, %v477
  %v479 = vsel %vm473, %v476, %v478
  %v480 = vsel %vm472, %v459, %v462
  %v481 = vsel %vm475, %v468, 920167782
  %v482 = vsel %vm474, %v465, %v481
  %v483 = vsel %vm473, %v480, %v482
  %v484 = vsel %vm472, %v462, %v465
  %v485 = vsel %vm475, %v471, 1326507024
  %v486 = vsel %vm474, %v468, %v485
  %v487 = vsel %vm473, %v484, %v486
  %v488 = vshll.u32 %v448, 8
  %v489 = vmul.u32.u64.compose %v488, %v487
  %v490 = vextract.low.u32 %v489
  %v491 = vextract.high.u32 %v489
  %v492 = vmul.u32.u64.compose %v488, %v483
  %v493 = vextract.low.u32 %v492
  %v494 = vextract.high.u32 %v492
  %v495 = vmul.u32 %v488, %v479
  %v496 = vadd.s32 %v491, %v493
  %vm497 = vc.u32 %v491, %v493
  %v498 = vadd.s32 %v494, 1
  %v499 = vsel %vm497, %v498, %v494
  %v500 = vadd.s32 %v495, %v499
  %v501 = vadd.s32 %v500, 536870912
  %v502 = vshrl.u32 %v501, 30
  %v503 = vshll.u32 %v502, 30
  %v504 = vsub.s32 %v500, %v503
  %vm505 = vcmp.lt.s32.totalorder %v504, 0
  %v506 = vsub.s32 0, %v504
  %v507 = vsel %vm505, %v506, %v504
  %v508 = vclz %v507
  %v509 = vsub.s32 %v508, 2
  %vm510 = vcmp.gt.s32.totalorder 0, %v509
  %v511 = vsel %vm510, 0, %v509
  %v512 = vsub.s32 32, %v511
  %v513 = vshll.u32 %v504, %v511
  %v514 = vshrl.u32 %v496, %v512
  %v515 = vor.u32 %v513, %v514
  %v516 = vsub.s32 4294967266, %v511
  %v517 = vadd.s32 %v516, 127
  %v518 = vshll.u32 %v517, 23
  %v519 = vor.u32 4788187, %v518
  %v520 = vand.u32 2147483647, %v519
  %v522 = vcvt.s32.f32 %v515
  %v523 = vmul.f32 %v522, %v520
  %v524 = vxor.u32 %v523, 2147483648
  %v525 = vsel %vm442, %v524, %v523
  %v526 = vsub.s32 4, %v502
  %v527 = vsel %vm442, %v526, %v502
  %v528 = vsel %vm441, %v277, %v525
  %v529 = vsel %vm441, 0, %v527
  %v530 = vcosq.f32.pop %v528
  %v531 = vsinq.f32.pop %v528
  %vm532 = vweird.f32 %v277
  %v533 = vadd.s32 %v529, 3
  %v534 = vand.u32 %v533, 3
  %vm535 = vcmp.lt.s32.totalorder %v534, 2
  %vm536 = vcmp.eq.s32.totalorder %v534, 0
  %v537 = vxor.u32 %v531, 2147483648
  %v538 = vsel %vm536, %v530, %v537
  %vm539 = vcmp.eq.s32.totalorder %v534, 2
  %v540 = vxor.u32 %v530, 2147483648
  %v541 = vsel %vm539, %v540, %v531
  %v542 = vsel %vm535, %v538, %v541
  %v543 = vsel %vm532, nan, %v542
  %v544 = vand.u32 2147483647, %v282
  %vm545 = vcmp.le.f32.partialorder %v544, 0.7853982
  %vm546 = vcmp.lt.s32.totalorder %v282, 0
  %v547 = vand.u32 %v282, 2139095040
  %v548 = vshrl.u32 %v547, 23
  %v549 = vsub.s32 %v548, 127
  %v550 = vand.u32 2147483647, %v282
  %v551 = vand.u32 %v550, 8388607
  %v552 = vor.u32 %v551, 8388608
  %v553 = vsub.s32 0, %v552
  %v554 = vadd.s32 %v549, 1
  %vm555 = vcmp.gt.s32.totalorder %v554, 0
  %v556 = vsel %vm555, %v554, 0
  %v557 = vshrl.u32 %v556, 5
  %v558 = vand.u32 %v556, 31
  %v559 = vsub.s32 32, %v558
  %v560 = vshrl.u32 683565275, %v559
  %v561 = vshll.u32 683565275, %v558
  %v562 = vshrl.u32 2475754826, %v559
  %v563 = vor.u32 %v561, %v562
  %v564 = vshll.u32 2475754826, %v558
  %v565 = vshrl.u32 2131351028, %v559
  %v566 = vor.u32 %v564, %v565
  %v567 = vshll.u32 2131351028, %v558
  %v568 = vshrl.u32 2102212464, %v559
  %v569 = vor.u32 %v567, %v568
  %v570 = vshll.u32 2102212464, %v558
  %v571 = vshrl.u32 920167782, %v559
  %v572 = vor.u32 %v570, %v571
  %v573 = vshll.u32 920167782, %v558
  %v574 = vshrl.u32 1326507024, %v559
  %v575 = vor.u32 %v573, %v574
  %vm576 = vcmp.lt.s32.totalorder %v557, 1
  %vm577 = vcmp.lt.s32.totalorder %v557, 2
  %vm578 = vcmp.lt.s32.totalorder %v557, 3
  %vm579 = vcmp.lt.s32.totalorder %v557, 4
  %v580 = vsel %vm576, %v560, %v563
  %v581 = vsel %vm579, %v569, 2102212464
  %v582 = vsel %vm578, %v566, %v581
  %v583 = vsel %vm577, %v580, %v582
  %v584 = vsel %vm576, %v563, %v566
  %v585 = vsel %vm579, %v572, 920167782
  %v586 = vsel %vm578, %v569, %v585
  %v587 = vsel %vm577, %v584, %v586
  %v588 = vsel %vm576, %v566, %v569
  %v589 = vsel %vm579, %v575, 1326507024
  %v590 = vsel %vm578, %v572, %v589
  %v591 = vsel %vm577, %v588, %v590
  %v592 = vshll.u32 %v552, 8
  %v593 = vmul.u32.u64.compose %v592, %v591
  %v594 = vextract.low.u32 %v593
  %v595 = vextract.high.u32 %v593
  %v596 = vmul.u32.u64.compose %v592, %v587
  %v597 = vextract.low.u32 %v596
  %v598 = vextract.high.u32 %v596
  %v599 = vmul.u32 %v592, %v583
  %v600 = vadd.s32 %v595, %v597
  %vm601 = vc.u32 %v595, %v597
  %v602 = vadd.s32 %v598, 1
  %v603 = vsel %vm601, %v602, %v598
  %v604 = vadd.s32 %v599, %v603
  %v605 = vadd.s32 %v604, 536870912
  %v606 = vshrl.u32 %v605, 30
  %v607 = vshll.u32 %v606, 30
  %v608 = vsub.s32 %v604, %v607
  %vm609 = vcmp.lt.s32.totalorder %v608, 0
  %v610 = vsub.s32 0, %v608
  %v611 = vsel %vm609, %v610, %v608
  %v612 = vclz %v611
  %v613 = vsub.s32 %v612, 2
  %vm614 = vcmp.gt.s32.totalorder 0, %v613
  %v615 = vsel %vm614, 0, %v613
  %v616 = vsub.s32 32, %v615
  %v617 = vshll.u32 %v608, %v615
  %v618 = vshrl.u32 %v600, %v616
  %v619 = vor.u32 %v617, %v618
  %v620 = vsub.s32 4294967266, %v615
  %v621 = vadd.s32 %v620, 127
  %v622 = vshll.u32 %v621, 23
  %v623 = vor.u32 4788187, %v622
  %v624 = vand.u32 2147483647, %v623
  %v626 = vcvt.s32.f32 %v619
  %v627 = vmul.f32 %v626, %v624
  %v628 = vxor.u32 %v627, 2147483648
  %v629 = vsel %vm546, %v628, %v627
  %v630 = vsub.s32 4, %v606
  %v631 = vsel %vm546, %v630, %v606
  %v632 = vsel %vm545, %v282, %v629
  %v633 = vsel %vm545, 0, %v631
  %v634 = vcosq.f32.pop %v632
  %v635 = vsinq.f32.pop %v632
  %vm636 = vweird.f32 %v282
  %v637 = vadd.s32 %v633, 3
  %v638 = vand.u32 %v637, 3
  %vm639 = vcmp.lt.s32.totalorder %v638, 2
  %vm640 = vcmp.eq.s32.totalorder %v638, 0
  %v641 = vxor.u32 %v635, 2147483648
  %v642 = vsel %vm640, %v634, %v641
  %vm643 = vcmp.eq.s32.totalorder %v638, 2
  %v644 = vxor.u32 %v634, 2147483648
  %v645 = vsel %vm643, %v644, %v635
  %v646 = vsel %vm639, %v642, %v645
  %v647 = vsel %vm636, nan, %v646
  %v648 = vand.u32 2147483647, %v285
  %vm649 = vcmp.le.f32.partialorder %v648, 0.7853982
  %vm650 = vcmp.lt.s32.totalorder %v285, 0
  %v651 = vand.u32 %v285, 2139095040
  %v652 = vshrl.u32 %v651, 23
  %v653 = vsub.s32 %v652, 127
  %v654 = vand.u32 2147483647, %v285
  %v655 = vand.u32 %v654, 8388607
  %v656 = vor.u32 %v655, 8388608
  %v657 = vsub.s32 0, %v656
  %v658 = vadd.s32 %v653, 1
  %vm659 = vcmp.gt.s32.totalorder %v658, 0
  %v660 = vsel %vm659, %v658, 0
  %v661 = vshrl.u32 %v660, 5
  %v662 = vand.u32 %v660, 31
  %v663 = vsub.s32 32, %v662
  %v664 = vshrl.u32 683565275, %v663
  %v665 = vshll.u32 683565275, %v662
  %v666 = vshrl.u32 2475754826, %v663
  %v667 = vor.u32 %v665, %v666
  %v668 = vshll.u32 2475754826, %v662
  %v669 = vshrl.u32 2131351028, %v663
  %v670 = vor.u32 %v668, %v669
  %v671 = vshll.u32 2131351028, %v662
  %v672 = vshrl.u32 2102212464, %v663
  %v673 = vor.u32 %v671, %v672
  %v674 = vshll.u32 2102212464, %v662
  %v675 = vshrl.u32 920167782, %v663
  %v676 = vor.u32 %v674, %v675
  %v677 = vshll.u32 920167782, %v662
  %v678 = vshrl.u32 1326507024, %v663
  %v679 = vor.u32 %v677, %v678
  %vm680 = vcmp.lt.s32.totalorder %v661, 1
  %vm681 = vcmp.lt.s32.totalorder %v661, 2
  %vm682 = vcmp.lt.s32.totalorder %v661, 3
  %vm683 = vcmp.lt.s32.totalorder %v661, 4
  %v684 = vsel %vm680, %v664, %v667
  %v685 = vsel %vm683, %v673, 2102212464
  %v686 = vsel %vm682, %v670, %v685
  %v687 = vsel %vm681, %v684, %v686
  %v688 = vsel %vm680, %v667, %v670
  %v689 = vsel %vm683, %v676, 920167782
  %v690 = vsel %vm682, %v673, %v689
  %v691 = vsel %vm681, %v688, %v690
  %v692 = vsel %vm680, %v670, %v673
  %v693 = vsel %vm683, %v679, 1326507024
  %v694 = vsel %vm682, %v676, %v693
  %v695 = vsel %vm681, %v692, %v694
  %v696 = vshll.u32 %v656, 8
  %v697 = vmul.u32.u64.compose %v696, %v695
  %v698 = vextract.low.u32 %v697
  %v699 = vextract.high.u32 %v697
  %v700 = vmul.u32.u64.compose %v696, %v691
  %v701 = vextract.low.u32 %v700
  %v702 = vextract.high.u32 %v700
  %v703 = vmul.u32 %v696, %v687
  %v704 = vadd.s32 %v699, %v701
  %vm705 = vc.u32 %v699, %v701
  %v706 = vadd.s32 %v702, 1
  %v707 = vsel %vm705, %v706, %v702
  %v708 = vadd.s32 %v703, %v707
  %v709 = vadd.s32 %v708, 536870912
  %v710 = vshrl.u32 %v709, 30
  %v711 = vshll.u32 %v710, 30
  %v712 = vsub.s32 %v708, %v711
  %vm713 = vcmp.lt.s32.totalorder %v712, 0
  %v714 = vsub.s32 0, %v712
  %v715 = vsel %vm713, %v714, %v712
  %v716 = vclz %v715
  %v717 = vsub.s32 %v716, 2
  %vm718 = vcmp.gt.s32.totalorder 0, %v717
  %v719 = vsel %vm718, 0, %v717
  %v720 = vsub.s32 32, %v719
  %v721 = vshll.u32 %v712, %v719
  %v722 = vshrl.u32 %v704, %v720
  %v723 = vor.u32 %v721, %v722
  %v724 = vsub.s32 4294967266, %v719
  %v725 = vadd.s32 %v724, 127
  %v726 = vshll.u32 %v725, 23
  %v727 = vor.u32 4788187, %v726
  %v728 = vand.u32 2147483647, %v727
  %v730 = vcvt.s32.f32 %v723
  %v731 = vmul.f32 %v730, %v728
  %v732 = vxor.u32 %v731, 2147483648
  %v733 = vsel %vm650, %v732, %v731
  %v734 = vsub.s32 4, %v710
  %v735 = vsel %vm650, %v734, %v710
  %v736 = vsel %vm649, %v285, %v733
  %v737 = vsel %vm649, 0, %v735
  %v738 = vcosq.f32.pop %v736
  %v739 = vsinq.f32.pop %v736
  %vm740 = vweird.f32 %v285
  %v741 = vadd.s32 %v737, 3
  %v742 = vand.u32 %v741, 3
  %vm743 = vcmp.lt.s32.totalorder %v742, 2
  %vm744 = vcmp.eq.s32.totalorder %v742, 0
  %v745 = vxor.u32 %v739, 2147483648
  %v746 = vsel %vm744, %v738, %v745
  %vm747 = vcmp.eq.s32.totalorder %v742, 2
  %v748 = vxor.u32 %v738, 2147483648
  %v749 = vsel %vm747, %v748, %v739
  %v750 = vsel %vm743, %v746, %v749
  %v751 = vsel %vm740, nan, %v750
  %v752 = vand.u32 2147483647, %v290
  %vm753 = vcmp.le.f32.partialorder %v752, 0.7853982
  %vm754 = vcmp.lt.s32.totalorder %v290, 0
  %v755 = vand.u32 %v290, 2139095040
  %v756 = vshrl.u32 %v755, 23
  %v757 = vsub.s32 %v756, 127
  %v758 = vand.u32 2147483647, %v290
  %v759 = vand.u32 %v758, 8388607
  %v760 = vor.u32 %v759, 8388608
  %v761 = vsub.s32 0, %v760
  %v762 = vadd.s32 %v757, 1
  %vm763 = vcmp.gt.s32.totalorder %v762, 0
  %v764 = vsel %vm763, %v762, 0
  %v765 = vshrl.u32 %v764, 5
  %v766 = vand.u32 %v764, 31
  %v767 = vsub.s32 32, %v766
  %v768 = vshrl.u32 683565275, %v767
  %v769 = vshll.u32 683565275, %v766
  %v770 = vshrl.u32 2475754826, %v767
  %v771 = vor.u32 %v769, %v770
  %v772 = vshll.u32 2475754826, %v766
  %v773 = vshrl.u32 2131351028, %v767
  %v774 = vor.u32 %v772, %v773
  %v775 = vshll.u32 2131351028, %v766
  %v776 = vshrl.u32 2102212464, %v767
  %v777 = vor.u32 %v775, %v776
  %v778 = vshll.u32 2102212464, %v766
  %v779 = vshrl.u32 920167782, %v767
  %v780 = vor.u32 %v778, %v779
  %v781 = vshll.u32 920167782, %v766
  %v782 = vshrl.u32 1326507024, %v767
  %v783 = vor.u32 %v781, %v782
  %vm784 = vcmp.lt.s32.totalorder %v765, 1
  %vm785 = vcmp.lt.s32.totalorder %v765, 2
  %vm786 = vcmp.lt.s32.totalorder %v765, 3
  %vm787 = vcmp.lt.s32.totalorder %v765, 4
  %v788 = vsel %vm784, %v768, %v771
  %v789 = vsel %vm787, %v777, 2102212464
  %v790 = vsel %vm786, %v774, %v789
  %v791 = vsel %vm785, %v788, %v790
  %v792 = vsel %vm784, %v771, %v774
  %v793 = vsel %vm787, %v780, 920167782
  %v794 = vsel %vm786, %v777, %v793
  %v795 = vsel %vm785, %v792, %v794
  %v796 = vsel %vm784, %v774, %v777
  %v797 = vsel %vm787, %v783, 1326507024
  %v798 = vsel %vm786, %v780, %v797
  %v799 = vsel %vm785, %v796, %v798
  %v800 = vshll.u32 %v760, 8
  %v801 = vmul.u32.u64.compose %v800, %v799
  %v802 = vextract.low.u32 %v801
  %v803 = vextract.high.u32 %v801
  %v804 = vmul.u32.u64.compose %v800, %v795
  %v805 = vextract.low.u32 %v804
  %v806 = vextract.high.u32 %v804
  %v807 = vmul.u32 %v800, %v791
  %v808 = vadd.s32 %v803, %v805
  %vm809 = vc.u32 %v803, %v805
  %v810 = vadd.s32 %v806, 1
  %v811 = vsel %vm809, %v810, %v806
  %v812 = vadd.s32 %v807, %v811
  %v813 = vadd.s32 %v812, 536870912
  %v814 = vshrl.u32 %v813, 30
  %v815 = vshll.u32 %v814, 30
  %v816 = vsub.s32 %v812, %v815
  %vm817 = vcmp.lt.s32.totalorder %v816, 0
  %v818 = vsub.s32 0, %v816
  %v819 = vsel %vm817, %v818, %v816
  %v820 = vclz %v819
  %v821 = vsub.s32 %v820, 2
  %vm822 = vcmp.gt.s32.totalorder 0, %v821
  %v823 = vsel %vm822, 0, %v821
  %v824 = vsub.s32 32, %v823
  %v825 = vshll.u32 %v816, %v823
  %v826 = vshrl.u32 %v808, %v824
  %v827 = vor.u32 %v825, %v826
  %v828 = vsub.s32 4294967266, %v823
  %v829 = vadd.s32 %v828, 127
  %v830 = vshll.u32 %v829, 23
  %v831 = vor.u32 4788187, %v830
  %v832 = vand.u32 2147483647, %v831
  %v834 = vcvt.s32.f32 %v827
  %v835 = vmul.f32 %v834, %v832
  %v836 = vxor.u32 %v835, 2147483648
  %v837 = vsel %vm754, %v836, %v835
  %v838 = vsub.s32 4, %v814
  %v839 = vsel %vm754, %v838, %v814
  %v840 = vsel %vm753, %v290, %v837
  %v841 = vsel %vm753, 0, %v839
  %v842 = vcosq.f32.pop %v840
  %v843 = vsinq.f32.pop %v840
  %vm844 = vweird.f32 %v290
  %v845 = vadd.s32 %v841, 3
  %v846 = vand.u32 %v845, 3
  %vm847 = vcmp.lt.s32.totalorder %v846, 2
  %vm848 = vcmp.eq.s32.totalorder %v846, 0
  %v849 = vxor.u32 %v843, 2147483648
  %v850 = vsel %vm848, %v842, %v849
  %vm851 = vcmp.eq.s32.totalorder %v846, 2
  %v852 = vxor.u32 %v842, 2147483648
  %v853 = vsel %vm851, %v852, %v843
  %v854 = vsel %vm847, %v850, %v853
  %v855 = vsel %vm844, nan, %v854
  %v856 = vand.u32 2147483647, %v293
  %vm857 = vcmp.le.f32.partialorder %v856, 0.7853982
  %vm858 = vcmp.lt.s32.totalorder %v293, 0
  %v859 = vand.u32 %v293, 2139095040
  %v860 = vshrl.u32 %v859, 23
  %v861 = vsub.s32 %v860, 127
  %v862 = vand.u32 2147483647, %v293
  %v863 = vand.u32 %v862, 8388607
  %v864 = vor.u32 %v863, 8388608
  %v865 = vsub.s32 0, %v864
  %v866 = vadd.s32 %v861, 1
  %vm867 = vcmp.gt.s32.totalorder %v866, 0
  %v868 = vsel %vm867, %v866, 0
  %v869 = vshrl.u32 %v868, 5
  %v870 = vand.u32 %v868, 31
  %v871 = vsub.s32 32, %v870
  %v872 = vshrl.u32 683565275, %v871
  %v873 = vshll.u32 683565275, %v870
  %v874 = vshrl.u32 2475754826, %v871
  %v875 = vor.u32 %v873, %v874
  %v876 = vshll.u32 2475754826, %v870
  %v877 = vshrl.u32 2131351028, %v871
  %v878 = vor.u32 %v876, %v877
  %v879 = vshll.u32 2131351028, %v870
  %v880 = vshrl.u32 2102212464, %v871
  %v881 = vor.u32 %v879, %v880
  %v882 = vshll.u32 2102212464, %v870
  %v883 = vshrl.u32 920167782, %v871
  %v884 = vor.u32 %v882, %v883
  %v885 = vshll.u32 920167782, %v870
  %v886 = vshrl.u32 1326507024, %v871
  %v887 = vor.u32 %v885, %v886
  %vm888 = vcmp.lt.s32.totalorder %v869, 1
  %vm889 = vcmp.lt.s32.totalorder %v869, 2
  %vm890 = vcmp.lt.s32.totalorder %v869, 3
  %vm891 = vcmp.lt.s32.totalorder %v869, 4
  %v892 = vsel %vm888, %v872, %v875
  %v893 = vsel %vm891, %v881, 2102212464
  %v894 = vsel %vm890, %v878, %v893
  %v895 = vsel %vm889, %v892, %v894
  %v896 = vsel %vm888, %v875, %v878
  %v897 = vsel %vm891, %v884, 920167782
  %v898 = vsel %vm890, %v881, %v897
  %v899 = vsel %vm889, %v896, %v898
  %v900 = vsel %vm888, %v878, %v881
  %v901 = vsel %vm891, %v887, 1326507024
  %v902 = vsel %vm890, %v884, %v901
  %v903 = vsel %vm889, %v900, %v902
  %v904 = vshll.u32 %v864, 8
  %v905 = vmul.u32.u64.compose %v904, %v903
  %v906 = vextract.low.u32 %v905
  %v907 = vextract.high.u32 %v905
  %v908 = vmul.u32.u64.compose %v904, %v899
  %v909 = vextract.low.u32 %v908
  %v910 = vextract.high.u32 %v908
  %v911 = vmul.u32 %v904, %v895
  %v912 = vadd.s32 %v907, %v909
  %vm913 = vc.u32 %v907, %v909
  %v914 = vadd.s32 %v910, 1
  %v915 = vsel %vm913, %v914, %v910
  %v916 = vadd.s32 %v911, %v915
  %v917 = vadd.s32 %v916, 536870912
  %v918 = vshrl.u32 %v917, 30
  %v919 = vshll.u32 %v918, 30
  %v920 = vsub.s32 %v916, %v919
  %vm921 = vcmp.lt.s32.totalorder %v920, 0
  %v922 = vsub.s32 0, %v920
  %v923 = vsel %vm921, %v922, %v920
  %v924 = vclz %v923
  %v925 = vsub.s32 %v924, 2
  %vm926 = vcmp.gt.s32.totalorder 0, %v925
  %v927 = vsel %vm926, 0, %v925
  %v928 = vsub.s32 32, %v927
  %v929 = vshll.u32 %v920, %v927
  %v930 = vshrl.u32 %v912, %v928
  %v931 = vor.u32 %v929, %v930
  %v932 = vsub.s32 4294967266, %v927
  %v933 = vadd.s32 %v932, 127
  %v934 = vshll.u32 %v933, 23
  %v935 = vor.u32 4788187, %v934
  %v936 = vand.u32 2147483647, %v935
  %v938 = vcvt.s32.f32 %v931
  %v939 = vmul.f32 %v938, %v936
  %v940 = vxor.u32 %v939, 2147483648
  %v941 = vsel %vm858, %v940, %v939
  %v942 = vsub.s32 4, %v918
  %v943 = vsel %vm858, %v942, %v918
  %v944 = vsel %vm857, %v293, %v941
  %v945 = vsel %vm857, 0, %v943
  %v946 = vcosq.f32.pop %v944
  %v947 = vsinq.f32.pop %v944
  %vm948 = vweird.f32 %v293
  %v949 = vadd.s32 %v945, 3
  %v950 = vand.u32 %v949, 3
  %vm951 = vcmp.lt.s32.totalorder %v950, 2
  %vm952 = vcmp.eq.s32.totalorder %v950, 0
  %v953 = vxor.u32 %v947, 2147483648
  %v954 = vsel %vm952, %v946, %v953
  %vm955 = vcmp.eq.s32.totalorder %v950, 2
  %v956 = vxor.u32 %v946, 2147483648
  %v957 = vsel %vm955, %v956, %v947
  %v958 = vsel %vm951, %v954, %v957
  %v959 = vsel %vm948, nan, %v958
  %v960 = vand.u32 2147483647, %v298
  %vm961 = vcmp.le.f32.partialorder %v960, 0.7853982
  %vm962 = vcmp.lt.s32.totalorder %v298, 0
  %v963 = vand.u32 %v298, 2139095040
  %v964 = vshrl.u32 %v963, 23
  %v965 = vsub.s32 %v964, 127
  %v966 = vand.u32 2147483647, %v298
  %v967 = vand.u32 %v966, 8388607
  %v968 = vor.u32 %v967, 8388608
  %v969 = vsub.s32 0, %v968
  %v970 = vadd.s32 %v965, 1
  %vm971 = vcmp.gt.s32.totalorder %v970, 0
  %v972 = vsel %vm971, %v970, 0
  %v973 = vshrl.u32 %v972, 5
  %v974 = vand.u32 %v972, 31
  %v975 = vsub.s32 32, %v974
  %v976 = vshrl.u32 683565275, %v975
  %v977 = vshll.u32 683565275, %v974
  %v978 = vshrl.u32 2475754826, %v975
  %v979 = vor.u32 %v977, %v978
  %v980 = vshll.u32 2475754826, %v974
  %v981 = vshrl.u32 2131351028, %v975
  %v982 = vor.u32 %v980, %v981
  %v983 = vshll.u32 2131351028, %v974
  %v984 = vshrl.u32 2102212464, %v975
  %v985 = vor.u32 %v983, %v984
  %v986 = vshll.u32 2102212464, %v974
  %v987 = vshrl.u32 920167782, %v975
  %v988 = vor.u32 %v986, %v987
  %v989 = vshll.u32 920167782, %v974
  %v990 = vshrl.u32 1326507024, %v975
  %v991 = vor.u32 %v989, %v990
  %vm992 = vcmp.lt.s32.totalorder %v973, 1
  %vm993 = vcmp.lt.s32.totalorder %v973, 2
  %vm994 = vcmp.lt.s32.totalorder %v973, 3
  %vm995 = vcmp.lt.s32.totalorder %v973, 4
  %v996 = vsel %vm992, %v976, %v979
  %v997 = vsel %vm995, %v985, 2102212464
  %v998 = vsel %vm994, %v982, %v997
  %v999 = vsel %vm993, %v996, %v998
  %v1000 = vsel %vm992, %v979, %v982
  %v1001 = vsel %vm995, %v988, 920167782
  %v1002 = vsel %vm994, %v985, %v1001
  %v1003 = vsel %vm993, %v1000, %v1002
  %v1004 = vsel %vm992, %v982, %v985
  %v1005 = vsel %vm995, %v991, 1326507024
  %v1006 = vsel %vm994, %v988, %v1005
  %v1007 = vsel %vm993, %v1004, %v1006
  %v1008 = vshll.u32 %v968, 8
  %v1009 = vmul.u32.u64.compose %v1008, %v1007
  %v1010 = vextract.low.u32 %v1009
  %v1011 = vextract.high.u32 %v1009
  %v1012 = vmul.u32.u64.compose %v1008, %v1003
  %v1013 = vextract.low.u32 %v1012
  %v1014 = vextract.high.u32 %v1012
  %v1015 = vmul.u32 %v1008, %v999
  %v1016 = vadd.s32 %v1011, %v1013
  %vm1017 = vc.u32 %v1011, %v1013
  %v1018 = vadd.s32 %v1014, 1
  %v1019 = vsel %vm1017, %v1018, %v1014
  %v1020 = vadd.s32 %v1015, %v1019
  %v1021 = vadd.s32 %v1020, 536870912
  %v1022 = vshrl.u32 %v1021, 30
  %v1023 = vshll.u32 %v1022, 30
  %v1024 = vsub.s32 %v1020, %v1023
  %vm1025 = vcmp.lt.s32.totalorder %v1024, 0
  %v1026 = vsub.s32 0, %v1024
  %v1027 = vsel %vm1025, %v1026, %v1024
  %v1028 = vclz %v1027
  %v1029 = vsub.s32 %v1028, 2
  %vm1030 = vcmp.gt.s32.totalorder 0, %v1029
  %v1031 = vsel %vm1030, 0, %v1029
  %v1032 = vsub.s32 32, %v1031
  %v1033 = vshll.u32 %v1024, %v1031
  %v1034 = vshrl.u32 %v1016, %v1032
  %v1035 = vor.u32 %v1033, %v1034
  %v1036 = vsub.s32 4294967266, %v1031
  %v1037 = vadd.s32 %v1036, 127
  %v1038 = vshll.u32 %v1037, 23
  %v1039 = vor.u32 4788187, %v1038
  %v1040 = vand.u32 2147483647, %v1039
  %v1042 = vcvt.s32.f32 %v1035
  %v1043 = vmul.f32 %v1042, %v1040
  %v1044 = vxor.u32 %v1043, 2147483648
  %v1045 = vsel %vm962, %v1044, %v1043
  %v1046 = vsub.s32 4, %v1022
  %v1047 = vsel %vm962, %v1046, %v1022
  %v1048 = vsel %vm961, %v298, %v1045
  %v1049 = vsel %vm961, 0, %v1047
  %v1050 = vcosq.f32.pop %v1048
  %v1051 = vsinq.f32.pop %v1048
  %vm1052 = vweird.f32 %v298
  %v1053 = vadd.s32 %v1049, 3
  %v1054 = vand.u32 %v1053, 3
  %vm1055 = vcmp.lt.s32.totalorder %v1054, 2
  %vm1056 = vcmp.eq.s32.totalorder %v1054, 0
  %v1057 = vxor.u32 %v1051, 2147483648
  %v1058 = vsel %vm1056, %v1050, %v1057
  %vm1059 = vcmp.eq.s32.totalorder %v1054, 2
  %v1060 = vxor.u32 %v1050, 2147483648
  %v1061 = vsel %vm1059, %v1060, %v1051
  %v1062 = vsel %vm1055, %v1058, %v1061
  %v1063 = vsel %vm1052, nan, %v1062
  %v1064 = vand.u32 2147483647, %v301
  %vm1065 = vcmp.le.f32.partialorder %v1064, 0.7853982
  %vm1066 = vcmp.lt.s32.totalorder %v301, 0
  %v1067 = vand.u32 %v301, 2139095040
  %v1068 = vshrl.u32 %v1067, 23
  %v1069 = vsub.s32 %v1068, 127
  %v1070 = vand.u32 2147483647, %v301
  %v1071 = vand.u32 %v1070, 8388607
  %v1072 = vor.u32 %v1071, 8388608
  %v1073 = vsub.s32 0, %v1072
  %v1074 = vadd.s32 %v1069, 1
  %vm1075 = vcmp.gt.s32.totalorder %v1074, 0
  %v1076 = vsel %vm1075, %v1074, 0
  %v1077 = vshrl.u32 %v1076, 5
  %v1078 = vand.u32 %v1076, 31
  %v1079 = vsub.s32 32, %v1078
  %v1080 = vshrl.u32 683565275, %v1079
  %v1081 = vshll.u32 683565275, %v1078
  %v1082 = vshrl.u32 2475754826, %v1079
  %v1083 = vor.u32 %v1081, %v1082
  %v1084 = vshll.u32 2475754826, %v1078
  %v1085 = vshrl.u32 2131351028, %v1079
  %v1086 = vor.u32 %v1084, %v1085
  %v1087 = vshll.u32 2131351028, %v1078
  %v1088 = vshrl.u32 2102212464, %v1079
  %v1089 = vor.u32 %v1087, %v1088
  %v1090 = vshll.u32 2102212464, %v1078
  %v1091 = vshrl.u32 920167782, %v1079
  %v1092 = vor.u32 %v1090, %v1091
  %v1093 = vshll.u32 920167782, %v1078
  %v1094 = vshrl.u32 1326507024, %v1079
  %v1095 = vor.u32 %v1093, %v1094
  %vm1096 = vcmp.lt.s32.totalorder %v1077, 1
  %vm1097 = vcmp.lt.s32.totalorder %v1077, 2
  %vm1098 = vcmp.lt.s32.totalorder %v1077, 3
  %vm1099 = vcmp.lt.s32.totalorder %v1077, 4
  %v1100 = vsel %vm1096, %v1080, %v1083
  %v1101 = vsel %vm1099, %v1089, 2102212464
  %v1102 = vsel %vm1098, %v1086, %v1101
  %v1103 = vsel %vm1097, %v1100, %v1102
  %v1104 = vsel %vm1096, %v1083, %v1086
  %v1105 = vsel %vm1099, %v1092, 920167782
  %v1106 = vsel %vm1098, %v1089, %v1105
  %v1107 = vsel %vm1097, %v1104, %v1106
  %v1108 = vsel %vm1096, %v1086, %v1089
  %v1109 = vsel %vm1099, %v1095, 1326507024
  %v1110 = vsel %vm1098, %v1092, %v1109
  %v1111 = vsel %vm1097, %v1108, %v1110
  %v1112 = vshll.u32 %v1072, 8
  %v1113 = vmul.u32.u64.compose %v1112, %v1111
  %v1114 = vextract.low.u32 %v1113
  %v1115 = vextract.high.u32 %v1113
  %v1116 = vmul.u32.u64.compose %v1112, %v1107
  %v1117 = vextract.low.u32 %v1116
  %v1118 = vextract.high.u32 %v1116
  %v1119 = vmul.u32 %v1112, %v1103
  %v1120 = vadd.s32 %v1115, %v1117
  %vm1121 = vc.u32 %v1115, %v1117
  %v1122 = vadd.s32 %v1118, 1
  %v1123 = vsel %vm1121, %v1122, %v1118
  %v1124 = vadd.s32 %v1119, %v1123
  %v1125 = vadd.s32 %v1124, 536870912
  %v1126 = vshrl.u32 %v1125, 30
  %v1127 = vshll.u32 %v1126, 30
  %v1128 = vsub.s32 %v1124, %v1127
  %vm1129 = vcmp.lt.s32.totalorder %v1128, 0
  %v1130 = vsub.s32 0, %v1128
  %v1131 = vsel %vm1129, %v1130, %v1128
  %v1132 = vclz %v1131
  %v1133 = vsub.s32 %v1132, 2
  %vm1134 = vcmp.gt.s32.totalorder 0, %v1133
  %v1135 = vsel %vm1134, 0, %v1133
  %v1136 = vsub.s32 32, %v1135
  %v1137 = vshll.u32 %v1128, %v1135
  %v1138 = vshrl.u32 %v1120, %v1136
  %v1139 = vor.u32 %v1137, %v1138
  %v1140 = vsub.s32 4294967266, %v1135
  %v1141 = vadd.s32 %v1140, 127
  %v1142 = vshll.u32 %v1141, 23
  %v1143 = vor.u32 4788187, %v1142
  %v1144 = vand.u32 2147483647, %v1143
  %v1146 = vcvt.s32.f32 %v1139
  %v1147 = vmul.f32 %v1146, %v1144
  %v1148 = vxor.u32 %v1147, 2147483648
  %v1149 = vsel %vm1066, %v1148, %v1147
  %v1150 = vsub.s32 4, %v1126
  %v1151 = vsel %vm1066, %v1150, %v1126
  %v1152 = vsel %vm1065, %v301, %v1149
  %v1153 = vsel %vm1065, 0, %v1151
  %v1154 = vcosq.f32.pop %v1152
  %v1155 = vsinq.f32.pop %v1152
  %vm1156 = vweird.f32 %v301
  %v1157 = vadd.s32 %v1153, 3
  %v1158 = vand.u32 %v1157, 3
  %vm1159 = vcmp.lt.s32.totalorder %v1158, 2
  %vm1160 = vcmp.eq.s32.totalorder %v1158, 0
  %v1161 = vxor.u32 %v1155, 2147483648
  %v1162 = vsel %vm1160, %v1154, %v1161
  %vm1163 = vcmp.eq.s32.totalorder %v1158, 2
  %v1164 = vxor.u32 %v1154, 2147483648
  %v1165 = vsel %vm1163, %v1164, %v1155
  %v1166 = vsel %vm1159, %v1162, %v1165
  %v1167 = vsel %vm1156, nan, %v1166
  %v1168 = vand.u32 2147483647, %v306
  %vm1169 = vcmp.le.f32.partialorder %v1168, 0.7853982
  %vm1170 = vcmp.lt.s32.totalorder %v306, 0
  %v1171 = vand.u32 %v306, 2139095040
  %v1172 = vshrl.u32 %v1171, 23
  %v1173 = vsub.s32 %v1172, 127
  %v1174 = vand.u32 2147483647, %v306
  %v1175 = vand.u32 %v1174, 8388607
  %v1176 = vor.u32 %v1175, 8388608
  %v1177 = vsub.s32 0, %v1176
  %v1178 = vadd.s32 %v1173, 1
  %vm1179 = vcmp.gt.s32.totalorder %v1178, 0
  %v1180 = vsel %vm1179, %v1178, 0
  %v1181 = vshrl.u32 %v1180, 5
  %v1182 = vand.u32 %v1180, 31
  %v1183 = vsub.s32 32, %v1182
  %v1184 = vshrl.u32 683565275, %v1183
  %v1185 = vshll.u32 683565275, %v1182
  %v1186 = vshrl.u32 2475754826, %v1183
  %v1187 = vor.u32 %v1185, %v1186
  %v1188 = vshll.u32 2475754826, %v1182
  %v1189 = vshrl.u32 2131351028, %v1183
  %v1190 = vor.u32 %v1188, %v1189
  %v1191 = vshll.u32 2131351028, %v1182
  %v1192 = vshrl.u32 2102212464, %v1183
  %v1193 = vor.u32 %v1191, %v1192
  %v1194 = vshll.u32 2102212464, %v1182
  %v1195 = vshrl.u32 920167782, %v1183
  %v1196 = vor.u32 %v1194, %v1195
  %v1197 = vshll.u32 920167782, %v1182
  %v1198 = vshrl.u32 1326507024, %v1183
  %v1199 = vor.u32 %v1197, %v1198
  %vm1200 = vcmp.lt.s32.totalorder %v1181, 1
  %vm1201 = vcmp.lt.s32.totalorder %v1181, 2
  %vm1202 = vcmp.lt.s32.totalorder %v1181, 3
  %vm1203 = vcmp.lt.s32.totalorder %v1181, 4
  %v1204 = vsel %vm1200, %v1184, %v1187
  %v1205 = vsel %vm1203, %v1193, 2102212464
  %v1206 = vsel %vm1202, %v1190, %v1205
  %v1207 = vsel %vm1201, %v1204, %v1206
  %v1208 = vsel %vm1200, %v1187, %v1190
  %v1209 = vsel %vm1203, %v1196, 920167782
  %v1210 = vsel %vm1202, %v1193, %v1209
  %v1211 = vsel %vm1201, %v1208, %v1210
  %v1212 = vsel %vm1200, %v1190, %v1193
  %v1213 = vsel %vm1203, %v1199, 1326507024
  %v1214 = vsel %vm1202, %v1196, %v1213
  %v1215 = vsel %vm1201, %v1212, %v1214
  %v1216 = vshll.u32 %v1176, 8
  %v1217 = vmul.u32.u64.compose %v1216, %v1215
  %v1218 = vextract.low.u32 %v1217
  %v1219 = vextract.high.u32 %v1217
  %v1220 = vmul.u32.u64.compose %v1216, %v1211
  %v1221 = vextract.low.u32 %v1220
  %v1222 = vextract.high.u32 %v1220
  %v1223 = vmul.u32 %v1216, %v1207
  %v1224 = vadd.s32 %v1219, %v1221
  %vm1225 = vc.u32 %v1219, %v1221
  %v1226 = vadd.s32 %v1222, 1
  %v1227 = vsel %vm1225, %v1226, %v1222
  %v1228 = vadd.s32 %v1223, %v1227
  %v1229 = vadd.s32 %v1228, 536870912
  %v1230 = vshrl.u32 %v1229, 30
  %v1231 = vshll.u32 %v1230, 30
  %v1232 = vsub.s32 %v1228, %v1231
  %vm1233 = vcmp.lt.s32.totalorder %v1232, 0
  %v1234 = vsub.s32 0, %v1232
  %v1235 = vsel %vm1233, %v1234, %v1232
  %v1236 = vclz %v1235
  %v1237 = vsub.s32 %v1236, 2
  %vm1238 = vcmp.gt.s32.totalorder 0, %v1237
  %v1239 = vsel %vm1238, 0, %v1237
  %v1240 = vsub.s32 32, %v1239
  %v1241 = vshll.u32 %v1232, %v1239
  %v1242 = vshrl.u32 %v1224, %v1240
  %v1243 = vor.u32 %v1241, %v1242
  %v1244 = vsub.s32 4294967266, %v1239
  %v1245 = vadd.s32 %v1244, 127
  %v1246 = vshll.u32 %v1245, 23
  %v1247 = vor.u32 4788187, %v1246
  %v1248 = vand.u32 2147483647, %v1247
  %v1250 = vcvt.s32.f32 %v1243
  %v1251 = vmul.f32 %v1250, %v1248
  %v1252 = vxor.u32 %v1251, 2147483648
  %v1253 = vsel %vm1170, %v1252, %v1251
  %v1254 = vsub.s32 4, %v1230
  %v1255 = vsel %vm1170, %v1254, %v1230
  %v1256 = vsel %vm1169, %v306, %v1253
  %v1257 = vsel %vm1169, 0, %v1255
  %v1258 = vcosq.f32.pop %v1256
  %v1259 = vsinq.f32.pop %v1256
  %vm1260 = vweird.f32 %v306
  %v1261 = vadd.s32 %v1257, 3
  %v1262 = vand.u32 %v1261, 3
  %vm1263 = vcmp.lt.s32.totalorder %v1262, 2
  %vm1264 = vcmp.eq.s32.totalorder %v1262, 0
  %v1265 = vxor.u32 %v1259, 2147483648
  %v1266 = vsel %vm1264, %v1258, %v1265
  %vm1267 = vcmp.eq.s32.totalorder %v1262, 2
  %v1268 = vxor.u32 %v1258, 2147483648
  %v1269 = vsel %vm1267, %v1268, %v1259
  %v1270 = vsel %vm1263, %v1266, %v1269
  %v1271 = vsel %vm1260, nan, %v1270
  %v1272 = vand.u32 2147483647, %v309
  %vm1273 = vcmp.le.f32.partialorder %v1272, 0.7853982
  %vm1274 = vcmp.lt.s32.totalorder %v309, 0
  %v1275 = vand.u32 %v309, 2139095040
  %v1276 = vshrl.u32 %v1275, 23
  %v1277 = vsub.s32 %v1276, 127
  %v1278 = vand.u32 2147483647, %v309
  %v1279 = vand.u32 %v1278, 8388607
  %v1280 = vor.u32 %v1279, 8388608
  %v1281 = vsub.s32 0, %v1280
  %v1282 = vadd.s32 %v1277, 1
  %vm1283 = vcmp.gt.s32.totalorder %v1282, 0
  %v1284 = vsel %vm1283, %v1282, 0
  %v1285 = vshrl.u32 %v1284, 5
  %v1286 = vand.u32 %v1284, 31
  %v1287 = vsub.s32 32, %v1286
  %v1288 = vshrl.u32 683565275, %v1287
  %v1289 = vshll.u32 683565275, %v1286
  %v1290 = vshrl.u32 2475754826, %v1287
  %v1291 = vor.u32 %v1289, %v1290
  %v1292 = vshll.u32 2475754826, %v1286
  %v1293 = vshrl.u32 2131351028, %v1287
  %v1294 = vor.u32 %v1292, %v1293
  %v1295 = vshll.u32 2131351028, %v1286
  %v1296 = vshrl.u32 2102212464, %v1287
  %v1297 = vor.u32 %v1295, %v1296
  %v1298 = vshll.u32 2102212464, %v1286
  %v1299 = vshrl.u32 920167782, %v1287
  %v1300 = vor.u32 %v1298, %v1299
  %v1301 = vshll.u32 920167782, %v1286
  %v1302 = vshrl.u32 1326507024, %v1287
  %v1303 = vor.u32 %v1301, %v1302
  %vm1304 = vcmp.lt.s32.totalorder %v1285, 1
  %vm1305 = vcmp.lt.s32.totalorder %v1285, 2
  %vm1306 = vcmp.lt.s32.totalorder %v1285, 3
  %vm1307 = vcmp.lt.s32.totalorder %v1285, 4
  %v1308 = vsel %vm1304, %v1288, %v1291
  %v1309 = vsel %vm1307, %v1297, 2102212464
  %v1310 = vsel %vm1306, %v1294, %v1309
  %v1311 = vsel %vm1305, %v1308, %v1310
  %v1312 = vsel %vm1304, %v1291, %v1294
  %v1313 = vsel %vm1307, %v1300, 920167782
  %v1314 = vsel %vm1306, %v1297, %v1313
  %v1315 = vsel %vm1305, %v1312, %v1314
  %v1316 = vsel %vm1304, %v1294, %v1297
  %v1317 = vsel %vm1307, %v1303, 1326507024
  %v1318 = vsel %vm1306, %v1300, %v1317
  %v1319 = vsel %vm1305, %v1316, %v1318
  %v1320 = vshll.u32 %v1280, 8
  %v1321 = vmul.u32.u64.compose %v1320, %v1319
  %v1322 = vextract.low.u32 %v1321
  %v1323 = vextract.high.u32 %v1321
  %v1324 = vmul.u32.u64.compose %v1320, %v1315
  %v1325 = vextract.low.u32 %v1324
  %v1326 = vextract.high.u32 %v1324
  %v1327 = vmul.u32 %v1320, %v1311
  %v1328 = vadd.s32 %v1323, %v1325
  %vm1329 = vc.u32 %v1323, %v1325
  %v1330 = vadd.s32 %v1326, 1
  %v1331 = vsel %vm1329, %v1330, %v1326
  %v1332 = vadd.s32 %v1327, %v1331
  %v1333 = vadd.s32 %v1332, 536870912
  %v1334 = vshrl.u32 %v1333, 30
  %v1335 = vshll.u32 %v1334, 30
  %v1336 = vsub.s32 %v1332, %v1335
  %vm1337 = vcmp.lt.s32.totalorder %v1336, 0
  %v1338 = vsub.s32 0, %v1336
  %v1339 = vsel %vm1337, %v1338, %v1336
  %v1340 = vclz %v1339
  %v1341 = vsub.s32 %v1340, 2
  %vm1342 = vcmp.gt.s32.totalorder 0, %v1341
  %v1343 = vsel %vm1342, 0, %v1341
  %v1344 = vsub.s32 32, %v1343
  %v1345 = vshll.u32 %v1336, %v1343
  %v1346 = vshrl.u32 %v1328, %v1344
  %v1347 = vor.u32 %v1345, %v1346
  %v1348 = vsub.s32 4294967266, %v1343
  %v1349 = vadd.s32 %v1348, 127
  %v1350 = vshll.u32 %v1349, 23
  %v1351 = vor.u32 4788187, %v1350
  %v1352 = vand.u32 2147483647, %v1351
  %v1354 = vcvt.s32.f32 %v1347
  %v1355 = vmul.f32 %v1354, %v1352
  %v1356 = vxor.u32 %v1355, 2147483648
  %v1357 = vsel %vm1274, %v1356, %v1355
  %v1358 = vsub.s32 4, %v1334
  %v1359 = vsel %vm1274, %v1358, %v1334
  %v1360 = vsel %vm1273, %v309, %v1357
  %v1361 = vsel %vm1273, 0, %v1359
  %v1362 = vcosq.f32.pop %v1360
  %v1363 = vsinq.f32.pop %v1360
  %vm1364 = vweird.f32 %v309
  %v1365 = vadd.s32 %v1361, 3
  %v1366 = vand.u32 %v1365, 3
  %vm1367 = vcmp.lt.s32.totalorder %v1366, 2
  %vm1368 = vcmp.eq.s32.totalorder %v1366, 0
  %v1369 = vxor.u32 %v1363, 2147483648
  %v1370 = vsel %vm1368, %v1362, %v1369
  %vm1371 = vcmp.eq.s32.totalorder %v1366, 2
  %v1372 = vxor.u32 %v1362, 2147483648
  %v1373 = vsel %vm1371, %v1372, %v1363
  %v1374 = vsel %vm1367, %v1370, %v1373
  %v1375 = vsel %vm1364, nan, %v1374
  %v1376 = vand.u32 2147483647, %v314
  %vm1377 = vcmp.le.f32.partialorder %v1376, 0.7853982
  %vm1378 = vcmp.lt.s32.totalorder %v314, 0
  %v1379 = vand.u32 %v314, 2139095040
  %v1380 = vshrl.u32 %v1379, 23
  %v1381 = vsub.s32 %v1380, 127
  %v1382 = vand.u32 2147483647, %v314
  %v1383 = vand.u32 %v1382, 8388607
  %v1384 = vor.u32 %v1383, 8388608
  %v1385 = vsub.s32 0, %v1384
  %v1386 = vadd.s32 %v1381, 1
  %vm1387 = vcmp.gt.s32.totalorder %v1386, 0
  %v1388 = vsel %vm1387, %v1386, 0
  %v1389 = vshrl.u32 %v1388, 5
  %v1390 = vand.u32 %v1388, 31
  %v1391 = vsub.s32 32, %v1390
  %v1392 = vshrl.u32 683565275, %v1391
  %v1393 = vshll.u32 683565275, %v1390
  %v1394 = vshrl.u32 2475754826, %v1391
  %v1395 = vor.u32 %v1393, %v1394
  %v1396 = vshll.u32 2475754826, %v1390
  %v1397 = vshrl.u32 2131351028, %v1391
  %v1398 = vor.u32 %v1396, %v1397
  %v1399 = vshll.u32 2131351028, %v1390
  %v1400 = vshrl.u32 2102212464, %v1391
  %v1401 = vor.u32 %v1399, %v1400
  %v1402 = vshll.u32 2102212464, %v1390
  %v1403 = vshrl.u32 920167782, %v1391
  %v1404 = vor.u32 %v1402, %v1403
  %v1405 = vshll.u32 920167782, %v1390
  %v1406 = vshrl.u32 1326507024, %v1391
  %v1407 = vor.u32 %v1405, %v1406
  %vm1408 = vcmp.lt.s32.totalorder %v1389, 1
  %vm1409 = vcmp.lt.s32.totalorder %v1389, 2
  %vm1410 = vcmp.lt.s32.totalorder %v1389, 3
  %vm1411 = vcmp.lt.s32.totalorder %v1389, 4
  %v1412 = vsel %vm1408, %v1392, %v1395
  %v1413 = vsel %vm1411, %v1401, 2102212464
  %v1414 = vsel %vm1410, %v1398, %v1413
  %v1415 = vsel %vm1409, %v1412, %v1414
  %v1416 = vsel %vm1408, %v1395, %v1398
  %v1417 = vsel %vm1411, %v1404, 920167782
  %v1418 = vsel %vm1410, %v1401, %v1417
  %v1419 = vsel %vm1409, %v1416, %v1418
  %v1420 = vsel %vm1408, %v1398, %v1401
  %v1421 = vsel %vm1411, %v1407, 1326507024
  %v1422 = vsel %vm1410, %v1404, %v1421
  %v1423 = vsel %vm1409, %v1420, %v1422
  %v1424 = vshll.u32 %v1384, 8
  %v1425 = vmul.u32.u64.compose %v1424, %v1423
  %v1426 = vextract.low.u32 %v1425
  %v1427 = vextract.high.u32 %v1425
  %v1428 = vmul.u32.u64.compose %v1424, %v1419
  %v1429 = vextract.low.u32 %v1428
  %v1430 = vextract.high.u32 %v1428
  %v1431 = vmul.u32 %v1424, %v1415
  %v1432 = vadd.s32 %v1427, %v1429
  %vm1433 = vc.u32 %v1427, %v1429
  %v1434 = vadd.s32 %v1430, 1
  %v1435 = vsel %vm1433, %v1434, %v1430
  %v1436 = vadd.s32 %v1431, %v1435
  %v1437 = vadd.s32 %v1436, 536870912
  %v1438 = vshrl.u32 %v1437, 30
  %v1439 = vshll.u32 %v1438, 30
  %v1440 = vsub.s32 %v1436, %v1439
  %vm1441 = vcmp.lt.s32.totalorder %v1440, 0
  %v1442 = vsub.s32 0, %v1440
  %v1443 = vsel %vm1441, %v1442, %v1440
  %v1444 = vclz %v1443
  %v1445 = vsub.s32 %v1444, 2
  %vm1446 = vcmp.gt.s32.totalorder 0, %v1445
  %v1447 = vsel %vm1446, 0, %v1445
  %v1448 = vsub.s32 32, %v1447
  %v1449 = vshll.u32 %v1440, %v1447
  %v1450 = vshrl.u32 %v1432, %v1448
  %v1451 = vor.u32 %v1449, %v1450
  %v1452 = vsub.s32 4294967266, %v1447
  %v1453 = vadd.s32 %v1452, 127
  %v1454 = vshll.u32 %v1453, 23
  %v1455 = vor.u32 4788187, %v1454
  %v1456 = vand.u32 2147483647, %v1455
  %v1458 = vcvt.s32.f32 %v1451
  %v1459 = vmul.f32 %v1458, %v1456
  %v1460 = vxor.u32 %v1459, 2147483648
  %v1461 = vsel %vm1378, %v1460, %v1459
  %v1462 = vsub.s32 4, %v1438
  %v1463 = vsel %vm1378, %v1462, %v1438
  %v1464 = vsel %vm1377, %v314, %v1461
  %v1465 = vsel %vm1377, 0, %v1463
  %v1466 = vcosq.f32.pop %v1464
  %v1467 = vsinq.f32.pop %v1464
  %vm1468 = vweird.f32 %v314
  %v1469 = vadd.s32 %v1465, 3
  %v1470 = vand.u32 %v1469, 3
  %vm1471 = vcmp.lt.s32.totalorder %v1470, 2
  %vm1472 = vcmp.eq.s32.totalorder %v1470, 0
  %v1473 = vxor.u32 %v1467, 2147483648
  %v1474 = vsel %vm1472, %v1466, %v1473
  %vm1475 = vcmp.eq.s32.totalorder %v1470, 2
  %v1476 = vxor.u32 %v1466, 2147483648
  %v1477 = vsel %vm1475, %v1476, %v1467
  %v1478 = vsel %vm1471, %v1474, %v1477
  %v1479 = vsel %vm1468, nan, %v1478
  %v1480 = vand.u32 2147483647, %v317
  %vm1481 = vcmp.le.f32.partialorder %v1480, 0.7853982
  %vm1482 = vcmp.lt.s32.totalorder %v317, 0
  %v1483 = vand.u32 %v317, 2139095040
  %v1484 = vshrl.u32 %v1483, 23
  %v1485 = vsub.s32 %v1484, 127
  %v1486 = vand.u32 2147483647, %v317
  %v1487 = vand.u32 %v1486, 8388607
  %v1488 = vor.u32 %v1487, 8388608
  %v1489 = vsub.s32 0, %v1488
  %v1490 = vadd.s32 %v1485, 1
  %vm1491 = vcmp.gt.s32.totalorder %v1490, 0
  %v1492 = vsel %vm1491, %v1490, 0
  %v1493 = vshrl.u32 %v1492, 5
  %v1494 = vand.u32 %v1492, 31
  %v1495 = vsub.s32 32, %v1494
  %v1496 = vshrl.u32 683565275, %v1495
  %v1497 = vshll.u32 683565275, %v1494
  %v1498 = vshrl.u32 2475754826, %v1495
  %v1499 = vor.u32 %v1497, %v1498
  %v1500 = vshll.u32 2475754826, %v1494
  %v1501 = vshrl.u32 2131351028, %v1495
  %v1502 = vor.u32 %v1500, %v1501
  %v1503 = vshll.u32 2131351028, %v1494
  %v1504 = vshrl.u32 2102212464, %v1495
  %v1505 = vor.u32 %v1503, %v1504
  %v1506 = vshll.u32 2102212464, %v1494
  %v1507 = vshrl.u32 920167782, %v1495
  %v1508 = vor.u32 %v1506, %v1507
  %v1509 = vshll.u32 920167782, %v1494
  %v1510 = vshrl.u32 1326507024, %v1495
  %v1511 = vor.u32 %v1509, %v1510
  %vm1512 = vcmp.lt.s32.totalorder %v1493, 1
  %vm1513 = vcmp.lt.s32.totalorder %v1493, 2
  %vm1514 = vcmp.lt.s32.totalorder %v1493, 3
  %vm1515 = vcmp.lt.s32.totalorder %v1493, 4
  %v1516 = vsel %vm1512, %v1496, %v1499
  %v1517 = vsel %vm1515, %v1505, 2102212464
  %v1518 = vsel %vm1514, %v1502, %v1517
  %v1519 = vsel %vm1513, %v1516, %v1518
  %v1520 = vsel %vm1512, %v1499, %v1502
  %v1521 = vsel %vm1515, %v1508, 920167782
  %v1522 = vsel %vm1514, %v1505, %v1521
  %v1523 = vsel %vm1513, %v1520, %v1522
  %v1524 = vsel %vm1512, %v1502, %v1505
  %v1525 = vsel %vm1515, %v1511, 1326507024
  %v1526 = vsel %vm1514, %v1508, %v1525
  %v1527 = vsel %vm1513, %v1524, %v1526
  %v1528 = vshll.u32 %v1488, 8
  %v1529 = vmul.u32.u64.compose %v1528, %v1527
  %v1530 = vextract.low.u32 %v1529
  %v1531 = vextract.high.u32 %v1529
  %v1532 = vmul.u32.u64.compose %v1528, %v1523
  %v1533 = vextract.low.u32 %v1532
  %v1534 = vextract.high.u32 %v1532
  %v1535 = vmul.u32 %v1528, %v1519
  %v1536 = vadd.s32 %v1531, %v1533
  %vm1537 = vc.u32 %v1531, %v1533
  %v1538 = vadd.s32 %v1534, 1
  %v1539 = vsel %vm1537, %v1538, %v1534
  %v1540 = vadd.s32 %v1535, %v1539
  %v1541 = vadd.s32 %v1540, 536870912
  %v1542 = vshrl.u32 %v1541, 30
  %v1543 = vshll.u32 %v1542, 30
  %v1544 = vsub.s32 %v1540, %v1543
  %vm1545 = vcmp.lt.s32.totalorder %v1544, 0
  %v1546 = vsub.s32 0, %v1544
  %v1547 = vsel %vm1545, %v1546, %v1544
  %v1548 = vclz %v1547
  %v1549 = vsub.s32 %v1548, 2
  %vm1550 = vcmp.gt.s32.totalorder 0, %v1549
  %v1551 = vsel %vm1550, 0, %v1549
  %v1552 = vsub.s32 32, %v1551
  %v1553 = vshll.u32 %v1544, %v1551
  %v1554 = vshrl.u32 %v1536, %v1552
  %v1555 = vor.u32 %v1553, %v1554
  %v1556 = vsub.s32 4294967266, %v1551
  %v1557 = vadd.s32 %v1556, 127
  %v1558 = vshll.u32 %v1557, 23
  %v1559 = vor.u32 4788187, %v1558
  %v1560 = vand.u32 2147483647, %v1559
  %v1562 = vcvt.s32.f32 %v1555
  %v1563 = vmul.f32 %v1562, %v1560
  %v1564 = vxor.u32 %v1563, 2147483648
  %v1565 = vsel %vm1482, %v1564, %v1563
  %v1566 = vsub.s32 4, %v1542
  %v1567 = vsel %vm1482, %v1566, %v1542
  %v1568 = vsel %vm1481, %v317, %v1565
  %v1569 = vsel %vm1481, 0, %v1567
  %v1570 = vcosq.f32.pop %v1568
  %v1571 = vsinq.f32.pop %v1568
  %vm1572 = vweird.f32 %v317
  %v1573 = vadd.s32 %v1569, 3
  %v1574 = vand.u32 %v1573, 3
  %vm1575 = vcmp.lt.s32.totalorder %v1574, 2
  %vm1576 = vcmp.eq.s32.totalorder %v1574, 0
  %v1577 = vxor.u32 %v1571, 2147483648
  %v1578 = vsel %vm1576, %v1570, %v1577
  %vm1579 = vcmp.eq.s32.totalorder %v1574, 2
  %v1580 = vxor.u32 %v1570, 2147483648
  %v1581 = vsel %vm1579, %v1580, %v1571
  %v1582 = vsel %vm1575, %v1578, %v1581
  %v1583 = vsel %vm1572, nan, %v1582
  %v1584 = vand.u32 2147483647, %v322
  %vm1585 = vcmp.le.f32.partialorder %v1584, 0.7853982
  %vm1586 = vcmp.lt.s32.totalorder %v322, 0
  %v1587 = vand.u32 %v322, 2139095040
  %v1588 = vshrl.u32 %v1587, 23
  %v1589 = vsub.s32 %v1588, 127
  %v1590 = vand.u32 2147483647, %v322
  %v1591 = vand.u32 %v1590, 8388607
  %v1592 = vor.u32 %v1591, 8388608
  %v1593 = vsub.s32 0, %v1592
  %v1594 = vadd.s32 %v1589, 1
  %vm1595 = vcmp.gt.s32.totalorder %v1594, 0
  %v1596 = vsel %vm1595, %v1594, 0
  %v1597 = vshrl.u32 %v1596, 5
  %v1598 = vand.u32 %v1596, 31
  %v1599 = vsub.s32 32, %v1598
  %v1600 = vshrl.u32 683565275, %v1599
  %v1601 = vshll.u32 683565275, %v1598
  %v1602 = vshrl.u32 2475754826, %v1599
  %v1603 = vor.u32 %v1601, %v1602
  %v1604 = vshll.u32 2475754826, %v1598
  %v1605 = vshrl.u32 2131351028, %v1599
  %v1606 = vor.u32 %v1604, %v1605
  %v1607 = vshll.u32 2131351028, %v1598
  %v1608 = vshrl.u32 2102212464, %v1599
  %v1609 = vor.u32 %v1607, %v1608
  %v1610 = vshll.u32 2102212464, %v1598
  %v1611 = vshrl.u32 920167782, %v1599
  %v1612 = vor.u32 %v1610, %v1611
  %v1613 = vshll.u32 920167782, %v1598
  %v1614 = vshrl.u32 1326507024, %v1599
  %v1615 = vor.u32 %v1613, %v1614
  %vm1616 = vcmp.lt.s32.totalorder %v1597, 1
  %vm1617 = vcmp.lt.s32.totalorder %v1597, 2
  %vm1618 = vcmp.lt.s32.totalorder %v1597, 3
  %vm1619 = vcmp.lt.s32.totalorder %v1597, 4
  %v1620 = vsel %vm1616, %v1600, %v1603
  %v1621 = vsel %vm1619, %v1609, 2102212464
  %v1622 = vsel %vm1618, %v1606, %v1621
  %v1623 = vsel %vm1617, %v1620, %v1622
  %v1624 = vsel %vm1616, %v1603, %v1606
  %v1625 = vsel %vm1619, %v1612, 920167782
  %v1626 = vsel %vm1618, %v1609, %v1625
  %v1627 = vsel %vm1617, %v1624, %v1626
  %v1628 = vsel %vm1616, %v1606, %v1609
  %v1629 = vsel %vm1619, %v1615, 1326507024
  %v1630 = vsel %vm1618, %v1612, %v1629
  %v1631 = vsel %vm1617, %v1628, %v1630
  %v1632 = vshll.u32 %v1592, 8
  %v1633 = vmul.u32.u64.compose %v1632, %v1631
  %v1634 = vextract.low.u32 %v1633
  %v1635 = vextract.high.u32 %v1633
  %v1636 = vmul.u32.u64.compose %v1632, %v1627
  %v1637 = vextract.low.u32 %v1636
  %v1638 = vextract.high.u32 %v1636
  %v1639 = vmul.u32 %v1632, %v1623
  %v1640 = vadd.s32 %v1635, %v1637
  %vm1641 = vc.u32 %v1635, %v1637
  %v1642 = vadd.s32 %v1638, 1
  %v1643 = vsel %vm1641, %v1642, %v1638
  %v1644 = vadd.s32 %v1639, %v1643
  %v1645 = vadd.s32 %v1644, 536870912
  %v1646 = vshrl.u32 %v1645, 30
  %v1647 = vshll.u32 %v1646, 30
  %v1648 = vsub.s32 %v1644, %v1647
  %vm1649 = vcmp.lt.s32.totalorder %v1648, 0
  %v1650 = vsub.s32 0, %v1648
  %v1651 = vsel %vm1649, %v1650, %v1648
  %v1652 = vclz %v1651
  %v1653 = vsub.s32 %v1652, 2
  %vm1654 = vcmp.gt.s32.totalorder 0, %v1653
  %v1655 = vsel %vm1654, 0, %v1653
  %v1656 = vsub.s32 32, %v1655
  %v1657 = vshll.u32 %v1648, %v1655
  %v1658 = vshrl.u32 %v1640, %v1656
  %v1659 = vor.u32 %v1657, %v1658
  %v1660 = vsub.s32 4294967266, %v1655
  %v1661 = vadd.s32 %v1660, 127
  %v1662 = vshll.u32 %v1661, 23
  %v1663 = vor.u32 4788187, %v1662
  %v1664 = vand.u32 2147483647, %v1663
  %v1666 = vcvt.s32.f32 %v1659
  %v1667 = vmul.f32 %v1666, %v1664
  %v1668 = vxor.u32 %v1667, 2147483648
  %v1669 = vsel %vm1586, %v1668, %v1667
  %v1670 = vsub.s32 4, %v1646
  %v1671 = vsel %vm1586, %v1670, %v1646
  %v1672 = vsel %vm1585, %v322, %v1669
  %v1673 = vsel %vm1585, 0, %v1671
  %v1674 = vcosq.f32.pop %v1672
  %v1675 = vsinq.f32.pop %v1672
  %vm1676 = vweird.f32 %v322
  %v1677 = vadd.s32 %v1673, 3
  %v1678 = vand.u32 %v1677, 3
  %vm1679 = vcmp.lt.s32.totalorder %v1678, 2
  %vm1680 = vcmp.eq.s32.totalorder %v1678, 0
  %v1681 = vxor.u32 %v1675, 2147483648
  %v1682 = vsel %vm1680, %v1674, %v1681
  %vm1683 = vcmp.eq.s32.totalorder %v1678, 2
  %v1684 = vxor.u32 %v1674, 2147483648
  %v1685 = vsel %vm1683, %v1684, %v1675
  %v1686 = vsel %vm1679, %v1682, %v1685
  %v1687 = vsel %vm1676, nan, %v1686
  %v1688 = vand.u32 2147483647, %v325
  %vm1689 = vcmp.le.f32.partialorder %v1688, 0.7853982
  %vm1690 = vcmp.lt.s32.totalorder %v325, 0
  %v1691 = vand.u32 %v325, 2139095040
  %v1692 = vshrl.u32 %v1691, 23
  %v1693 = vsub.s32 %v1692, 127
  %v1694 = vand.u32 2147483647, %v325
  %v1695 = vand.u32 %v1694, 8388607
  %v1696 = vor.u32 %v1695, 8388608
  %v1697 = vsub.s32 0, %v1696
  %v1698 = vadd.s32 %v1693, 1
  %vm1699 = vcmp.gt.s32.totalorder %v1698, 0
  %v1700 = vsel %vm1699, %v1698, 0
  %v1701 = vshrl.u32 %v1700, 5
  %v1702 = vand.u32 %v1700, 31
  %v1703 = vsub.s32 32, %v1702
  %v1704 = vshrl.u32 683565275, %v1703
  %v1705 = vshll.u32 683565275, %v1702
  %v1706 = vshrl.u32 2475754826, %v1703
  %v1707 = vor.u32 %v1705, %v1706
  %v1708 = vshll.u32 2475754826, %v1702
  %v1709 = vshrl.u32 2131351028, %v1703
  %v1710 = vor.u32 %v1708, %v1709
  %v1711 = vshll.u32 2131351028, %v1702
  %v1712 = vshrl.u32 2102212464, %v1703
  %v1713 = vor.u32 %v1711, %v1712
  %v1714 = vshll.u32 2102212464, %v1702
  %v1715 = vshrl.u32 920167782, %v1703
  %v1716 = vor.u32 %v1714, %v1715
  %v1717 = vshll.u32 920167782, %v1702
  %v1718 = vshrl.u32 1326507024, %v1703
  %v1719 = vor.u32 %v1717, %v1718
  %vm1720 = vcmp.lt.s32.totalorder %v1701, 1
  %vm1721 = vcmp.lt.s32.totalorder %v1701, 2
  %vm1722 = vcmp.lt.s32.totalorder %v1701, 3
  %vm1723 = vcmp.lt.s32.totalorder %v1701, 4
  %v1724 = vsel %vm1720, %v1704, %v1707
  %v1725 = vsel %vm1723, %v1713, 2102212464
  %v1726 = vsel %vm1722, %v1710, %v1725
  %v1727 = vsel %vm1721, %v1724, %v1726
  %v1728 = vsel %vm1720, %v1707, %v1710
  %v1729 = vsel %vm1723, %v1716, 920167782
  %v1730 = vsel %vm1722, %v1713, %v1729
  %v1731 = vsel %vm1721, %v1728, %v1730
  %v1732 = vsel %vm1720, %v1710, %v1713
  %v1733 = vsel %vm1723, %v1719, 1326507024
  %v1734 = vsel %vm1722, %v1716, %v1733
  %v1735 = vsel %vm1721, %v1732, %v1734
  %v1736 = vshll.u32 %v1696, 8
  %v1737 = vmul.u32.u64.compose %v1736, %v1735
  %v1738 = vextract.low.u32 %v1737
  %v1739 = vextract.high.u32 %v1737
  %v1740 = vmul.u32.u64.compose %v1736, %v1731
  %v1741 = vextract.low.u32 %v1740
  %v1742 = vextract.high.u32 %v1740
  %v1743 = vmul.u32 %v1736, %v1727
  %v1744 = vadd.s32 %v1739, %v1741
  %vm1745 = vc.u32 %v1739, %v1741
  %v1746 = vadd.s32 %v1742, 1
  %v1747 = vsel %vm1745, %v1746, %v1742
  %v1748 = vadd.s32 %v1743, %v1747
  %v1749 = vadd.s32 %v1748, 536870912
  %v1750 = vshrl.u32 %v1749, 30
  %v1751 = vshll.u32 %v1750, 30
  %v1752 = vsub.s32 %v1748, %v1751
  %vm1753 = vcmp.lt.s32.totalorder %v1752, 0
  %v1754 = vsub.s32 0, %v1752
  %v1755 = vsel %vm1753, %v1754, %v1752
  %v1756 = vclz %v1755
  %v1757 = vsub.s32 %v1756, 2
  %vm1758 = vcmp.gt.s32.totalorder 0, %v1757
  %v1759 = vsel %vm1758, 0, %v1757
  %v1760 = vsub.s32 32, %v1759
  %v1761 = vshll.u32 %v1752, %v1759
  %v1762 = vshrl.u32 %v1744, %v1760
  %v1763 = vor.u32 %v1761, %v1762
  %v1764 = vsub.s32 4294967266, %v1759
  %v1765 = vadd.s32 %v1764, 127
  %v1766 = vshll.u32 %v1765, 23
  %v1767 = vor.u32 4788187, %v1766
  %v1768 = vand.u32 2147483647, %v1767
  %v1770 = vcvt.s32.f32 %v1763
  %v1771 = vmul.f32 %v1770, %v1768
  %v1772 = vxor.u32 %v1771, 2147483648
  %v1773 = vsel %vm1690, %v1772, %v1771
  %v1774 = vsub.s32 4, %v1750
  %v1775 = vsel %vm1690, %v1774, %v1750
  %v1776 = vsel %vm1689, %v325, %v1773
  %v1777 = vsel %vm1689, 0, %v1775
  %v1778 = vcosq.f32.pop %v1776
  %v1779 = vsinq.f32.pop %v1776
  %vm1780 = vweird.f32 %v325
  %v1781 = vadd.s32 %v1777, 3
  %v1782 = vand.u32 %v1781, 3
  %vm1783 = vcmp.lt.s32.totalorder %v1782, 2
  %vm1784 = vcmp.eq.s32.totalorder %v1782, 0
  %v1785 = vxor.u32 %v1779, 2147483648
  %v1786 = vsel %vm1784, %v1778, %v1785
  %vm1787 = vcmp.eq.s32.totalorder %v1782, 2
  %v1788 = vxor.u32 %v1778, 2147483648
  %v1789 = vsel %vm1787, %v1788, %v1779
  %v1790 = vsel %vm1783, %v1786, %v1789
  %v1791 = vsel %vm1780, nan, %v1790
  %v1792 = vand.u32 2147483647, %v330
  %vm1793 = vcmp.le.f32.partialorder %v1792, 0.7853982
  %vm1794 = vcmp.lt.s32.totalorder %v330, 0
  %v1795 = vand.u32 %v330, 2139095040
  %v1796 = vshrl.u32 %v1795, 23
  %v1797 = vsub.s32 %v1796, 127
  %v1798 = vand.u32 2147483647, %v330
  %v1799 = vand.u32 %v1798, 8388607
  %v1800 = vor.u32 %v1799, 8388608
  %v1801 = vsub.s32 0, %v1800
  %v1802 = vadd.s32 %v1797, 1
  %vm1803 = vcmp.gt.s32.totalorder %v1802, 0
  %v1804 = vsel %vm1803, %v1802, 0
  %v1805 = vshrl.u32 %v1804, 5
  %v1806 = vand.u32 %v1804, 31
  %v1807 = vsub.s32 32, %v1806
  %v1808 = vshrl.u32 683565275, %v1807
  %v1809 = vshll.u32 683565275, %v1806
  %v1810 = vshrl.u32 2475754826, %v1807
  %v1811 = vor.u32 %v1809, %v1810
  %v1812 = vshll.u32 2475754826, %v1806
  %v1813 = vshrl.u32 2131351028, %v1807
  %v1814 = vor.u32 %v1812, %v1813
  %v1815 = vshll.u32 2131351028, %v1806
  %v1816 = vshrl.u32 2102212464, %v1807
  %v1817 = vor.u32 %v1815, %v1816
  %v1818 = vshll.u32 2102212464, %v1806
  %v1819 = vshrl.u32 920167782, %v1807
  %v1820 = vor.u32 %v1818, %v1819
  %v1821 = vshll.u32 920167782, %v1806
  %v1822 = vshrl.u32 1326507024, %v1807
  %v1823 = vor.u32 %v1821, %v1822
  %vm1824 = vcmp.lt.s32.totalorder %v1805, 1
  %vm1825 = vcmp.lt.s32.totalorder %v1805, 2
  %vm1826 = vcmp.lt.s32.totalorder %v1805, 3
  %vm1827 = vcmp.lt.s32.totalorder %v1805, 4
  %v1828 = vsel %vm1824, %v1808, %v1811
  %v1829 = vsel %vm1827, %v1817, 2102212464
  %v1830 = vsel %vm1826, %v1814, %v1829
  %v1831 = vsel %vm1825, %v1828, %v1830
  %v1832 = vsel %vm1824, %v1811, %v1814
  %v1833 = vsel %vm1827, %v1820, 920167782
  %v1834 = vsel %vm1826, %v1817, %v1833
  %v1835 = vsel %vm1825, %v1832, %v1834
  %v1836 = vsel %vm1824, %v1814, %v1817
  %v1837 = vsel %vm1827, %v1823, 1326507024
  %v1838 = vsel %vm1826, %v1820, %v1837
  %v1839 = vsel %vm1825, %v1836, %v1838
  %v1840 = vshll.u32 %v1800, 8
  %v1841 = vmul.u32.u64.compose %v1840, %v1839
  %v1842 = vextract.low.u32 %v1841
  %v1843 = vextract.high.u32 %v1841
  %v1844 = vmul.u32.u64.compose %v1840, %v1835
  %v1845 = vextract.low.u32 %v1844
  %v1846 = vextract.high.u32 %v1844
  %v1847 = vmul.u32 %v1840, %v1831
  %v1848 = vadd.s32 %v1843, %v1845
  %vm1849 = vc.u32 %v1843, %v1845
  %v1850 = vadd.s32 %v1846, 1
  %v1851 = vsel %vm1849, %v1850, %v1846
  %v1852 = vadd.s32 %v1847, %v1851
  %v1853 = vadd.s32 %v1852, 536870912
  %v1854 = vshrl.u32 %v1853, 30
  %v1855 = vshll.u32 %v1854, 30
  %v1856 = vsub.s32 %v1852, %v1855
  %vm1857 = vcmp.lt.s32.totalorder %v1856, 0
  %v1858 = vsub.s32 0, %v1856
  %v1859 = vsel %vm1857, %v1858, %v1856
  %v1860 = vclz %v1859
  %v1861 = vsub.s32 %v1860, 2
  %vm1862 = vcmp.gt.s32.totalorder 0, %v1861
  %v1863 = vsel %vm1862, 0, %v1861
  %v1864 = vsub.s32 32, %v1863
  %v1865 = vshll.u32 %v1856, %v1863
  %v1866 = vshrl.u32 %v1848, %v1864
  %v1867 = vor.u32 %v1865, %v1866
  %v1868 = vsub.s32 4294967266, %v1863
  %v1869 = vadd.s32 %v1868, 127
  %v1870 = vshll.u32 %v1869, 23
  %v1871 = vor.u32 4788187, %v1870
  %v1872 = vand.u32 2147483647, %v1871
  %v1874 = vcvt.s32.f32 %v1867
  %v1875 = vmul.f32 %v1874, %v1872
  %v1876 = vxor.u32 %v1875, 2147483648
  %v1877 = vsel %vm1794, %v1876, %v1875
  %v1878 = vsub.s32 4, %v1854
  %v1879 = vsel %vm1794, %v1878, %v1854
  %v1880 = vsel %vm1793, %v330, %v1877
  %v1881 = vsel %vm1793, 0, %v1879
  %v1882 = vcosq.f32.pop %v1880
  %v1883 = vsinq.f32.pop %v1880
  %vm1884 = vweird.f32 %v330
  %v1885 = vadd.s32 %v1881, 3
  %v1886 = vand.u32 %v1885, 3
  %vm1887 = vcmp.lt.s32.totalorder %v1886, 2
  %vm1888 = vcmp.eq.s32.totalorder %v1886, 0
  %v1889 = vxor.u32 %v1883, 2147483648
  %v1890 = vsel %vm1888, %v1882, %v1889
  %vm1891 = vcmp.eq.s32.totalorder %v1886, 2
  %v1892 = vxor.u32 %v1882, 2147483648
  %v1893 = vsel %vm1891, %v1892, %v1883
  %v1894 = vsel %vm1887, %v1890, %v1893
  %v1895 = vsel %vm1884, nan, %v1894
  %v1896 = vand.u32 2147483647, %v333
  %vm1897 = vcmp.le.f32.partialorder %v1896, 0.7853982
  %vm1898 = vcmp.lt.s32.totalorder %v333, 0
  %v1899 = vand.u32 %v333, 2139095040
  %v1900 = vshrl.u32 %v1899, 23
  %v1901 = vsub.s32 %v1900, 127
  %v1902 = vand.u32 2147483647, %v333
  %v1903 = vand.u32 %v1902, 8388607
  %v1904 = vor.u32 %v1903, 8388608
  %v1905 = vsub.s32 0, %v1904
  %v1906 = vadd.s32 %v1901, 1
  %vm1907 = vcmp.gt.s32.totalorder %v1906, 0
  %v1908 = vsel %vm1907, %v1906, 0
  %v1909 = vshrl.u32 %v1908, 5
  %v1910 = vand.u32 %v1908, 31
  %v1911 = vsub.s32 32, %v1910
  %v1912 = vshrl.u32 683565275, %v1911
  %v1913 = vshll.u32 683565275, %v1910
  %v1914 = vshrl.u32 2475754826, %v1911
  %v1915 = vor.u32 %v1913, %v1914
  %v1916 = vshll.u32 2475754826, %v1910
  %v1917 = vshrl.u32 2131351028, %v1911
  %v1918 = vor.u32 %v1916, %v1917
  %v1919 = vshll.u32 2131351028, %v1910
  %v1920 = vshrl.u32 2102212464, %v1911
  %v1921 = vor.u32 %v1919, %v1920
  %v1922 = vshll.u32 2102212464, %v1910
  %v1923 = vshrl.u32 920167782, %v1911
  %v1924 = vor.u32 %v1922, %v1923
  %v1925 = vshll.u32 920167782, %v1910
  %v1926 = vshrl.u32 1326507024, %v1911
  %v1927 = vor.u32 %v1925, %v1926
  %vm1928 = vcmp.lt.s32.totalorder %v1909, 1
  %vm1929 = vcmp.lt.s32.totalorder %v1909, 2
  %vm1930 = vcmp.lt.s32.totalorder %v1909, 3
  %vm1931 = vcmp.lt.s32.totalorder %v1909, 4
  %v1932 = vsel %vm1928, %v1912, %v1915
  %v1933 = vsel %vm1931, %v1921, 2102212464
  %v1934 = vsel %vm1930, %v1918, %v1933
  %v1935 = vsel %vm1929, %v1932, %v1934
  %v1936 = vsel %vm1928, %v1915, %v1918
  %v1937 = vsel %vm1931, %v1924, 920167782
  %v1938 = vsel %vm1930, %v1921, %v1937
  %v1939 = vsel %vm1929, %v1936, %v1938
  %v1940 = vsel %vm1928, %v1918, %v1921
  %v1941 = vsel %vm1931, %v1927, 1326507024
  %v1942 = vsel %vm1930, %v1924, %v1941
  %v1943 = vsel %vm1929, %v1940, %v1942
  %v1944 = vshll.u32 %v1904, 8
  %v1945 = vmul.u32.u64.compose %v1944, %v1943
  %v1946 = vextract.low.u32 %v1945
  %v1947 = vextract.high.u32 %v1945
  %v1948 = vmul.u32.u64.compose %v1944, %v1939
  %v1949 = vextract.low.u32 %v1948
  %v1950 = vextract.high.u32 %v1948
  %v1951 = vmul.u32 %v1944, %v1935
  %v1952 = vadd.s32 %v1947, %v1949
  %vm1953 = vc.u32 %v1947, %v1949
  %v1954 = vadd.s32 %v1950, 1
  %v1955 = vsel %vm1953, %v1954, %v1950
  %v1956 = vadd.s32 %v1951, %v1955
  %v1957 = vadd.s32 %v1956, 536870912
  %v1958 = vshrl.u32 %v1957, 30
  %v1959 = vshll.u32 %v1958, 30
  %v1960 = vsub.s32 %v1956, %v1959
  %vm1961 = vcmp.lt.s32.totalorder %v1960, 0
  %v1962 = vsub.s32 0, %v1960
  %v1963 = vsel %vm1961, %v1962, %v1960
  %v1964 = vclz %v1963
  %v1965 = vsub.s32 %v1964, 2
  %vm1966 = vcmp.gt.s32.totalorder 0, %v1965
  %v1967 = vsel %vm1966, 0, %v1965
  %v1968 = vsub.s32 32, %v1967
  %v1969 = vshll.u32 %v1960, %v1967
  %v1970 = vshrl.u32 %v1952, %v1968
  %v1971 = vor.u32 %v1969, %v1970
  %v1972 = vsub.s32 4294967266, %v1967
  %v1973 = vadd.s32 %v1972, 127
  %v1974 = vshll.u32 %v1973, 23
  %v1975 = vor.u32 4788187, %v1974
  %v1976 = vand.u32 2147483647, %v1975
  %v1978 = vcvt.s32.f32 %v1971
  %v1979 = vmul.f32 %v1978, %v1976
  %v1980 = vxor.u32 %v1979, 2147483648
  %v1981 = vsel %vm1898, %v1980, %v1979
  %v1982 = vsub.s32 4, %v1958
  %v1983 = vsel %vm1898, %v1982, %v1958
  %v1984 = vsel %vm1897, %v333, %v1981
  %v1985 = vsel %vm1897, 0, %v1983
  %v1986 = vcosq.f32.pop %v1984
  %v1987 = vsinq.f32.pop %v1984
  %vm1988 = vweird.f32 %v333
  %v1989 = vadd.s32 %v1985, 3
  %v1990 = vand.u32 %v1989, 3
  %vm1991 = vcmp.lt.s32.totalorder %v1990, 2
  %vm1992 = vcmp.eq.s32.totalorder %v1990, 0
  %v1993 = vxor.u32 %v1987, 2147483648
  %v1994 = vsel %vm1992, %v1986, %v1993
  %vm1995 = vcmp.eq.s32.totalorder %v1990, 2
  %v1996 = vxor.u32 %v1986, 2147483648
  %v1997 = vsel %vm1995, %v1996, %v1987
  %v1998 = vsel %vm1991, %v1994, %v1997
  %v1999 = vsel %vm1988, nan, %v1998
  %2000 = vst [vmem:[%s3] sm:$0xff] %v439
  %2001 = vst [vmem:[%s3 + $0x8] sm:$0xff] %v543
  %2002 = vst [vmem:[%s3 + $0x10] sm:$0xff] %v647
  %2003 = vst [vmem:[%s3 + $0x18] sm:$0xff] %v751
  %2004 = vst [vmem:[%s3 + $0x20] sm:$0xff] %v855
  %2005 = vst [vmem:[%s3 + $0x28] sm:$0xff] %v959
  %2006 = vst [vmem:[%s3 + $0x30] sm:$0xff] %v1063
  %2007 = vst [vmem:[%s3 + $0x38] sm:$0xff] %v1167
  %2008 = vst [vmem:[%s3 + $0x40] sm:$0xff] %v1271
  %2009 = vst [vmem:[%s3 + $0x48] sm:$0xff] %v1375
  %2010 = vst [vmem:[%s3 + $0x50] sm:$0xff] %v1479
  %2011 = vst [vmem:[%s3 + $0x58] sm:$0xff] %v1583
  %2012 = vst [vmem:[%s3 + $0x60] sm:$0xff] %v1687
  %2013 = vst [vmem:[%s3 + $0x68] sm:$0xff] %v1791
  %2014 = vst [vmem:[%s3 + $0x70] sm:$0xff] %v1895
  %2015 = vst [vmem:[%s3 + $0x78] sm:$0xff] %v1999
  // Predicated region
  $region14: #{_lambda_.17} parent=0 // pred_check
    _
  $region15: #{_lambda_.17} parent=0 // pred_check_branch
    %2017 = sbr.rel (0) target = $region17
  $region16: #{_lambda_.17} parent=0 // pred_region
    _
  $region17: #{_lambda_.17} parent=0 // pred_fallthru
    _
  // Predicated region
  $region18: #{_lambda_.17} parent=0 // pred_check
    _
  $region19: #{_lambda_.17} parent=0 // pred_check_branch
    %2019 = sbr.rel (0) target = $region21
  $region20: #{_lambda_.17} parent=0 // pred_region
    _
  $region21: #{_lambda_.17} parent=0 // pred_fallthru
    _

// kernel: _lambda_.18
$region0: #{_lambda_.18}
  #allocation0 [shape = 'u32[]', space=smem, size = 0x4, offset = 0x4, fixed_abs, tag = 'smem constant byte address 0x4 - core index']
  #allocation1 [shape = 'u32[144,128]{1,0:T(1,128)}', space=vmem, size = 0x12000, scoped, tag = 'internal scratch']
  %s0 = inlined_call_operand.vmem [shape: f32[9,32,128], index: 0, kind: input, shape index: {}]
  %s1 = inlined_call_operand.vmem [shape: f32[32,128], index: 1, kind: output, shape index: {}]
  %s2 = sld [smem:[#allocation0]]
  $region14: #{_lambda_.18} parent=0
    _
  %s4 = ssub.s32 1, %s2
  %s5 = scalar_select 0, %s4, %s2
  // Predicated region
  $region2: #{_lambda_.18} parent=0 // pred_check
    _
  $region3: #{_lambda_.18} parent=0 // pred_check_branch
    %7 = sbr.rel (0) target = $region5
  $region4: #{_lambda_.18} parent=0 // pred_region
    _
  $region5: #{_lambda_.18} parent=0 // pred_fallthru
    _
  %v8 = vld [vmem:[%s0] sm:$0xff]
  %v9 = vld [vmem:[%s0 + $0x8] sm:$0xff]
  %v10 = vld [vmem:[%s0 + $0x10] sm:$0xff]
  %v11 = vld [vmem:[%s0 + $0x18] sm:$0xff]
  %v12 = vld [vmem:[%s0 + $0x20] sm:$0xff]
  %v13 = vld [vmem:[%s0 + $0x28] sm:$0xff]
  %v14 = vld [vmem:[%s0 + $0x30] sm:$0xff]
  %v15 = vld [vmem:[%s0 + $0x38] sm:$0xff]
  %v16 = vld [vmem:[%s0 + $0x40] sm:$0xff]
  %v17 = vld [vmem:[%s0 + $0x48] sm:$0xff]
  %v18 = vld [vmem:[%s0 + $0x50] sm:$0xff]
  %v19 = vld [vmem:[%s0 + $0x58] sm:$0xff]
  %v20 = vld [vmem:[%s0 + $0x60] sm:$0xff]
  %v21 = vld [vmem:[%s0 + $0x68] sm:$0xff]
  %v22 = vld [vmem:[%s0 + $0x70] sm:$0xff]
  %v23 = vld [vmem:[%s0 + $0x78] sm:$0xff]
  %v24 = vld [vmem:[%s0 + $0x80] sm:$0xff]
  %v25 = vld [vmem:[%s0 + $0x88] sm:$0xff]
  %v26 = vld [vmem:[%s0 + $0x90] sm:$0xff]
  %v27 = vld [vmem:[%s0 + $0x98] sm:$0xff]
  %v28 = vld [vmem:[%s0 + $0xa0] sm:$0xff]
  %v29 = vld [vmem:[%s0 + $0xa8] sm:$0xff]
  %v30 = vld [vmem:[%s0 + $0xb0] sm:$0xff]
  %v31 = vld [vmem:[%s0 + $0xb8] sm:$0xff]
  %v32 = vld [vmem:[%s0 + $0xc0] sm:$0xff]
  %v33 = vld [vmem:[%s0 + $0xc8] sm:$0xff]
  %v34 = vld [vmem:[%s0 + $0xd0] sm:$0xff]
  %v35 = vld [vmem:[%s0 + $0xd8] sm:$0xff]
  %v36 = vld [vmem:[%s0 + $0xe0] sm:$0xff]
  %v37 = vld [vmem:[%s0 + $0xe8] sm:$0xff]
  %v38 = vld [vmem:[%s0 + $0xf0] sm:$0xff]
  %v39 = vld [vmem:[%s0 + $0xf8] sm:$0xff]
  %v40 = vld [vmem:[%s0 + $0x100] sm:$0xff]
  %v41 = vld [vmem:[%s0 + $0x108] sm:$0xff]
  %v42 = vld [vmem:[%s0 + $0x110] sm:$0xff]
  %v43 = vld [vmem:[%s0 + $0x118] sm:$0xff]
  %v44 = vmax.f32 %v8, %v12
  %v45 = vmax.f32 %v44, %v16
  %v46 = vmax.f32 %v45, %v20
  %v47 = vmax.f32 %v46, %v24
  %v48 = vmax.f32 %v47, %v28
  %v49 = vmax.f32 %v48, %v32
  %v50 = vmax.f32 %v49, %v36
  %v51 = vmax.f32 %v50, %v40
  %v52 = vmax.f32 %v9, %v13
  %v53 = vmax.f32 %v52, %v17
  %v54 = vmax.f32 %v53, %v21
  %v55 = vmax.f32 %v54, %v25
  %v56 = vmax.f32 %v55, %v29
  %v57 = vmax.f32 %v56, %v33
  %v58 = vmax.f32 %v57, %v37
  %v59 = vmax.f32 %v58, %v41
  %v60 = vmax.f32 %v10, %v14
  %v61 = vmax.f32 %v60, %v18
  %v62 = vmax.f32 %v61, %v22
  %v63 = vmax.f32 %v62, %v26
  %v64 = vmax.f32 %v63, %v30
  %v65 = vmax.f32 %v64, %v34
  %v66 = vmax.f32 %v65, %v38
  %v67 = vmax.f32 %v66, %v42
  %v68 = vmax.f32 %v11, %v15
  %v69 = vmax.f32 %v68, %v19
  %v70 = vmax.f32 %v69, %v23
  %v71 = vmax.f32 %v70, %v27
  %v72 = vmax.f32 %v71, %v31
  %v73 = vmax.f32 %v72, %v35
  %v74 = vmax.f32 %v73, %v39
  %v75 = vmax.f32 %v74, %v43
  %76 = vst [vmem:[%s1] sm:$0xff] %v51
  %77 = vst [vmem:[%s1 + $0x8] sm:$0xff] %v59
  %78 = vst [vmem:[%s1 + $0x10] sm:$0xff] %v67
  %79 = vst [vmem:[%s1 + $0x18] sm:$0xff] %v75
  // Predicated region
  $region6: #{_lambda_.18} parent=0 // pred_check
    _
  $region7: #{_lambda_.18} parent=0 // pred_check_branch
    %81 = sbr.rel (0) target = $region9
  $region8: #{_lambda_.18} parent=0 // pred_region
    _
  $region9: #{_lambda_.18} parent=0 // pred_fallthru
    _
  // Predicated region
  $region10: #{_lambda_.18} parent=0 // pred_check
    _
  $region11: #{_lambda_.18} parent=0 // pred_check_branch
    %83 = sbr.rel (0) target = $region13
  $region12: #{_lambda_.18} parent=0 // pred_region
    _
  $region13: #{_lambda_.18} parent=0 // pred_fallthru
    _

// kernel: _lambda_.20
$region0: #{_lambda_.20}
  #allocation0 [shape = 'u32[]', space=smem, size = 0x4, offset = 0x4, fixed_abs, tag = 'smem constant byte address 0x4 - core index']
  #allocation1 [shape = 'u32[144,128]{1,0:T(1,128)}', space=vmem, size = 0x12000, scoped, tag = 'internal scratch']
  %s0 = inlined_call_operand.vmem [shape: bf16[32,8], index: 0, kind: input, shape index: {}]
  %s1 = inlined_call_operand.vmem [shape: bf16[8,128], index: 1, kind: input, shape index: {}]
  %s2 = inlined_call_operand.vmem [shape: f32[1,128], index: 2, kind: input, shape index: {}]
  %s3 = inlined_call_operand.vmem [shape: f32[32,128], index: 3, kind: output, shape index: {}]
  %s4 = sld [smem:[#allocation0]]
  $region22: #{_lambda_.20} parent=0
    _
  %s6 = ssub.s32 1, %s4
  %s7 = scalar_select 0, %s6, %s4
  // Predicated region
  $region2: #{_lambda_.20} parent=0 // pred_check
    _
  $region3: #{_lambda_.20} parent=0 // pred_check_branch
    %9 = sbr.rel (0) target = $region5
  $region4: #{_lambda_.20} parent=0 // pred_region
    _
  $region5: #{_lambda_.20} parent=0 // pred_fallthru
    _
  // Predicated region
  $region6: #{_lambda_.20} parent=0 // pred_check
    _
  $region7: #{_lambda_.20} parent=0 // pred_check_branch
    %11 = sbr.rel (0) target = $region9
  $region8: #{_lambda_.20} parent=0 // pred_region
    _
  $region9: #{_lambda_.20} parent=0 // pred_fallthru
    _
  // Predicated region
  $region10: #{_lambda_.20} parent=0 // pred_check
    _
  $region11: #{_lambda_.20} parent=0 // pred_check_branch
    %13 = sbr.rel (0) target = $region13
  $region12: #{_lambda_.20} parent=0 // pred_region
    _
  $region13: #{_lambda_.20} parent=0 // pred_fallthru
    _
  %v15 = vld [vmem:[%s0] sm:$0xf]
  %v16 = vld [vmem:[%s0 + $0x4] sm:$0xf]
  %v17 = vld [vmem:[%s0 + $0x8] sm:$0xf]
  %v18 = vld [vmem:[%s0 + $0xc] sm:$0xf]
  %v19 = vld [vmem:[%s1] sm:$0xf]
  %v20 = vld [vmem:[%s2] sm:$0x1]
  %v22 = vlaneseq
  %v23 = vshrl.u32 %v22, 7
  %v24 = vsub.s32 0, %v23
  %v25 = vrot.slane %v20, %v24
  %v31 = vunpack.c.l.b16 %v15
  %v32 = vunpack.c.l.b16 %v16
  %v33 = vunpack.c.l.b16 %v17
  %v34 = vunpack.c.l.b16 %v18
  %v35 = vpack.c.b16 %v32, %v31
  %v36 = vpack.c.b16 %v34, %v33
  %vm37 = vcmask 64512
  %v39 = vsel %vm37, %v35, 0
  %v42 = vsel %vm37, %v36, 0
  %vm44 = vcmask 1043456
  %v46 = vsel %vm44, %v19, 0
  %48 = vmatprep.subr.bf16.mxu0 0
  %49 = vmatpush1.bf16.msra.mxu0 0
  %50 = vmatprep.subr.bf16.mxu0 0
  %51 = vmatpush1.bf16.msra.mxu0 0
  %52 = vmatprep.subr.bf16.mxu0 0
  %53 = vmatpush1.bf16.msra.mxu0 0
  %54 = vmatprep.subr.bf16.mxu0 0
  %55 = vmatpush1.bf16.msra.mxu0 0
  %56 = vmatprep.subr.bf16.mxu0 0
  %57 = vmatpush1.bf16.msra.mxu0 0
  %58 = vmatprep.subr.bf16.mxu0 0
  %59 = vmatpush1.bf16.msra.mxu0 0
  %60 = vmatprep.subr.bf16.mxu0 0
  %61 = vmatpush1.bf16.msra.mxu0 0
  %62 = vmatprep.subr.bf16.mxu0 0
  %63 = vmatpush1.bf16.msra.mxu0 %v46
  %64 = vmatprep.subr.bf16.mxu0 0
  %65 = vmatpush2.bf16.msra.mxu0 0
  %66 = vmatprep.subr.bf16.mxu0 0
  %67 = vmatpush2.bf16.msra.mxu0 0
  %68 = vmatprep.subr.bf16.mxu0 0
  %69 = vmatpush2.bf16.msra.mxu0 0
  %70 = vmatprep.subr.bf16.mxu0 0
  %71 = vmatpush2.bf16.msra.mxu0 0
  %72 = vmatprep.subr.bf16.mxu0 0
  %73 = vmatpush2.bf16.msra.mxu0 0
  %74 = vmatprep.subr.bf16.mxu0 0
  %75 = vmatpush2.bf16.msra.mxu0 0
  %76 = vmatprep.subr.bf16.mxu0 0
  %77 = vmatpush2.bf16.msra.mxu0 0
  %78 = vmatprep.subr.bf16.mxu0 0
  %79 = vmatpush2.bf16.msra.mxu0 0
  %80 = vmatprep.mubr.bf16.mxu0 0
  %81 = vmatmul.mubr.bf16.gmra.mxu0 %v39
  %v82 = vpop.f32.mrf.mxu0
  %v83 = vadd.f32 %v25, %v82
  %v84 = vpop.f32.mrf.mxu0
  %v85 = vpop.f32.mrf.mxu0
  %v86 = vadd.f32 %v25, %v85
  %v87 = vpop.f32.mrf.mxu0
  %88 = vmatprep.mubr.bf16.mxu0 0
  %89 = vmatmul.mubr.bf16.gmra.mxu0 %v42
  %v90 = vpop.f32.mrf.mxu0
  %v91 = vadd.f32 %v25, %v90
  %v92 = vpop.f32.mrf.mxu0
  %v93 = vpop.f32.mrf.mxu0
  %v94 = vadd.f32 %v25, %v93
  %v95 = vpop.f32.mrf.mxu0
  %96 = vdwg.mxu0
  %v97 = vand.u32 2147483647, %v83
  %vm98 = vcmp.le.f32.partialorder %v97, 0.7853982
  %vm99 = vcmp.lt.s32.totalorder %v83, 0
  %v100 = vand.u32 %v83, 2139095040
  %v101 = vshrl.u32 %v100, 23
  %v102 = vsub.s32 %v101, 127
  %v103 = vand.u32 2147483647, %v83
  %v104 = vand.u32 %v103, 8388607
  %v105 = vor.u32 %v104, 8388608
  %v106 = vsub.s32 0, %v105
  %v107 = vadd.s32 %v102, 1
  %vm108 = vcmp.gt.s32.totalorder %v107, 0
  %v109 = vsel %vm108, %v107, 0
  %v110 = vshrl.u32 %v109, 5
  %v111 = vand.u32 %v109, 31
  %v112 = vsub.s32 32, %v111
  %v113 = vshrl.u32 683565275, %v112
  %v114 = vshll.u32 683565275, %v111
  %v115 = vshrl.u32 2475754826, %v112
  %v116 = vor.u32 %v114, %v115
  %v117 = vshll.u32 2475754826, %v111
  %v118 = vshrl.u32 2131351028, %v112
  %v119 = vor.u32 %v117, %v118
  %v120 = vshll.u32 2131351028, %v111
  %v121 = vshrl.u32 2102212464, %v112
  %v122 = vor.u32 %v120, %v121
  %v123 = vshll.u32 2102212464, %v111
  %v124 = vshrl.u32 920167782, %v112
  %v125 = vor.u32 %v123, %v124
  %v126 = vshll.u32 920167782, %v111
  %v127 = vshrl.u32 1326507024, %v112
  %v128 = vor.u32 %v126, %v127
  %vm129 = vcmp.lt.s32.totalorder %v110, 1
  %vm130 = vcmp.lt.s32.totalorder %v110, 2
  %vm131 = vcmp.lt.s32.totalorder %v110, 3
  %vm132 = vcmp.lt.s32.totalorder %v110, 4
  %v133 = vsel %vm129, %v113, %v116
  %v134 = vsel %vm132, %v122, 2102212464
  %v135 = vsel %vm131, %v119, %v134
  %v136 = vsel %vm130, %v133, %v135
  %v137 = vsel %vm129, %v116, %v119
  %v138 = vsel %vm132, %v125, 920167782
  %v139 = vsel %vm131, %v122, %v138
  %v140 = vsel %vm130, %v137, %v139
  %v141 = vsel %vm129, %v119, %v122
  %v142 = vsel %vm132, %v128, 1326507024
  %v143 = vsel %vm131, %v125, %v142
  %v144 = vsel %vm130, %v141, %v143
  %v145 = vshll.u32 %v105, 8
  %v146 = vmul.u32.u64.compose %v145, %v144
  %v147 = vextract.low.u32 %v146
  %v148 = vextract.high.u32 %v146
  %v149 = vmul.u32.u64.compose %v145, %v140
  %v150 = vextract.low.u32 %v149
  %v151 = vextract.high.u32 %v149
  %v152 = vmul.u32 %v145, %v136
  %v153 = vadd.s32 %v148, %v150
  %vm154 = vc.u32 %v148, %v150
  %v155 = vadd.s32 %v151, 1
  %v156 = vsel %vm154, %v155, %v151
  %v157 = vadd.s32 %v152, %v156
  %v158 = vadd.s32 %v157, 536870912
  %v159 = vshrl.u32 %v158, 30
  %v160 = vshll.u32 %v159, 30
  %v161 = vsub.s32 %v157, %v160
  %vm162 = vcmp.lt.s32.totalorder %v161, 0
  %v163 = vsub.s32 0, %v161
  %v164 = vsel %vm162, %v163, %v161
  %v165 = vclz %v164
  %v166 = vsub.s32 %v165, 2
  %vm167 = vcmp.gt.s32.totalorder 0, %v166
  %v168 = vsel %vm167, 0, %v166
  %v169 = vsub.s32 32, %v168
  %v170 = vshll.u32 %v161, %v168
  %v171 = vshrl.u32 %v153, %v169
  %v172 = vor.u32 %v170, %v171
  %v173 = vsub.s32 4294967266, %v168
  %v174 = vadd.s32 %v173, 127
  %v175 = vshll.u32 %v174, 23
  %v176 = vor.u32 4788187, %v175
  %v177 = vand.u32 2147483647, %v176
  %v179 = vcvt.s32.f32 %v172
  %v180 = vmul.f32 %v179, %v177
  %v181 = vxor.u32 %v180, 2147483648
  %v182 = vsel %vm99, %v181, %v180
  %v183 = vsub.s32 4, %v159
  %v184 = vsel %vm99, %v183, %v159
  %v185 = vsel %vm98, %v83, %v182
  %v186 = vsel %vm98, 0, %v184
  %v187 = vcosq.f32.pop %v185
  %v188 = vsinq.f32.pop %v185
  %vm189 = vweird.f32 %v83
  %v190 = vadd.s32 %v186, 3
  %v191 = vand.u32 %v190, 3
  %vm192 = vcmp.lt.s32.totalorder %v191, 2
  %vm193 = vcmp.eq.s32.totalorder %v191, 0
  %v194 = vxor.u32 %v188, 2147483648
  %v195 = vsel %vm193, %v187, %v194
  %vm196 = vcmp.eq.s32.totalorder %v191, 2
  %v197 = vxor.u32 %v187, 2147483648
  %v198 = vsel %vm196, %v197, %v188
  %v199 = vsel %vm192, %v195, %v198
  %v200 = vsel %vm189, nan, %v199
  %v201 = vand.u32 2147483647, %v86
  %vm202 = vcmp.le.f32.partialorder %v201, 0.7853982
  %vm203 = vcmp.lt.s32.totalorder %v86, 0
  %v204 = vand.u32 %v86, 2139095040
  %v205 = vshrl.u32 %v204, 23
  %v206 = vsub.s32 %v205, 127
  %v207 = vand.u32 2147483647, %v86
  %v208 = vand.u32 %v207, 8388607
  %v209 = vor.u32 %v208, 8388608
  %v210 = vsub.s32 0, %v209
  %v211 = vadd.s32 %v206, 1
  %vm212 = vcmp.gt.s32.totalorder %v211, 0
  %v213 = vsel %vm212, %v211, 0
  %v214 = vshrl.u32 %v213, 5
  %v215 = vand.u32 %v213, 31
  %v216 = vsub.s32 32, %v215
  %v217 = vshrl.u32 683565275, %v216
  %v218 = vshll.u32 683565275, %v215
  %v219 = vshrl.u32 2475754826, %v216
  %v220 = vor.u32 %v218, %v219
  %v221 = vshll.u32 2475754826, %v215
  %v222 = vshrl.u32 2131351028, %v216
  %v223 = vor.u32 %v221, %v222
  %v224 = vshll.u32 2131351028, %v215
  %v225 = vshrl.u32 2102212464, %v216
  %v226 = vor.u32 %v224, %v225
  %v227 = vshll.u32 2102212464, %v215
  %v228 = vshrl.u32 920167782, %v216
  %v229 = vor.u32 %v227, %v228
  %v230 = vshll.u32 920167782, %v215
  %v231 = vshrl.u32 1326507024, %v216
  %v232 = vor.u32 %v230, %v231
  %vm233 = vcmp.lt.s32.totalorder %v214, 1
  %vm234 = vcmp.lt.s32.totalorder %v214, 2
  %vm235 = vcmp.lt.s32.totalorder %v214, 3
  %vm236 = vcmp.lt.s32.totalorder %v214, 4
  %v237 = vsel %vm233, %v217, %v220
  %v238 = vsel %vm236, %v226, 2102212464
  %v239 = vsel %vm235, %v223, %v238
  %v240 = vsel %vm234, %v237, %v239
  %v241 = vsel %vm233, %v220, %v223
  %v242 = vsel %vm236, %v229, 920167782
  %v243 = vsel %vm235, %v226, %v242
  %v244 = vsel %vm234, %v241, %v243
  %v245 = vsel %vm233, %v223, %v226
  %v246 = vsel %vm236, %v232, 1326507024
  %v247 = vsel %vm235, %v229, %v246
  %v248 = vsel %vm234, %v245, %v247
  %v249 = vshll.u32 %v209, 8
  %v250 = vmul.u32.u64.compose %v249, %v248
  %v251 = vextract.low.u32 %v250
  %v252 = vextract.high.u32 %v250
  %v253 = vmul.u32.u64.compose %v249, %v244
  %v254 = vextract.low.u32 %v253
  %v255 = vextract.high.u32 %v253
  %v256 = vmul.u32 %v249, %v240
  %v257 = vadd.s32 %v252, %v254
  %vm258 = vc.u32 %v252, %v254
  %v259 = vadd.s32 %v255, 1
  %v260 = vsel %vm258, %v259, %v255
  %v261 = vadd.s32 %v256, %v260
  %v262 = vadd.s32 %v261, 536870912
  %v263 = vshrl.u32 %v262, 30
  %v264 = vshll.u32 %v263, 30
  %v265 = vsub.s32 %v261, %v264
  %vm266 = vcmp.lt.s32.totalorder %v265, 0
  %v267 = vsub.s32 0, %v265
  %v268 = vsel %vm266, %v267, %v265
  %v269 = vclz %v268
  %v270 = vsub.s32 %v269, 2
  %vm271 = vcmp.gt.s32.totalorder 0, %v270
  %v272 = vsel %vm271, 0, %v270
  %v273 = vsub.s32 32, %v272
  %v274 = vshll.u32 %v265, %v272
  %v275 = vshrl.u32 %v257, %v273
  %v276 = vor.u32 %v274, %v275
  %v277 = vsub.s32 4294967266, %v272
  %v278 = vadd.s32 %v277, 127
  %v279 = vshll.u32 %v278, 23
  %v280 = vor.u32 4788187, %v279
  %v281 = vand.u32 2147483647, %v280
  %v283 = vcvt.s32.f32 %v276
  %v284 = vmul.f32 %v283, %v281
  %v285 = vxor.u32 %v284, 2147483648
  %v286 = vsel %vm203, %v285, %v284
  %v287 = vsub.s32 4, %v263
  %v288 = vsel %vm203, %v287, %v263
  %v289 = vsel %vm202, %v86, %v286
  %v290 = vsel %vm202, 0, %v288
  %v291 = vcosq.f32.pop %v289
  %v292 = vsinq.f32.pop %v289
  %vm293 = vweird.f32 %v86
  %v294 = vadd.s32 %v290, 3
  %v295 = vand.u32 %v294, 3
  %vm296 = vcmp.lt.s32.totalorder %v295, 2
  %vm297 = vcmp.eq.s32.totalorder %v295, 0
  %v298 = vxor.u32 %v292, 2147483648
  %v299 = vsel %vm297, %v291, %v298
  %vm300 = vcmp.eq.s32.totalorder %v295, 2
  %v301 = vxor.u32 %v291, 2147483648
  %v302 = vsel %vm300, %v301, %v292
  %v303 = vsel %vm296, %v299, %v302
  %v304 = vsel %vm293, nan, %v303
  %v305 = vand.u32 2147483647, %v91
  %vm306 = vcmp.le.f32.partialorder %v305, 0.7853982
  %vm307 = vcmp.lt.s32.totalorder %v91, 0
  %v308 = vand.u32 %v91, 2139095040
  %v309 = vshrl.u32 %v308, 23
  %v310 = vsub.s32 %v309, 127
  %v311 = vand.u32 2147483647, %v91
  %v312 = vand.u32 %v311, 8388607
  %v313 = vor.u32 %v312, 8388608
  %v314 = vsub.s32 0, %v313
  %v315 = vadd.s32 %v310, 1
  %vm316 = vcmp.gt.s32.totalorder %v315, 0
  %v317 = vsel %vm316, %v315, 0
  %v318 = vshrl.u32 %v317, 5
  %v319 = vand.u32 %v317, 31
  %v320 = vsub.s32 32, %v319
  %v321 = vshrl.u32 683565275, %v320
  %v322 = vshll.u32 683565275, %v319
  %v323 = vshrl.u32 2475754826, %v320
  %v324 = vor.u32 %v322, %v323
  %v325 = vshll.u32 2475754826, %v319
  %v326 = vshrl.u32 2131351028, %v320
  %v327 = vor.u32 %v325, %v326
  %v328 = vshll.u32 2131351028, %v319
  %v329 = vshrl.u32 2102212464, %v320
  %v330 = vor.u32 %v328, %v329
  %v331 = vshll.u32 2102212464, %v319
  %v332 = vshrl.u32 920167782, %v320
  %v333 = vor.u32 %v331, %v332
  %v334 = vshll.u32 920167782, %v319
  %v335 = vshrl.u32 1326507024, %v320
  %v336 = vor.u32 %v334, %v335
  %vm337 = vcmp.lt.s32.totalorder %v318, 1
  %vm338 = vcmp.lt.s32.totalorder %v318, 2
  %vm339 = vcmp.lt.s32.totalorder %v318, 3
  %vm340 = vcmp.lt.s32.totalorder %v318, 4
  %v341 = vsel %vm337, %v321, %v324
  %v342 = vsel %vm340, %v330, 2102212464
  %v343 = vsel %vm339, %v327, %v342
  %v344 = vsel %vm338, %v341, %v343
  %v345 = vsel %vm337, %v324, %v327
  %v346 = vsel %vm340, %v333, 920167782
  %v347 = vsel %vm339, %v330, %v346
  %v348 = vsel %vm338, %v345, %v347
  %v349 = vsel %vm337, %v327, %v330
  %v350 = vsel %vm340, %v336, 1326507024
  %v351 = vsel %vm339, %v333, %v350
  %v352 = vsel %vm338, %v349, %v351
  %v353 = vshll.u32 %v313, 8
  %v354 = vmul.u32.u64.compose %v353, %v352
  %v355 = vextract.low.u32 %v354
  %v356 = vextract.high.u32 %v354
  %v357 = vmul.u32.u64.compose %v353, %v348
  %v358 = vextract.low.u32 %v357
  %v359 = vextract.high.u32 %v357
  %v360 = vmul.u32 %v353, %v344
  %v361 = vadd.s32 %v356, %v358
  %vm362 = vc.u32 %v356, %v358
  %v363 = vadd.s32 %v359, 1
  %v364 = vsel %vm362, %v363, %v359
  %v365 = vadd.s32 %v360, %v364
  %v366 = vadd.s32 %v365, 536870912
  %v367 = vshrl.u32 %v366, 30
  %v368 = vshll.u32 %v367, 30
  %v369 = vsub.s32 %v365, %v368
  %vm370 = vcmp.lt.s32.totalorder %v369, 0
  %v371 = vsub.s32 0, %v369
  %v372 = vsel %vm370, %v371, %v369
  %v373 = vclz %v372
  %v374 = vsub.s32 %v373, 2
  %vm375 = vcmp.gt.s32.totalorder 0, %v374
  %v376 = vsel %vm375, 0, %v374
  %v377 = vsub.s32 32, %v376
  %v378 = vshll.u32 %v369, %v376
  %v379 = vshrl.u32 %v361, %v377
  %v380 = vor.u32 %v378, %v379
  %v381 = vsub.s32 4294967266, %v376
  %v382 = vadd.s32 %v381, 127
  %v383 = vshll.u32 %v382, 23
  %v384 = vor.u32 4788187, %v383
  %v385 = vand.u32 2147483647, %v384
  %v387 = vcvt.s32.f32 %v380
  %v388 = vmul.f32 %v387, %v385
  %v389 = vxor.u32 %v388, 2147483648
  %v390 = vsel %vm307, %v389, %v388
  %v391 = vsub.s32 4, %v367
  %v392 = vsel %vm307, %v391, %v367
  %v393 = vsel %vm306, %v91, %v390
  %v394 = vsel %vm306, 0, %v392
  %v395 = vcosq.f32.pop %v393
  %v396 = vsinq.f32.pop %v393
  %vm397 = vweird.f32 %v91
  %v398 = vadd.s32 %v394, 3
  %v399 = vand.u32 %v398, 3
  %vm400 = vcmp.lt.s32.totalorder %v399, 2
  %vm401 = vcmp.eq.s32.totalorder %v399, 0
  %v402 = vxor.u32 %v396, 2147483648
  %v403 = vsel %vm401, %v395, %v402
  %vm404 = vcmp.eq.s32.totalorder %v399, 2
  %v405 = vxor.u32 %v395, 2147483648
  %v406 = vsel %vm404, %v405, %v396
  %v407 = vsel %vm400, %v403, %v406
  %v408 = vsel %vm397, nan, %v407
  %v409 = vand.u32 2147483647, %v94
  %vm410 = vcmp.le.f32.partialorder %v409, 0.7853982
  %vm411 = vcmp.lt.s32.totalorder %v94, 0
  %v412 = vand.u32 %v94, 2139095040
  %v413 = vshrl.u32 %v412, 23
  %v414 = vsub.s32 %v413, 127
  %v415 = vand.u32 2147483647, %v94
  %v416 = vand.u32 %v415, 8388607
  %v417 = vor.u32 %v416, 8388608
  %v418 = vsub.s32 0, %v417
  %v419 = vadd.s32 %v414, 1
  %vm420 = vcmp.gt.s32.totalorder %v419, 0
  %v421 = vsel %vm420, %v419, 0
  %v422 = vshrl.u32 %v421, 5
  %v423 = vand.u32 %v421, 31
  %v424 = vsub.s32 32, %v423
  %v425 = vshrl.u32 683565275, %v424
  %v426 = vshll.u32 683565275, %v423
  %v427 = vshrl.u32 2475754826, %v424
  %v428 = vor.u32 %v426, %v427
  %v429 = vshll.u32 2475754826, %v423
  %v430 = vshrl.u32 2131351028, %v424
  %v431 = vor.u32 %v429, %v430
  %v432 = vshll.u32 2131351028, %v423
  %v433 = vshrl.u32 2102212464, %v424
  %v434 = vor.u32 %v432, %v433
  %v435 = vshll.u32 2102212464, %v423
  %v436 = vshrl.u32 920167782, %v424
  %v437 = vor.u32 %v435, %v436
  %v438 = vshll.u32 920167782, %v423
  %v439 = vshrl.u32 1326507024, %v424
  %v440 = vor.u32 %v438, %v439
  %vm441 = vcmp.lt.s32.totalorder %v422, 1
  %vm442 = vcmp.lt.s32.totalorder %v422, 2
  %vm443 = vcmp.lt.s32.totalorder %v422, 3
  %vm444 = vcmp.lt.s32.totalorder %v422, 4
  %v445 = vsel %vm441, %v425, %v428
  %v446 = vsel %vm444, %v434, 2102212464
  %v447 = vsel %vm443, %v431, %v446
  %v448 = vsel %vm442, %v445, %v447
  %v449 = vsel %vm441, %v428, %v431
  %v450 = vsel %vm444, %v437, 920167782
  %v451 = vsel %vm443, %v434, %v450
  %v452 = vsel %vm442, %v449, %v451
  %v453 = vsel %vm441, %v431, %v434
  %v454 = vsel %vm444, %v440, 1326507024
  %v455 = vsel %vm443, %v437, %v454
  %v456 = vsel %vm442, %v453, %v455
  %v457 = vshll.u32 %v417, 8
  %v458 = vmul.u32.u64.compose %v457, %v456
  %v459 = vextract.low.u32 %v458
  %v460 = vextract.high.u32 %v458
  %v461 = vmul.u32.u64.compose %v457, %v452
  %v462 = vextract.low.u32 %v461
  %v463 = vextract.high.u32 %v461
  %v464 = vmul.u32 %v457, %v448
  %v465 = vadd.s32 %v460, %v462
  %vm466 = vc.u32 %v460, %v462
  %v467 = vadd.s32 %v463, 1
  %v468 = vsel %vm466, %v467, %v463
  %v469 = vadd.s32 %v464, %v468
  %v470 = vadd.s32 %v469, 536870912
  %v471 = vshrl.u32 %v470, 30
  %v472 = vshll.u32 %v471, 30
  %v473 = vsub.s32 %v469, %v472
  %vm474 = vcmp.lt.s32.totalorder %v473, 0
  %v475 = vsub.s32 0, %v473
  %v476 = vsel %vm474, %v475, %v473
  %v477 = vclz %v476
  %v478 = vsub.s32 %v477, 2
  %vm479 = vcmp.gt.s32.totalorder 0, %v478
  %v480 = vsel %vm479, 0, %v478
  %v481 = vsub.s32 32, %v480
  %v482 = vshll.u32 %v473, %v480
  %v483 = vshrl.u32 %v465, %v481
  %v484 = vor.u32 %v482, %v483
  %v485 = vsub.s32 4294967266, %v480
  %v486 = vadd.s32 %v485, 127
  %v487 = vshll.u32 %v486, 23
  %v488 = vor.u32 4788187, %v487
  %v489 = vand.u32 2147483647, %v488
  %v491 = vcvt.s32.f32 %v484
  %v492 = vmul.f32 %v491, %v489
  %v493 = vxor.u32 %v492, 2147483648
  %v494 = vsel %vm411, %v493, %v492
  %v495 = vsub.s32 4, %v471
  %v496 = vsel %vm411, %v495, %v471
  %v497 = vsel %vm410, %v94, %v494
  %v498 = vsel %vm410, 0, %v496
  %v499 = vcosq.f32.pop %v497
  %v500 = vsinq.f32.pop %v497
  %vm501 = vweird.f32 %v94
  %v502 = vadd.s32 %v498, 3
  %v503 = vand.u32 %v502, 3
  %vm504 = vcmp.lt.s32.totalorder %v503, 2
  %vm505 = vcmp.eq.s32.totalorder %v503, 0
  %v506 = vxor.u32 %v500, 2147483648
  %v507 = vsel %vm505, %v499, %v506
  %vm508 = vcmp.eq.s32.totalorder %v503, 2
  %v509 = vxor.u32 %v499, 2147483648
  %v510 = vsel %vm508, %v509, %v500
  %v511 = vsel %vm504, %v507, %v510
  %v512 = vsel %vm501, nan, %v511
  %513 = vst [vmem:[%s3] sm:$0xff] %v200
  %514 = vst [vmem:[%s3 + $0x8] sm:$0xff] %v304
  %515 = vst [vmem:[%s3 + $0x10] sm:$0xff] %v408
  %516 = vst [vmem:[%s3 + $0x18] sm:$0xff] %v512
  // Predicated region
  $region14: #{_lambda_.20} parent=0 // pred_check
    _
  $region15: #{_lambda_.20} parent=0 // pred_check_branch
    %518 = sbr.rel (0) target = $region17
  $region16: #{_lambda_.20} parent=0 // pred_region
    _
  $region17: #{_lambda_.20} parent=0 // pred_fallthru
    _
  // Predicated region
  $region18: #{_lambda_.20} parent=0 // pred_check
    _
  $region19: #{_lambda_.20} parent=0 // pred_check_branch
    %520 = sbr.rel (0) target = $region21
  $region20: #{_lambda_.20} parent=0 // pred_region
    _
  $region21: #{_lambda_.20} parent=0 // pred_fallthru
    _

// kernel: _lambda_.21
$region0: #{_lambda_.21}
  #allocation0 [shape = 'u32[]', space=smem, size = 0x4, offset = 0x4, fixed_abs, tag = 'smem constant byte address 0x4 - core index']
  #allocation1 [shape = 'u32[144,128]{1,0:T(1,128)}', space=vmem, size = 0x12000, scoped, tag = 'internal scratch']
  %s0 = inlined_call_operand.vmem [shape: bf16[32,72], index: 0, kind: input, shape index: {}]
  %s1 = inlined_call_operand.vmem [shape: bf16[72,128], index: 1, kind: input, shape index: {}]
  %s2 = inlined_call_operand.vmem [shape: f32[1,128], index: 2, kind: input, shape index: {}]
  %s3 = inlined_call_operand.vmem [shape: f32[32,128], index: 3, kind: output, shape index: {}]
  %s4 = sld [smem:[#allocation0]]
  $region22: #{_lambda_.21} parent=0
    _
  %s6 = ssub.s32 1, %s4
  %s7 = scalar_select 0, %s6, %s4
  // Predicated region
  $region2: #{_lambda_.21} parent=0 // pred_check
    _
  $region3: #{_lambda_.21} parent=0 // pred_check_branch
    %9 = sbr.rel (0) target = $region5
  $region4: #{_lambda_.21} parent=0 // pred_region
    _
  $region5: #{_lambda_.21} parent=0 // pred_fallthru
    _
  // Predicated region
  $region6: #{_lambda_.21} parent=0 // pred_check
    _
  $region7: #{_lambda_.21} parent=0 // pred_check_branch
    %11 = sbr.rel (0) target = $region9
  $region8: #{_lambda_.21} parent=0 // pred_region
    _
  $region9: #{_lambda_.21} parent=0 // pred_fallthru
    _
  // Predicated region
  $region10: #{_lambda_.21} parent=0 // pred_check
    _
  $region11: #{_lambda_.21} parent=0 // pred_check_branch
    %13 = sbr.rel (0) target = $region13
  $region12: #{_lambda_.21} parent=0 // pred_region
    _
  $region13: #{_lambda_.21} parent=0 // pred_fallthru
    _
  %v15 = vld [vmem:[%s0] sm:$0xf]
  %v16 = vld [vmem:[%s0 + $0x4] sm:$0xf]
  %v17 = vld [vmem:[%s0 + $0x8] sm:$0xf]
  %v18 = vld [vmem:[%s0 + $0xc] sm:$0xf]
  %v19 = vld [vmem:[%s1] sm:$0xf]
  %v20 = vld [vmem:[%s1 + $0x4] sm:$0xf]
  %v21 = vld [vmem:[%s1 + $0x8] sm:$0xf]
  %v22 = vld [vmem:[%s1 + $0xc] sm:$0xf]
  %v23 = vld [vmem:[%s1 + $0x10] sm:$0xf]
  %v24 = vld [vmem:[%s1 + $0x14] sm:$0xf]
  %v25 = vld [vmem:[%s1 + $0x18] sm:$0xf]
  %v26 = vld [vmem:[%s1 + $0x1c] sm:$0xf]
  %v27 = vld [vmem:[%s1 + $0x20] sm:$0xf]
  %v28 = vld [vmem:[%s2] sm:$0x1]
  %v30 = vlaneseq
  %v31 = vshrl.u32 %v30, 7
  %v32 = vsub.s32 0, %v31
  %v33 = vrot.slane %v28, %v32
  %v39 = vunpack.c.l.b16 %v15
  %v40 = vunpack.c.l.b16 %v16
  %v41 = vunpack.c.l.b16 %v17
  %v42 = vunpack.c.l.b16 %v18
  %v43 = vpack.c.b16 %v40, %v39
  %v44 = vpack.c.b16 %v42, %v41
  %v54 = vunpack.c.l.b16 %v19
  %v55 = vunpack.c.l.b16 %v20
  %v56 = vunpack.c.l.b16 %v21
  %v57 = vunpack.c.l.b16 %v22
  %v58 = vunpack.c.l.b16 %v23
  %v59 = vunpack.c.l.b16 %v24
  %v60 = vunpack.c.l.b16 %v25
  %v61 = vunpack.c.l.b16 %v26
  %v62 = vunpack.c.l.b16 %v27
  %v63 = vpack.c.b16 %v55, %v54
  %v64 = vpack.c.b16 %v57, %v56
  %v65 = vpack.c.b16 %v59, %v58
  %v66 = vpack.c.b16 %v61, %v60
  %v67 = vpack.c.b16 %v62, %v62
  %vm72 = vcmask 588800
  %v74 = vsel %vm72, %v43, 0
  %v77 = vsel %vm72, %v44, 0
  %vm79 = vcmask 1043456
  %v81 = vsel %vm79, %v67, 0
  %83 = vmatprep.subr.bf16.mxu0 0
  %84 = vmatpush1.bf16.msra.mxu0 0
  %85 = vmatprep.subr.bf16.mxu0 0
  %86 = vmatpush1.bf16.msra.mxu0 0
  %87 = vmatprep.subr.bf16.mxu0 0
  %88 = vmatpush1.bf16.msra.mxu0 0
  %89 = vmatprep.subr.bf16.mxu0 0
  %90 = vmatpush1.bf16.msra.mxu0 %v81
  %91 = vmatprep.subr.bf16.mxu0 0
  %92 = vmatpush1.bf16.msra.mxu0 %v66
  %93 = vmatprep.subr.bf16.mxu0 0
  %94 = vmatpush1.bf16.msra.mxu0 %v65
  %95 = vmatprep.subr.bf16.mxu0 0
  %96 = vmatpush1.bf16.msra.mxu0 %v64
  %97 = vmatprep.subr.bf16.mxu0 0
  %98 = vmatpush1.bf16.msra.mxu0 %v63
  %99 = vmatprep.subr.bf16.mxu0 0
  %100 = vmatpush2.bf16.msra.mxu0 0
  %101 = vmatprep.subr.bf16.mxu0 0
  %102 = vmatpush2.bf16.msra.mxu0 0
  %103 = vmatprep.subr.bf16.mxu0 0
  %104 = vmatpush2.bf16.msra.mxu0 0
  %105 = vmatprep.subr.bf16.mxu0 0
  %106 = vmatpush2.bf16.msra.mxu0 0
  %107 = vmatprep.subr.bf16.mxu0 0
  %108 = vmatpush2.bf16.msra.mxu0 0
  %109 = vmatprep.subr.bf16.mxu0 0
  %110 = vmatpush2.bf16.msra.mxu0 0
  %111 = vmatprep.subr.bf16.mxu0 0
  %112 = vmatpush2.bf16.msra.mxu0 0
  %113 = vmatprep.subr.bf16.mxu0 0
  %114 = vmatpush2.bf16.msra.mxu0 0
  %115 = vmatprep.mubr.bf16.mxu0 0
  %116 = vmatmul.mubr.bf16.gmra.mxu0 %v74
  %v117 = vpop.f32.mrf.mxu0
  %v118 = vadd.f32 %v33, %v117
  %v119 = vpop.f32.mrf.mxu0
  %v120 = vpop.f32.mrf.mxu0
  %v121 = vadd.f32 %v33, %v120
  %v122 = vpop.f32.mrf.mxu0
  %123 = vmatprep.mubr.bf16.mxu0 0
  %124 = vmatmul.mubr.bf16.gmra.mxu0 %v77
  %v125 = vpop.f32.mrf.mxu0
  %v126 = vadd.f32 %v33, %v125
  %v127 = vpop.f32.mrf.mxu0
  %v128 = vpop.f32.mrf.mxu0
  %v129 = vadd.f32 %v33, %v128
  %v130 = vpop.f32.mrf.mxu0
  %131 = vdwg.mxu0
  %v132 = vand.u32 2147483647, %v118
  %vm133 = vcmp.le.f32.partialorder %v132, 0.7853982
  %vm134 = vcmp.lt.s32.totalorder %v118, 0
  %v135 = vand.u32 %v118, 2139095040
  %v136 = vshrl.u32 %v135, 23
  %v137 = vsub.s32 %v136, 127
  %v138 = vand.u32 2147483647, %v118
  %v139 = vand.u32 %v138, 8388607
  %v140 = vor.u32 %v139, 8388608
  %v141 = vsub.s32 0, %v140
  %v142 = vadd.s32 %v137, 1
  %vm143 = vcmp.gt.s32.totalorder %v142, 0
  %v144 = vsel %vm143, %v142, 0
  %v145 = vshrl.u32 %v144, 5
  %v146 = vand.u32 %v144, 31
  %v147 = vsub.s32 32, %v146
  %v148 = vshrl.u32 683565275, %v147
  %v149 = vshll.u32 683565275, %v146
  %v150 = vshrl.u32 2475754826, %v147
  %v151 = vor.u32 %v149, %v150
  %v152 = vshll.u32 2475754826, %v146
  %v153 = vshrl.u32 2131351028, %v147
  %v154 = vor.u32 %v152, %v153
  %v155 = vshll.u32 2131351028, %v146
  %v156 = vshrl.u32 2102212464, %v147
  %v157 = vor.u32 %v155, %v156
  %v158 = vshll.u32 2102212464, %v146
  %v159 = vshrl.u32 920167782, %v147
  %v160 = vor.u32 %v158, %v159
  %v161 = vshll.u32 920167782, %v146
  %v162 = vshrl.u32 1326507024, %v147
  %v163 = vor.u32 %v161, %v162
  %vm164 = vcmp.lt.s32.totalorder %v145, 1
  %vm165 = vcmp.lt.s32.totalorder %v145, 2
  %vm166 = vcmp.lt.s32.totalorder %v145, 3
  %vm167 = vcmp.lt.s32.totalorder %v145, 4
  %v168 = vsel %vm164, %v148, %v151
  %v169 = vsel %vm167, %v157, 2102212464
  %v170 = vsel %vm166, %v154, %v169
  %v171 = vsel %vm165, %v168, %v170
  %v172 = vsel %vm164, %v151, %v154
  %v173 = vsel %vm167, %v160, 920167782
  %v174 = vsel %vm166, %v157, %v173
  %v175 = vsel %vm165, %v172, %v174
  %v176 = vsel %vm164, %v154, %v157
  %v177 = vsel %vm167, %v163, 1326507024
  %v178 = vsel %vm166, %v160, %v177
  %v179 = vsel %vm165, %v176, %v178
  %v180 = vshll.u32 %v140, 8
  %v181 = vmul.u32.u64.compose %v180, %v179
  %v182 = vextract.low.u32 %v181
  %v183 = vextract.high.u32 %v181
  %v184 = vmul.u32.u64.compose %v180, %v175
  %v185 = vextract.low.u32 %v184
  %v186 = vextract.high.u32 %v184
  %v187 = vmul.u32 %v180, %v171
  %v188 = vadd.s32 %v183, %v185
  %vm189 = vc.u32 %v183, %v185
  %v190 = vadd.s32 %v186, 1
  %v191 = vsel %vm189, %v190, %v186
  %v192 = vadd.s32 %v187, %v191
  %v193 = vadd.s32 %v192, 536870912
  %v194 = vshrl.u32 %v193, 30
  %v195 = vshll.u32 %v194, 30
  %v196 = vsub.s32 %v192, %v195
  %vm197 = vcmp.lt.s32.totalorder %v196, 0
  %v198 = vsub.s32 0, %v196
  %v199 = vsel %vm197, %v198, %v196
  %v200 = vclz %v199
  %v201 = vsub.s32 %v200, 2
  %vm202 = vcmp.gt.s32.totalorder 0, %v201
  %v203 = vsel %vm202, 0, %v201
  %v204 = vsub.s32 32, %v203
  %v205 = vshll.u32 %v196, %v203
  %v206 = vshrl.u32 %v188, %v204
  %v207 = vor.u32 %v205, %v206
  %v208 = vsub.s32 4294967266, %v203
  %v209 = vadd.s32 %v208, 127
  %v210 = vshll.u32 %v209, 23
  %v211 = vor.u32 4788187, %v210
  %v212 = vand.u32 2147483647, %v211
  %v214 = vcvt.s32.f32 %v207
  %v215 = vmul.f32 %v214, %v212
  %v216 = vxor.u32 %v215, 2147483648
  %v217 = vsel %vm134, %v216, %v215
  %v218 = vsub.s32 4, %v194
  %v219 = vsel %vm134, %v218, %v194
  %v220 = vsel %vm133, %v118, %v217
  %v221 = vsel %vm133, 0, %v219
  %v222 = vcosq.f32.pop %v220
  %v223 = vsinq.f32.pop %v220
  %vm224 = vweird.f32 %v118
  %v225 = vadd.s32 %v221, 3
  %v226 = vand.u32 %v225, 3
  %vm227 = vcmp.lt.s32.totalorder %v226, 2
  %vm228 = vcmp.eq.s32.totalorder %v226, 0
  %v229 = vxor.u32 %v223, 2147483648
  %v230 = vsel %vm228, %v222, %v229
  %vm231 = vcmp.eq.s32.totalorder %v226, 2
  %v232 = vxor.u32 %v222, 2147483648
  %v233 = vsel %vm231, %v232, %v223
  %v234 = vsel %vm227, %v230, %v233
  %v235 = vsel %vm224, nan, %v234
  %v236 = vand.u32 2147483647, %v121
  %vm237 = vcmp.le.f32.partialorder %v236, 0.7853982
  %vm238 = vcmp.lt.s32.totalorder %v121, 0
  %v239 = vand.u32 %v121, 2139095040
  %v240 = vshrl.u32 %v239, 23
  %v241 = vsub.s32 %v240, 127
  %v242 = vand.u32 2147483647, %v121
  %v243 = vand.u32 %v242, 8388607
  %v244 = vor.u32 %v243, 8388608
  %v245 = vsub.s32 0, %v244
  %v246 = vadd.s32 %v241, 1
  %vm247 = vcmp.gt.s32.totalorder %v246, 0
  %v248 = vsel %vm247, %v246, 0
  %v249 = vshrl.u32 %v248, 5
  %v250 = vand.u32 %v248, 31
  %v251 = vsub.s32 32, %v250
  %v252 = vshrl.u32 683565275, %v251
  %v253 = vshll.u32 683565275, %v250
  %v254 = vshrl.u32 2475754826, %v251
  %v255 = vor.u32 %v253, %v254
  %v256 = vshll.u32 2475754826, %v250
  %v257 = vshrl.u32 2131351028, %v251
  %v258 = vor.u32 %v256, %v257
  %v259 = vshll.u32 2131351028, %v250
  %v260 = vshrl.u32 2102212464, %v251
  %v261 = vor.u32 %v259, %v260
  %v262 = vshll.u32 2102212464, %v250
  %v263 = vshrl.u32 920167782, %v251
  %v264 = vor.u32 %v262, %v263
  %v265 = vshll.u32 920167782, %v250
  %v266 = vshrl.u32 1326507024, %v251
  %v267 = vor.u32 %v265, %v266
  %vm268 = vcmp.lt.s32.totalorder %v249, 1
  %vm269 = vcmp.lt.s32.totalorder %v249, 2
  %vm270 = vcmp.lt.s32.totalorder %v249, 3
  %vm271 = vcmp.lt.s32.totalorder %v249, 4
  %v272 = vsel %vm268, %v252, %v255
  %v273 = vsel %vm271, %v261, 2102212464
  %v274 = vsel %vm270, %v258, %v273
  %v275 = vsel %vm269, %v272, %v274
  %v276 = vsel %vm268, %v255, %v258
  %v277 = vsel %vm271, %v264, 920167782
  %v278 = vsel %vm270, %v261, %v277
  %v279 = vsel %vm269, %v276, %v278
  %v280 = vsel %vm268, %v258, %v261
  %v281 = vsel %vm271, %v267, 1326507024
  %v282 = vsel %vm270, %v264, %v281
  %v283 = vsel %vm269, %v280, %v282
  %v284 = vshll.u32 %v244, 8
  %v285 = vmul.u32.u64.compose %v284, %v283
  %v286 = vextract.low.u32 %v285
  %v287 = vextract.high.u32 %v285
  %v288 = vmul.u32.u64.compose %v284, %v279
  %v289 = vextract.low.u32 %v288
  %v290 = vextract.high.u32 %v288
  %v291 = vmul.u32 %v284, %v275
  %v292 = vadd.s32 %v287, %v289
  %vm293 = vc.u32 %v287, %v289
  %v294 = vadd.s32 %v290, 1
  %v295 = vsel %vm293, %v294, %v290
  %v296 = vadd.s32 %v291, %v295
  %v297 = vadd.s32 %v296, 536870912
  %v298 = vshrl.u32 %v297, 30
  %v299 = vshll.u32 %v298, 30
  %v300 = vsub.s32 %v296, %v299
  %vm301 = vcmp.lt.s32.totalorder %v300, 0
  %v302 = vsub.s32 0, %v300
  %v303 = vsel %vm301, %v302, %v300
  %v304 = vclz %v303
  %v305 = vsub.s32 %v304, 2
  %vm306 = vcmp.gt.s32.totalorder 0, %v305
  %v307 = vsel %vm306, 0, %v305
  %v308 = vsub.s32 32, %v307
  %v309 = vshll.u32 %v300, %v307
  %v310 = vshrl.u32 %v292, %v308
  %v311 = vor.u32 %v309, %v310
  %v312 = vsub.s32 4294967266, %v307
  %v313 = vadd.s32 %v312, 127
  %v314 = vshll.u32 %v313, 23
  %v315 = vor.u32 4788187, %v314
  %v316 = vand.u32 2147483647, %v315
  %v318 = vcvt.s32.f32 %v311
  %v319 = vmul.f32 %v318, %v316
  %v320 = vxor.u32 %v319, 2147483648
  %v321 = vsel %vm238, %v320, %v319
  %v322 = vsub.s32 4, %v298
  %v323 = vsel %vm238, %v322, %v298
  %v324 = vsel %vm237, %v121, %v321
  %v325 = vsel %vm237, 0, %v323
  %v326 = vcosq.f32.pop %v324
  %v327 = vsinq.f32.pop %v324
  %vm328 = vweird.f32 %v121
  %v329 = vadd.s32 %v325, 3
  %v330 = vand.u32 %v329, 3
  %vm331 = vcmp.lt.s32.totalorder %v330, 2
  %vm332 = vcmp.eq.s32.totalorder %v330, 0
  %v333 = vxor.u32 %v327, 2147483648
  %v334 = vsel %vm332, %v326, %v333
  %vm335 = vcmp.eq.s32.totalorder %v330, 2
  %v336 = vxor.u32 %v326, 2147483648
  %v337 = vsel %vm335, %v336, %v327
  %v338 = vsel %vm331, %v334, %v337
  %v339 = vsel %vm328, nan, %v338
  %v340 = vand.u32 2147483647, %v126
  %vm341 = vcmp.le.f32.partialorder %v340, 0.7853982
  %vm342 = vcmp.lt.s32.totalorder %v126, 0
  %v343 = vand.u32 %v126, 2139095040
  %v344 = vshrl.u32 %v343, 23
  %v345 = vsub.s32 %v344, 127
  %v346 = vand.u32 2147483647, %v126
  %v347 = vand.u32 %v346, 8388607
  %v348 = vor.u32 %v347, 8388608
  %v349 = vsub.s32 0, %v348
  %v350 = vadd.s32 %v345, 1
  %vm351 = vcmp.gt.s32.totalorder %v350, 0
  %v352 = vsel %vm351, %v350, 0
  %v353 = vshrl.u32 %v352, 5
  %v354 = vand.u32 %v352, 31
  %v355 = vsub.s32 32, %v354
  %v356 = vshrl.u32 683565275, %v355
  %v357 = vshll.u32 683565275, %v354
  %v358 = vshrl.u32 2475754826, %v355
  %v359 = vor.u32 %v357, %v358
  %v360 = vshll.u32 2475754826, %v354
  %v361 = vshrl.u32 2131351028, %v355
  %v362 = vor.u32 %v360, %v361
  %v363 = vshll.u32 2131351028, %v354
  %v364 = vshrl.u32 2102212464, %v355
  %v365 = vor.u32 %v363, %v364
  %v366 = vshll.u32 2102212464, %v354
  %v367 = vshrl.u32 920167782, %v355
  %v368 = vor.u32 %v366, %v367
  %v369 = vshll.u32 920167782, %v354
  %v370 = vshrl.u32 1326507024, %v355
  %v371 = vor.u32 %v369, %v370
  %vm372 = vcmp.lt.s32.totalorder %v353, 1
  %vm373 = vcmp.lt.s32.totalorder %v353, 2
  %vm374 = vcmp.lt.s32.totalorder %v353, 3
  %vm375 = vcmp.lt.s32.totalorder %v353, 4
  %v376 = vsel %vm372, %v356, %v359
  %v377 = vsel %vm375, %v365, 2102212464
  %v378 = vsel %vm374, %v362, %v377
  %v379 = vsel %vm373, %v376, %v378
  %v380 = vsel %vm372, %v359, %v362
  %v381 = vsel %vm375, %v368, 920167782
  %v382 = vsel %vm374, %v365, %v381
  %v383 = vsel %vm373, %v380, %v382
  %v384 = vsel %vm372, %v362, %v365
  %v385 = vsel %vm375, %v371, 1326507024
  %v386 = vsel %vm374, %v368, %v385
  %v387 = vsel %vm373, %v384, %v386
  %v388 = vshll.u32 %v348, 8
  %v389 = vmul.u32.u64.compose %v388, %v387
  %v390 = vextract.low.u32 %v389
  %v391 = vextract.high.u32 %v389
  %v392 = vmul.u32.u64.compose %v388, %v383
  %v393 = vextract.low.u32 %v392
  %v394 = vextract.high.u32 %v392
  %v395 = vmul.u32 %v388, %v379
  %v396 = vadd.s32 %v391, %v393
  %vm397 = vc.u32 %v391, %v393
  %v398 = vadd.s32 %v394, 1
  %v399 = vsel %vm397, %v398, %v394
  %v400 = vadd.s32 %v395, %v399
  %v401 = vadd.s32 %v400, 536870912
  %v402 = vshrl.u32 %v401, 30
  %v403 = vshll.u32 %v402, 30
  %v404 = vsub.s32 %v400, %v403
  %vm405 = vcmp.lt.s32.totalorder %v404, 0
  %v406 = vsub.s32 0, %v404
  %v407 = vsel %vm405, %v406, %v404
  %v408 = vclz %v407
  %v409 = vsub.s32 %v408, 2
  %vm410 = vcmp.gt.s32.totalorder 0, %v409
  %v411 = vsel %vm410, 0, %v409
  %v412 = vsub.s32 32, %v411
  %v413 = vshll.u32 %v404, %v411
  %v414 = vshrl.u32 %v396, %v412
  %v415 = vor.u32 %v413, %v414
  %v416 = vsub.s32 4294967266, %v411
  %v417 = vadd.s32 %v416, 127
  %v418 = vshll.u32 %v417, 23
  %v419 = vor.u32 4788187, %v418
  %v420 = vand.u32 2147483647, %v419
  %v422 = vcvt.s32.f32 %v415
  %v423 = vmul.f32 %v422, %v420
  %v424 = vxor.u32 %v423, 2147483648
  %v425 = vsel %vm342, %v424, %v423
  %v426 = vsub.s32 4, %v402
  %v427 = vsel %vm342, %v426, %v402
  %v428 = vsel %vm341, %v126, %v425
  %v429 = vsel %vm341, 0, %v427
  %v430 = vcosq.f32.pop %v428
  %v431 = vsinq.f32.pop %v428
  %vm432 = vweird.f32 %v126
  %v433 = vadd.s32 %v429, 3
  %v434 = vand.u32 %v433, 3
  %vm435 = vcmp.lt.s32.totalorder %v434, 2
  %vm436 = vcmp.eq.s32.totalorder %v434, 0
  %v437 = vxor.u32 %v431, 2147483648
  %v438 = vsel %vm436, %v430, %v437
  %vm439 = vcmp.eq.s32.totalorder %v434, 2
  %v440 = vxor.u32 %v430, 2147483648
  %v441 = vsel %vm439, %v440, %v431
  %v442 = vsel %vm435, %v438, %v441
  %v443 = vsel %vm432, nan, %v442
  %v444 = vand.u32 2147483647, %v129
  %vm445 = vcmp.le.f32.partialorder %v444, 0.7853982
  %vm446 = vcmp.lt.s32.totalorder %v129, 0
  %v447 = vand.u32 %v129, 2139095040
  %v448 = vshrl.u32 %v447, 23
  %v449 = vsub.s32 %v448, 127
  %v450 = vand.u32 2147483647, %v129
  %v451 = vand.u32 %v450, 8388607
  %v452 = vor.u32 %v451, 8388608
  %v453 = vsub.s32 0, %v452
  %v454 = vadd.s32 %v449, 1
  %vm455 = vcmp.gt.s32.totalorder %v454, 0
  %v456 = vsel %vm455, %v454, 0
  %v457 = vshrl.u32 %v456, 5
  %v458 = vand.u32 %v456, 31
  %v459 = vsub.s32 32, %v458
  %v460 = vshrl.u32 683565275, %v459
  %v461 = vshll.u32 683565275, %v458
  %v462 = vshrl.u32 2475754826, %v459
  %v463 = vor.u32 %v461, %v462
  %v464 = vshll.u32 2475754826, %v458
  %v465 = vshrl.u32 2131351028, %v459
  %v466 = vor.u32 %v464, %v465
  %v467 = vshll.u32 2131351028, %v458
  %v468 = vshrl.u32 2102212464, %v459
  %v469 = vor.u32 %v467, %v468
  %v470 = vshll.u32 2102212464, %v458
  %v471 = vshrl.u32 920167782, %v459
  %v472 = vor.u32 %v470, %v471
  %v473 = vshll.u32 920167782, %v458
  %v474 = vshrl.u32 1326507024, %v459
  %v475 = vor.u32 %v473, %v474
  %vm476 = vcmp.lt.s32.totalorder %v457, 1
  %vm477 = vcmp.lt.s32.totalorder %v457, 2
  %vm478 = vcmp.lt.s32.totalorder %v457, 3
  %vm479 = vcmp.lt.s32.totalorder %v457, 4
  %v480 = vsel %vm476, %v460, %v463
  %v481 = vsel %vm479, %v469, 2102212464
  %v482 = vsel %vm478, %v466, %v481
  %v483 = vsel %vm477, %v480, %v482
  %v484 = vsel %vm476, %v463, %v466
  %v485 = vsel %vm479, %v472, 920167782
  %v486 = vsel %vm478, %v469, %v485
  %v487 = vsel %vm477, %v484, %v486
  %v488 = vsel %vm476, %v466, %v469
  %v489 = vsel %vm479, %v475, 1326507024
  %v490 = vsel %vm478, %v472, %v489
  %v491 = vsel %vm477, %v488, %v490
  %v492 = vshll.u32 %v452, 8
  %v493 = vmul.u32.u64.compose %v492, %v491
  %v494 = vextract.low.u32 %v493
  %v495 = vextract.high.u32 %v493
  %v496 = vmul.u32.u64.compose %v492, %v487
  %v497 = vextract.low.u32 %v496
  %v498 = vextract.high.u32 %v496
  %v499 = vmul.u32 %v492, %v483
  %v500 = vadd.s32 %v495, %v497
  %vm501 = vc.u32 %v495, %v497
  %v502 = vadd.s32 %v498, 1
  %v503 = vsel %vm501, %v502, %v498
  %v504 = vadd.s32 %v499, %v503
  %v505 = vadd.s32 %v504, 536870912
  %v506 = vshrl.u32 %v505, 30
  %v507 = vshll.u32 %v506, 30
  %v508 = vsub.s32 %v504, %v507
  %vm509 = vcmp.lt.s32.totalorder %v508, 0
  %v510 = vsub.s32 0, %v508
  %v511 = vsel %vm509, %v510, %v508
  %v512 = vclz %v511
  %v513 = vsub.s32 %v512, 2
  %vm514 = vcmp.gt.s32.totalorder 0, %v513
  %v515 = vsel %vm514, 0, %v513
  %v516 = vsub.s32 32, %v515
  %v517 = vshll.u32 %v508, %v515
  %v518 = vshrl.u32 %v500, %v516
  %v519 = vor.u32 %v517, %v518
  %v520 = vsub.s32 4294967266, %v515
  %v521 = vadd.s32 %v520, 127
  %v522 = vshll.u32 %v521, 23
  %v523 = vor.u32 4788187, %v522
  %v524 = vand.u32 2147483647, %v523
  %v526 = vcvt.s32.f32 %v519
  %v527 = vmul.f32 %v526, %v524
  %v528 = vxor.u32 %v527, 2147483648
  %v529 = vsel %vm446, %v528, %v527
  %v530 = vsub.s32 4, %v506
  %v531 = vsel %vm446, %v530, %v506
  %v532 = vsel %vm445, %v129, %v529
  %v533 = vsel %vm445, 0, %v531
  %v534 = vcosq.f32.pop %v532
  %v535 = vsinq.f32.pop %v532
  %vm536 = vweird.f32 %v129
  %v537 = vadd.s32 %v533, 3
  %v538 = vand.u32 %v537, 3
  %vm539 = vcmp.lt.s32.totalorder %v538, 2
  %vm540 = vcmp.eq.s32.totalorder %v538, 0
  %v541 = vxor.u32 %v535, 2147483648
  %v542 = vsel %vm540, %v534, %v541
  %vm543 = vcmp.eq.s32.totalorder %v538, 2
  %v544 = vxor.u32 %v534, 2147483648
  %v545 = vsel %vm543, %v544, %v535
  %v546 = vsel %vm539, %v542, %v545
  %v547 = vsel %vm536, nan, %v546
  %548 = vst [vmem:[%s3] sm:$0xff] %v235
  %549 = vst [vmem:[%s3 + $0x8] sm:$0xff] %v339
  %550 = vst [vmem:[%s3 + $0x10] sm:$0xff] %v443
  %551 = vst [vmem:[%s3 + $0x18] sm:$0xff] %v547
  // Predicated region
  $region14: #{_lambda_.21} parent=0 // pred_check
    _
  $region15: #{_lambda_.21} parent=0 // pred_check_branch
    %553 = sbr.rel (0) target = $region17
  $region16: #{_lambda_.21} parent=0 // pred_region
    _
  $region17: #{_lambda_.21} parent=0 // pred_fallthru
    _
  // Predicated region
  $region18: #{_lambda_.21} parent=0 // pred_check
    _
  $region19: #{_lambda_.21} parent=0 // pred_check_branch
    %555 = sbr.rel (0) target = $region21
  $region20: #{_lambda_.21} parent=0 // pred_region
    _
  $region21: #{_lambda_.21} parent=0 // pred_fallthru
    _

// kernel: _lambda_.19
$region0: #{_lambda_.19}
  #allocation0 [shape = 'u32[]', space=smem, size = 0x4, offset = 0x4, fixed_abs, tag = 'smem constant byte address 0x4 - core index']
  #allocation1 [shape = 'u32[144,128]{1,0:T(1,128)}', space=vmem, size = 0x12000, scoped, tag = 'internal scratch']
  %s0 = inlined_call_operand.vmem [shape: bf16[32,8], index: 0, kind: input, shape index: {}]
  %s1 = inlined_call_operand.vmem [shape: bf16[8,128], index: 1, kind: input, shape index: {}]
  %s2 = inlined_call_operand.vmem [shape: f32[1,128], index: 2, kind: input, shape index: {}]
  %s3 = inlined_call_operand.vmem [shape: f32[32,128], index: 3, kind: output, shape index: {}]
  %s4 = sld [smem:[#allocation0]]
  $region22: #{_lambda_.19} parent=0
    _
  %s6 = ssub.s32 1, %s4
  %s7 = scalar_select 0, %s6, %s4
  // Predicated region
  $region2: #{_lambda_.19} parent=0 // pred_check
    _
  $region3: #{_lambda_.19} parent=0 // pred_check_branch
    %9 = sbr.rel (0) target = $region5
  $region4: #{_lambda_.19} parent=0 // pred_region
    _
  $region5: #{_lambda_.19} parent=0 // pred_fallthru
    _
  // Predicated region
  $region6: #{_lambda_.19} parent=0 // pred_check
    _
  $region7: #{_lambda_.19} parent=0 // pred_check_branch
    %11 = sbr.rel (0) target = $region9
  $region8: #{_lambda_.19} parent=0 // pred_region
    _
  $region9: #{_lambda_.19} parent=0 // pred_fallthru
    _
  // Predicated region
  $region10: #{_lambda_.19} parent=0 // pred_check
    _
  $region11: #{_lambda_.19} parent=0 // pred_check_branch
    %13 = sbr.rel (0) target = $region13
  $region12: #{_lambda_.19} parent=0 // pred_region
    _
  $region13: #{_lambda_.19} parent=0 // pred_fallthru
    _
  %v15 = vld [vmem:[%s0] sm:$0xf]
  %v16 = vld [vmem:[%s0 + $0x4] sm:$0xf]
  %v17 = vld [vmem:[%s0 + $0x8] sm:$0xf]
  %v18 = vld [vmem:[%s0 + $0xc] sm:$0xf]
  %v19 = vld [vmem:[%s1] sm:$0xf]
  %v20 = vld [vmem:[%s2] sm:$0x1]
  %v22 = vlaneseq
  %v23 = vshrl.u32 %v22, 7
  %v24 = vsub.s32 0, %v23
  %v25 = vrot.slane %v20, %v24
  %v31 = vunpack.c.l.b16 %v15
  %v32 = vunpack.c.l.b16 %v16
  %v33 = vunpack.c.l.b16 %v17
  %v34 = vunpack.c.l.b16 %v18
  %v35 = vpack.c.b16 %v32, %v31
  %v36 = vpack.c.b16 %v34, %v33
  %vm37 = vcmask 64512
  %v39 = vsel %vm37, %v35, 0
  %v42 = vsel %vm37, %v36, 0
  %vm44 = vcmask 1043456
  %v46 = vsel %vm44, %v19, 0
  %48 = vmatprep.subr.bf16.mxu0 0
  %49 = vmatpush1.bf16.msra.mxu0 0
  %50 = vmatprep.subr.bf16.mxu0 0
  %51 = vmatpush1.bf16.msra.mxu0 0
  %52 = vmatprep.subr.bf16.mxu0 0
  %53 = vmatpush1.bf16.msra.mxu0 0
  %54 = vmatprep.subr.bf16.mxu0 0
  %55 = vmatpush1.bf16.msra.mxu0 0
  %56 = vmatprep.subr.bf16.mxu0 0
  %57 = vmatpush1.bf16.msra.mxu0 0
  %58 = vmatprep.subr.bf16.mxu0 0
  %59 = vmatpush1.bf16.msra.mxu0 0
  %60 = vmatprep.subr.bf16.mxu0 0
  %61 = vmatpush1.bf16.msra.mxu0 0
  %62 = vmatprep.subr.bf16.mxu0 0
  %63 = vmatpush1.bf16.msra.mxu0 %v46
  %64 = vmatprep.subr.bf16.mxu0 0
  %65 = vmatpush2.bf16.msra.mxu0 0
  %66 = vmatprep.subr.bf16.mxu0 0
  %67 = vmatpush2.bf16.msra.mxu0 0
  %68 = vmatprep.subr.bf16.mxu0 0
  %69 = vmatpush2.bf16.msra.mxu0 0
  %70 = vmatprep.subr.bf16.mxu0 0
  %71 = vmatpush2.bf16.msra.mxu0 0
  %72 = vmatprep.subr.bf16.mxu0 0
  %73 = vmatpush2.bf16.msra.mxu0 0
  %74 = vmatprep.subr.bf16.mxu0 0
  %75 = vmatpush2.bf16.msra.mxu0 0
  %76 = vmatprep.subr.bf16.mxu0 0
  %77 = vmatpush2.bf16.msra.mxu0 0
  %78 = vmatprep.subr.bf16.mxu0 0
  %79 = vmatpush2.bf16.msra.mxu0 0
  %80 = vmatprep.mubr.bf16.mxu0 0
  %81 = vmatmul.mubr.bf16.gmra.mxu0 %v39
  %v82 = vpop.f32.mrf.mxu0
  %v83 = vadd.f32 %v25, %v82
  %v84 = vpop.f32.mrf.mxu0
  %v85 = vpop.f32.mrf.mxu0
  %v86 = vadd.f32 %v25, %v85
  %v87 = vpop.f32.mrf.mxu0
  %88 = vmatprep.mubr.bf16.mxu0 0
  %89 = vmatmul.mubr.bf16.gmra.mxu0 %v42
  %v90 = vpop.f32.mrf.mxu0
  %v91 = vadd.f32 %v25, %v90
  %v92 = vpop.f32.mrf.mxu0
  %v93 = vpop.f32.mrf.mxu0
  %v94 = vadd.f32 %v25, %v93
  %v95 = vpop.f32.mrf.mxu0
  %96 = vdwg.mxu0
  %97 = vst [vmem:[%s3] sm:$0xff] %v83
  %98 = vst [vmem:[%s3 + $0x8] sm:$0xff] %v86
  %99 = vst [vmem:[%s3 + $0x10] sm:$0xff] %v91
  %100 = vst [vmem:[%s3 + $0x18] sm:$0xff] %v94
  // Predicated region
  $region14: #{_lambda_.19} parent=0 // pred_check
    _
  $region15: #{_lambda_.19} parent=0 // pred_check_branch
    %102 = sbr.rel (0) target = $region17
  $region16: #{_lambda_.19} parent=0 // pred_region
    _
  $region17: #{_lambda_.19} parent=0 // pred_fallthru
    _
  // Predicated region
  $region18: #{_lambda_.19} parent=0 // pred_check
    _
  $region19: #{_lambda_.19} parent=0 // pred_check_branch
    %104 = sbr.rel (0) target = $region21
  $region20: #{_lambda_.19} parent=0 // pred_region
    _
  $region21: #{_lambda_.19} parent=0 // pred_fallthru
    _

// kernel: _lambda_.23
$region0: #{_lambda_.23}
  #allocation0 [shape = 'u32[]', space=smem, size = 0x4, offset = 0x4, fixed_abs, tag = 'smem constant byte address 0x4 - core index']
  #allocation1 [shape = 'u32[144,128]{1,0:T(1,128)}', space=vmem, size = 0x12000, scoped, tag = 'internal scratch']
  %s0 = inlined_call_operand.vmem [shape: bf16[32,32], index: 0, kind: input, shape index: {}]
  %s1 = inlined_call_operand.vmem [shape: bf16[32,128], index: 1, kind: input, shape index: {}]
  %s2 = inlined_call_operand.vmem [shape: f32[1,128], index: 2, kind: input, shape index: {}]
  %s3 = inlined_call_operand.vmem [shape: f32[32,128], index: 3, kind: output, shape index: {}]
  %s4 = sld [smem:[#allocation0]]
  $region22: #{_lambda_.23} parent=0
    _
  %s6 = ssub.s32 1, %s4
  %s7 = scalar_select 0, %s6, %s4
  // Predicated region
  $region2: #{_lambda_.23} parent=0 // pred_check
    _
  $region3: #{_lambda_.23} parent=0 // pred_check_branch
    %9 = sbr.rel (0) target = $region5
  $region4: #{_lambda_.23} parent=0 // pred_region
    _
  $region5: #{_lambda_.23} parent=0 // pred_fallthru
    _
  // Predicated region
  $region6: #{_lambda_.23} parent=0 // pred_check
    _
  $region7: #{_lambda_.23} parent=0 // pred_check_branch
    %11 = sbr.rel (0) target = $region9
  $region8: #{_lambda_.23} parent=0 // pred_region
    _
  $region9: #{_lambda_.23} parent=0 // pred_fallthru
    _
  // Predicated region
  $region10: #{_lambda_.23} parent=0 // pred_check
    _
  $region11: #{_lambda_.23} parent=0 // pred_check_branch
    %13 = sbr.rel (0) target = $region13
  $region12: #{_lambda_.23} parent=0 // pred_region
    _
  $region13: #{_lambda_.23} parent=0 // pred_fallthru
    _
  %v15 = vld [vmem:[%s0] sm:$0xf]
  %v16 = vld [vmem:[%s0 + $0x4] sm:$0xf]
  %v17 = vld [vmem:[%s0 + $0x8] sm:$0xf]
  %v18 = vld [vmem:[%s0 + $0xc] sm:$0xf]
  %v19 = vld [vmem:[%s1] sm:$0xf]
  %v20 = vld [vmem:[%s1 + $0x4] sm:$0xf]
  %v21 = vld [vmem:[%s1 + $0x8] sm:$0xf]
  %v22 = vld [vmem:[%s1 + $0xc] sm:$0xf]
  %v23 = vld [vmem:[%s2] sm:$0x1]
  %v25 = vlaneseq
  %v26 = vshrl.u32 %v25, 7
  %v27 = vsub.s32 0, %v26
  %v28 = vrot.slane %v23, %v27
  %v34 = vunpack.c.l.b16 %v15
  %v35 = vunpack.c.l.b16 %v16
  %v36 = vunpack.c.l.b16 %v17
  %v37 = vunpack.c.l.b16 %v18
  %v38 = vpack.c.b16 %v35, %v34
  %v39 = vpack.c.b16 %v37, %v36
  %v44 = vunpack.c.l.b16 %v19
  %v45 = vunpack.c.l.b16 %v20
  %v46 = vunpack.c.l.b16 %v21
  %v47 = vunpack.c.l.b16 %v22
  %v48 = vpack.c.b16 %v45, %v44
  %v49 = vpack.c.b16 %v47, %v46
  %vm52 = vcmask 261120
  %v54 = vsel %vm52, %v38, 0
  %v57 = vsel %vm52, %v39, 0
  %59 = vmatprep.subr.bf16.mxu0 0
  %60 = vmatpush1.bf16.msra.mxu0 0
  %61 = vmatprep.subr.bf16.mxu0 0
  %62 = vmatpush1.bf16.msra.mxu0 0
  %63 = vmatprep.subr.bf16.mxu0 0
  %64 = vmatpush1.bf16.msra.mxu0 0
  %65 = vmatprep.subr.bf16.mxu0 0
  %66 = vmatpush1.bf16.msra.mxu0 0
  %67 = vmatprep.subr.bf16.mxu0 0
  %68 = vmatpush1.bf16.msra.mxu0 0
  %69 = vmatprep.subr.bf16.mxu0 0
  %70 = vmatpush1.bf16.msra.mxu0 0
  %71 = vmatprep.subr.bf16.mxu0 0
  %72 = vmatpush1.bf16.msra.mxu0 %v49
  %73 = vmatprep.subr.bf16.mxu0 0
  %74 = vmatpush1.bf16.msra.mxu0 %v48
  %75 = vmatprep.subr.bf16.mxu0 0
  %76 = vmatpush2.bf16.msra.mxu0 0
  %77 = vmatprep.subr.bf16.mxu0 0
  %78 = vmatpush2.bf16.msra.mxu0 0
  %79 = vmatprep.subr.bf16.mxu0 0
  %80 = vmatpush2.bf16.msra.mxu0 0
  %81 = vmatprep.subr.bf16.mxu0 0
  %82 = vmatpush2.bf16.msra.mxu0 0
  %83 = vmatprep.subr.bf16.mxu0 0
  %84 = vmatpush2.bf16.msra.mxu0 0
  %85 = vmatprep.subr.bf16.mxu0 0
  %86 = vmatpush2.bf16.msra.mxu0 0
  %87 = vmatprep.subr.bf16.mxu0 0
  %88 = vmatpush2.bf16.msra.mxu0 0
  %89 = vmatprep.subr.bf16.mxu0 0
  %90 = vmatpush2.bf16.msra.mxu0 0
  %91 = vmatprep.mubr.bf16.mxu0 0
  %92 = vmatmul.mubr.bf16.gmra.mxu0 %v54
  %v93 = vpop.f32.mrf.mxu0
  %v94 = vadd.f32 %v28, %v93
  %v95 = vpop.f32.mrf.mxu0
  %v96 = vpop.f32.mrf.mxu0
  %v97 = vadd.f32 %v28, %v96
  %v98 = vpop.f32.mrf.mxu0
  %99 = vmatprep.mubr.bf16.mxu0 0
  %100 = vmatmul.mubr.bf16.gmra.mxu0 %v57
  %v101 = vpop.f32.mrf.mxu0
  %v102 = vadd.f32 %v28, %v101
  %v103 = vpop.f32.mrf.mxu0
  %v104 = vpop.f32.mrf.mxu0
  %v105 = vadd.f32 %v28, %v104
  %v106 = vpop.f32.mrf.mxu0
  %107 = vdwg.mxu0
  %v108 = vand.u32 2147483647, %v94
  %vm109 = vcmp.le.f32.partialorder %v108, 0.7853982
  %vm110 = vcmp.lt.s32.totalorder %v94, 0
  %v111 = vand.u32 %v94, 2139095040
  %v112 = vshrl.u32 %v111, 23
  %v113 = vsub.s32 %v112, 127
  %v114 = vand.u32 2147483647, %v94
  %v115 = vand.u32 %v114, 8388607
  %v116 = vor.u32 %v115, 8388608
  %v117 = vsub.s32 0, %v116
  %v118 = vadd.s32 %v113, 1
  %vm119 = vcmp.gt.s32.totalorder %v118, 0
  %v120 = vsel %vm119, %v118, 0
  %v121 = vshrl.u32 %v120, 5
  %v122 = vand.u32 %v120, 31
  %v123 = vsub.s32 32, %v122
  %v124 = vshrl.u32 683565275, %v123
  %v125 = vshll.u32 683565275, %v122
  %v126 = vshrl.u32 2475754826, %v123
  %v127 = vor.u32 %v125, %v126
  %v128 = vshll.u32 2475754826, %v122
  %v129 = vshrl.u32 2131351028, %v123
  %v130 = vor.u32 %v128, %v129
  %v131 = vshll.u32 2131351028, %v122
  %v132 = vshrl.u32 2102212464, %v123
  %v133 = vor.u32 %v131, %v132
  %v134 = vshll.u32 2102212464, %v122
  %v135 = vshrl.u32 920167782, %v123
  %v136 = vor.u32 %v134, %v135
  %v137 = vshll.u32 920167782, %v122
  %v138 = vshrl.u32 1326507024, %v123
  %v139 = vor.u32 %v137, %v138
  %vm140 = vcmp.lt.s32.totalorder %v121, 1
  %vm141 = vcmp.lt.s32.totalorder %v121, 2
  %vm142 = vcmp.lt.s32.totalorder %v121, 3
  %vm143 = vcmp.lt.s32.totalorder %v121, 4
  %v144 = vsel %vm140, %v124, %v127
  %v145 = vsel %vm143, %v133, 2102212464
  %v146 = vsel %vm142, %v130, %v145
  %v147 = vsel %vm141, %v144, %v146
  %v148 = vsel %vm140, %v127, %v130
  %v149 = vsel %vm143, %v136, 920167782
  %v150 = vsel %vm142, %v133, %v149
  %v151 = vsel %vm141, %v148, %v150
  %v152 = vsel %vm140, %v130, %v133
  %v153 = vsel %vm143, %v139, 1326507024
  %v154 = vsel %vm142, %v136, %v153
  %v155 = vsel %vm141, %v152, %v154
  %v156 = vshll.u32 %v116, 8
  %v157 = vmul.u32.u64.compose %v156, %v155
  %v158 = vextract.low.u32 %v157
  %v159 = vextract.high.u32 %v157
  %v160 = vmul.u32.u64.compose %v156, %v151
  %v161 = vextract.low.u32 %v160
  %v162 = vextract.high.u32 %v160
  %v163 = vmul.u32 %v156, %v147
  %v164 = vadd.s32 %v159, %v161
  %vm165 = vc.u32 %v159, %v161
  %v166 = vadd.s32 %v162, 1
  %v167 = vsel %vm165, %v166, %v162
  %v168 = vadd.s32 %v163, %v167
  %v169 = vadd.s32 %v168, 536870912
  %v170 = vshrl.u32 %v169, 30
  %v171 = vshll.u32 %v170, 30
  %v172 = vsub.s32 %v168, %v171
  %vm173 = vcmp.lt.s32.totalorder %v172, 0
  %v174 = vsub.s32 0, %v172
  %v175 = vsel %vm173, %v174, %v172
  %v176 = vclz %v175
  %v177 = vsub.s32 %v176, 2
  %vm178 = vcmp.gt.s32.totalorder 0, %v177
  %v179 = vsel %vm178, 0, %v177
  %v180 = vsub.s32 32, %v179
  %v181 = vshll.u32 %v172, %v179
  %v182 = vshrl.u32 %v164, %v180
  %v183 = vor.u32 %v181, %v182
  %v184 = vsub.s32 4294967266, %v179
  %v185 = vadd.s32 %v184, 127
  %v186 = vshll.u32 %v185, 23
  %v187 = vor.u32 4788187, %v186
  %v188 = vand.u32 2147483647, %v187
  %v190 = vcvt.s32.f32 %v183
  %v191 = vmul.f32 %v190, %v188
  %v192 = vxor.u32 %v191, 2147483648
  %v193 = vsel %vm110, %v192, %v191
  %v194 = vsub.s32 4, %v170
  %v195 = vsel %vm110, %v194, %v170
  %v196 = vsel %vm109, %v94, %v193
  %v197 = vsel %vm109, 0, %v195
  %v198 = vcosq.f32.pop %v196
  %v199 = vsinq.f32.pop %v196
  %vm200 = vweird.f32 %v94
  %v201 = vadd.s32 %v197, 3
  %v202 = vand.u32 %v201, 3
  %vm203 = vcmp.lt.s32.totalorder %v202, 2
  %vm204 = vcmp.eq.s32.totalorder %v202, 0
  %v205 = vxor.u32 %v199, 2147483648
  %v206 = vsel %vm204, %v198, %v205
  %vm207 = vcmp.eq.s32.totalorder %v202, 2
  %v208 = vxor.u32 %v198, 2147483648
  %v209 = vsel %vm207, %v208, %v199
  %v210 = vsel %vm203, %v206, %v209
  %v211 = vsel %vm200, nan, %v210
  %v212 = vand.u32 2147483647, %v97
  %vm213 = vcmp.le.f32.partialorder %v212, 0.7853982
  %vm214 = vcmp.lt.s32.totalorder %v97, 0
  %v215 = vand.u32 %v97, 2139095040
  %v216 = vshrl.u32 %v215, 23
  %v217 = vsub.s32 %v216, 127
  %v218 = vand.u32 2147483647, %v97
  %v219 = vand.u32 %v218, 8388607
  %v220 = vor.u32 %v219, 8388608
  %v221 = vsub.s32 0, %v220
  %v222 = vadd.s32 %v217, 1
  %vm223 = vcmp.gt.s32.totalorder %v222, 0
  %v224 = vsel %vm223, %v222, 0
  %v225 = vshrl.u32 %v224, 5
  %v226 = vand.u32 %v224, 31
  %v227 = vsub.s32 32, %v226
  %v228 = vshrl.u32 683565275, %v227
  %v229 = vshll.u32 683565275, %v226
  %v230 = vshrl.u32 2475754826, %v227
  %v231 = vor.u32 %v229, %v230
  %v232 = vshll.u32 2475754826, %v226
  %v233 = vshrl.u32 2131351028, %v227
  %v234 = vor.u32 %v232, %v233
  %v235 = vshll.u32 2131351028, %v226
  %v236 = vshrl.u32 2102212464, %v227
  %v237 = vor.u32 %v235, %v236
  %v238 = vshll.u32 2102212464, %v226
  %v239 = vshrl.u32 920167782, %v227
  %v240 = vor.u32 %v238, %v239
  %v241 = vshll.u32 920167782, %v226
  %v242 = vshrl.u32 1326507024, %v227
  %v243 = vor.u32 %v241, %v242
  %vm244 = vcmp.lt.s32.totalorder %v225, 1
  %vm245 = vcmp.lt.s32.totalorder %v225, 2
  %vm246 = vcmp.lt.s32.totalorder %v225, 3
  %vm247 = vcmp.lt.s32.totalorder %v225, 4
  %v248 = vsel %vm244, %v228, %v231
  %v249 = vsel %vm247, %v237, 2102212464
  %v250 = vsel %vm246, %v234, %v249
  %v251 = vsel %vm245, %v248, %v250
  %v252 = vsel %vm244, %v231, %v234
  %v253 = vsel %vm247, %v240, 920167782
  %v254 = vsel %vm246, %v237, %v253
  %v255 = vsel %vm245, %v252, %v254
  %v256 = vsel %vm244, %v234, %v237
  %v257 = vsel %vm247, %v243, 1326507024
  %v258 = vsel %vm246, %v240, %v257
  %v259 = vsel %vm245, %v256, %v258
  %v260 = vshll.u32 %v220, 8
  %v261 = vmul.u32.u64.compose %v260, %v259
  %v262 = vextract.low.u32 %v261
  %v263 = vextract.high.u32 %v261
  %v264 = vmul.u32.u64.compose %v260, %v255
  %v265 = vextract.low.u32 %v264
  %v266 = vextract.high.u32 %v264
  %v267 = vmul.u32 %v260, %v251
  %v268 = vadd.s32 %v263, %v265
  %vm269 = vc.u32 %v263, %v265
  %v270 = vadd.s32 %v266, 1
  %v271 = vsel %vm269, %v270, %v266
  %v272 = vadd.s32 %v267, %v271
  %v273 = vadd.s32 %v272, 536870912
  %v274 = vshrl.u32 %v273, 30
  %v275 = vshll.u32 %v274, 30
  %v276 = vsub.s32 %v272, %v275
  %vm277 = vcmp.lt.s32.totalorder %v276, 0
  %v278 = vsub.s32 0, %v276
  %v279 = vsel %vm277, %v278, %v276
  %v280 = vclz %v279
  %v281 = vsub.s32 %v280, 2
  %vm282 = vcmp.gt.s32.totalorder 0, %v281
  %v283 = vsel %vm282, 0, %v281
  %v284 = vsub.s32 32, %v283
  %v285 = vshll.u32 %v276, %v283
  %v286 = vshrl.u32 %v268, %v284
  %v287 = vor.u32 %v285, %v286
  %v288 = vsub.s32 4294967266, %v283
  %v289 = vadd.s32 %v288, 127
  %v290 = vshll.u32 %v289, 23
  %v291 = vor.u32 4788187, %v290
  %v292 = vand.u32 2147483647, %v291
  %v294 = vcvt.s32.f32 %v287
  %v295 = vmul.f32 %v294, %v292
  %v296 = vxor.u32 %v295, 2147483648
  %v297 = vsel %vm214, %v296, %v295
  %v298 = vsub.s32 4, %v274
  %v299 = vsel %vm214, %v298, %v274
  %v300 = vsel %vm213, %v97, %v297
  %v301 = vsel %vm213, 0, %v299
  %v302 = vcosq.f32.pop %v300
  %v303 = vsinq.f32.pop %v300
  %vm304 = vweird.f32 %v97
  %v305 = vadd.s32 %v301, 3
  %v306 = vand.u32 %v305, 3
  %vm307 = vcmp.lt.s32.totalorder %v306, 2
  %vm308 = vcmp.eq.s32.totalorder %v306, 0
  %v309 = vxor.u32 %v303, 2147483648
  %v310 = vsel %vm308, %v302, %v309
  %vm311 = vcmp.eq.s32.totalorder %v306, 2
  %v312 = vxor.u32 %v302, 2147483648
  %v313 = vsel %vm311, %v312, %v303
  %v314 = vsel %vm307, %v310, %v313
  %v315 = vsel %vm304, nan, %v314
  %v316 = vand.u32 2147483647, %v102
  %vm317 = vcmp.le.f32.partialorder %v316, 0.7853982
  %vm318 = vcmp.lt.s32.totalorder %v102, 0
  %v319 = vand.u32 %v102, 2139095040
  %v320 = vshrl.u32 %v319, 23
  %v321 = vsub.s32 %v320, 127
  %v322 = vand.u32 2147483647, %v102
  %v323 = vand.u32 %v322, 8388607
  %v324 = vor.u32 %v323, 8388608
  %v325 = vsub.s32 0, %v324
  %v326 = vadd.s32 %v321, 1
  %vm327 = vcmp.gt.s32.totalorder %v326, 0
  %v328 = vsel %vm327, %v326, 0
  %v329 = vshrl.u32 %v328, 5
  %v330 = vand.u32 %v328, 31
  %v331 = vsub.s32 32, %v330
  %v332 = vshrl.u32 683565275, %v331
  %v333 = vshll.u32 683565275, %v330
  %v334 = vshrl.u32 2475754826, %v331
  %v335 = vor.u32 %v333, %v334
  %v336 = vshll.u32 2475754826, %v330
  %v337 = vshrl.u32 2131351028, %v331
  %v338 = vor.u32 %v336, %v337
  %v339 = vshll.u32 2131351028, %v330
  %v340 = vshrl.u32 2102212464, %v331
  %v341 = vor.u32 %v339, %v340
  %v342 = vshll.u32 2102212464, %v330
  %v343 = vshrl.u32 920167782, %v331
  %v344 = vor.u32 %v342, %v343
  %v345 = vshll.u32 920167782, %v330
  %v346 = vshrl.u32 1326507024, %v331
  %v347 = vor.u32 %v345, %v346
  %vm348 = vcmp.lt.s32.totalorder %v329, 1
  %vm349 = vcmp.lt.s32.totalorder %v329, 2
  %vm350 = vcmp.lt.s32.totalorder %v329, 3
  %vm351 = vcmp.lt.s32.totalorder %v329, 4
  %v352 = vsel %vm348, %v332, %v335
  %v353 = vsel %vm351, %v341, 2102212464
  %v354 = vsel %vm350, %v338, %v353
  %v355 = vsel %vm349, %v352, %v354
  %v356 = vsel %vm348, %v335, %v338
  %v357 = vsel %vm351, %v344, 920167782
  %v358 = vsel %vm350, %v341, %v357
  %v359 = vsel %vm349, %v356, %v358
  %v360 = vsel %vm348, %v338, %v341
  %v361 = vsel %vm351, %v347, 1326507024
  %v362 = vsel %vm350, %v344, %v361
  %v363 = vsel %vm349, %v360, %v362
  %v364 = vshll.u32 %v324, 8
  %v365 = vmul.u32.u64.compose %v364, %v363
  %v366 = vextract.low.u32 %v365
  %v367 = vextract.high.u32 %v365
  %v368 = vmul.u32.u64.compose %v364, %v359
  %v369 = vextract.low.u32 %v368
  %v370 = vextract.high.u32 %v368
  %v371 = vmul.u32 %v364, %v355
  %v372 = vadd.s32 %v367, %v369
  %vm373 = vc.u32 %v367, %v369
  %v374 = vadd.s32 %v370, 1
  %v375 = vsel %vm373, %v374, %v370
  %v376 = vadd.s32 %v371, %v375
  %v377 = vadd.s32 %v376, 536870912
  %v378 = vshrl.u32 %v377, 30
  %v379 = vshll.u32 %v378, 30
  %v380 = vsub.s32 %v376, %v379
  %vm381 = vcmp.lt.s32.totalorder %v380, 0
  %v382 = vsub.s32 0, %v380
  %v383 = vsel %vm381, %v382, %v380
  %v384 = vclz %v383
  %v385 = vsub.s32 %v384, 2
  %vm386 = vcmp.gt.s32.totalorder 0, %v385
  %v387 = vsel %vm386, 0, %v385
  %v388 = vsub.s32 32, %v387
  %v389 = vshll.u32 %v380, %v387
  %v390 = vshrl.u32 %v372, %v388
  %v391 = vor.u32 %v389, %v390
  %v392 = vsub.s32 4294967266, %v387
  %v393 = vadd.s32 %v392, 127
  %v394 = vshll.u32 %v393, 23
  %v395 = vor.u32 4788187, %v394
  %v396 = vand.u32 2147483647, %v395
  %v398 = vcvt.s32.f32 %v391
  %v399 = vmul.f32 %v398, %v396
  %v400 = vxor.u32 %v399, 2147483648
  %v401 = vsel %vm318, %v400, %v399
  %v402 = vsub.s32 4, %v378
  %v403 = vsel %vm318, %v402, %v378
  %v404 = vsel %vm317, %v102, %v401
  %v405 = vsel %vm317, 0, %v403
  %v406 = vcosq.f32.pop %v404
  %v407 = vsinq.f32.pop %v404
  %vm408 = vweird.f32 %v102
  %v409 = vadd.s32 %v405, 3
  %v410 = vand.u32 %v409, 3
  %vm411 = vcmp.lt.s32.totalorder %v410, 2
  %vm412 = vcmp.eq.s32.totalorder %v410, 0
  %v413 = vxor.u32 %v407, 2147483648
  %v414 = vsel %vm412, %v406, %v413
  %vm415 = vcmp.eq.s32.totalorder %v410, 2
  %v416 = vxor.u32 %v406, 2147483648
  %v417 = vsel %vm415, %v416, %v407
  %v418 = vsel %vm411, %v414, %v417
  %v419 = vsel %vm408, nan, %v418
  %v420 = vand.u32 2147483647, %v105
  %vm421 = vcmp.le.f32.partialorder %v420, 0.7853982
  %vm422 = vcmp.lt.s32.totalorder %v105, 0
  %v423 = vand.u32 %v105, 2139095040
  %v424 = vshrl.u32 %v423, 23
  %v425 = vsub.s32 %v424, 127
  %v426 = vand.u32 2147483647, %v105
  %v427 = vand.u32 %v426, 8388607
  %v428 = vor.u32 %v427, 8388608
  %v429 = vsub.s32 0, %v428
  %v430 = vadd.s32 %v425, 1
  %vm431 = vcmp.gt.s32.totalorder %v430, 0
  %v432 = vsel %vm431, %v430, 0
  %v433 = vshrl.u32 %v432, 5
  %v434 = vand.u32 %v432, 31
  %v435 = vsub.s32 32, %v434
  %v436 = vshrl.u32 683565275, %v435
  %v437 = vshll.u32 683565275, %v434
  %v438 = vshrl.u32 2475754826, %v435
  %v439 = vor.u32 %v437, %v438
  %v440 = vshll.u32 2475754826, %v434
  %v441 = vshrl.u32 2131351028, %v435
  %v442 = vor.u32 %v440, %v441
  %v443 = vshll.u32 2131351028, %v434
  %v444 = vshrl.u32 2102212464, %v435
  %v445 = vor.u32 %v443, %v444
  %v446 = vshll.u32 2102212464, %v434
  %v447 = vshrl.u32 920167782, %v435
  %v448 = vor.u32 %v446, %v447
  %v449 = vshll.u32 920167782, %v434
  %v450 = vshrl.u32 1326507024, %v435
  %v451 = vor.u32 %v449, %v450
  %vm452 = vcmp.lt.s32.totalorder %v433, 1
  %vm453 = vcmp.lt.s32.totalorder %v433, 2
  %vm454 = vcmp.lt.s32.totalorder %v433, 3
  %vm455 = vcmp.lt.s32.totalorder %v433, 4
  %v456 = vsel %vm452, %v436, %v439
  %v457 = vsel %vm455, %v445, 2102212464
  %v458 = vsel %vm454, %v442, %v457
  %v459 = vsel %vm453, %v456, %v458
  %v460 = vsel %vm452, %v439, %v442
  %v461 = vsel %vm455, %v448, 920167782
  %v462 = vsel %vm454, %v445, %v461
  %v463 = vsel %vm453, %v460, %v462
  %v464 = vsel %vm452, %v442, %v445
  %v465 = vsel %vm455, %v451, 1326507024
  %v466 = vsel %vm454, %v448, %v465
  %v467 = vsel %vm453, %v464, %v466
  %v468 = vshll.u32 %v428, 8
  %v469 = vmul.u32.u64.compose %v468, %v467
  %v470 = vextract.low.u32 %v469
  %v471 = vextract.high.u32 %v469
  %v472 = vmul.u32.u64.compose %v468, %v463
  %v473 = vextract.low.u32 %v472
  %v474 = vextract.high.u32 %v472
  %v475 = vmul.u32 %v468, %v459
  %v476 = vadd.s32 %v471, %v473
  %vm477 = vc.u32 %v471, %v473
  %v478 = vadd.s32 %v474, 1
  %v479 = vsel %vm477, %v478, %v474
  %v480 = vadd.s32 %v475, %v479
  %v481 = vadd.s32 %v480, 536870912
  %v482 = vshrl.u32 %v481, 30
  %v483 = vshll.u32 %v482, 30
  %v484 = vsub.s32 %v480, %v483
  %vm485 = vcmp.lt.s32.totalorder %v484, 0
  %v486 = vsub.s32 0, %v484
  %v487 = vsel %vm485, %v486, %v484
  %v488 = vclz %v487
  %v489 = vsub.s32 %v488, 2
  %vm490 = vcmp.gt.s32.totalorder 0, %v489
  %v491 = vsel %vm490, 0, %v489
  %v492 = vsub.s32 32, %v491
  %v493 = vshll.u32 %v484, %v491
  %v494 = vshrl.u32 %v476, %v492
  %v495 = vor.u32 %v493, %v494
  %v496 = vsub.s32 4294967266, %v491
  %v497 = vadd.s32 %v496, 127
  %v498 = vshll.u32 %v497, 23
  %v499 = vor.u32 4788187, %v498
  %v500 = vand.u32 2147483647, %v499
  %v502 = vcvt.s32.f32 %v495
  %v503 = vmul.f32 %v502, %v500
  %v504 = vxor.u32 %v503, 2147483648
  %v505 = vsel %vm422, %v504, %v503
  %v506 = vsub.s32 4, %v482
  %v507 = vsel %vm422, %v506, %v482
  %v508 = vsel %vm421, %v105, %v505
  %v509 = vsel %vm421, 0, %v507
  %v510 = vcosq.f32.pop %v508
  %v511 = vsinq.f32.pop %v508
  %vm512 = vweird.f32 %v105
  %v513 = vadd.s32 %v509, 3
  %v514 = vand.u32 %v513, 3
  %vm515 = vcmp.lt.s32.totalorder %v514, 2
  %vm516 = vcmp.eq.s32.totalorder %v514, 0
  %v517 = vxor.u32 %v511, 2147483648
  %v518 = vsel %vm516, %v510, %v517
  %vm519 = vcmp.eq.s32.totalorder %v514, 2
  %v520 = vxor.u32 %v510, 2147483648
  %v521 = vsel %vm519, %v520, %v511
  %v522 = vsel %vm515, %v518, %v521
  %v523 = vsel %vm512, nan, %v522
  %524 = vst [vmem:[%s3] sm:$0xff] %v211
  %525 = vst [vmem:[%s3 + $0x8] sm:$0xff] %v315
  %526 = vst [vmem:[%s3 + $0x10] sm:$0xff] %v419
  %527 = vst [vmem:[%s3 + $0x18] sm:$0xff] %v523
  // Predicated region
  $region14: #{_lambda_.23} parent=0 // pred_check
    _
  $region15: #{_lambda_.23} parent=0 // pred_check_branch
    %529 = sbr.rel (0) target = $region17
  $region16: #{_lambda_.23} parent=0 // pred_region
    _
  $region17: #{_lambda_.23} parent=0 // pred_fallthru
    _
  // Predicated region
  $region18: #{_lambda_.23} parent=0 // pred_check
    _
  $region19: #{_lambda_.23} parent=0 // pred_check_branch
    %531 = sbr.rel (0) target = $region21
  $region20: #{_lambda_.23} parent=0 // pred_region
    _
  $region21: #{_lambda_.23} parent=0 // pred_fallthru
    _

// kernel: _lambda_.22
$region0: #{_lambda_.22}
  #allocation0 [shape = 'u32[]', space=smem, size = 0x4, offset = 0x4, fixed_abs, tag = 'smem constant byte address 0x4 - core index']
  #allocation1 [shape = 'u32[144,128]{1,0:T(1,128)}', space=vmem, size = 0x12000, scoped, tag = 'internal scratch']
  %s0 = inlined_call_operand.vmem [shape: bf16[32,8], index: 0, kind: input, shape index: {}]
  %s1 = inlined_call_operand.vmem [shape: bf16[8,128], index: 1, kind: input, shape index: {}]
  %s2 = inlined_call_operand.vmem [shape: f32[1,128], index: 2, kind: input, shape index: {}]
  %s3 = inlined_call_operand.vmem [shape: f32[32,128], index: 3, kind: input, shape index: {}]
  %s4 = inlined_call_operand.vmem [shape: f32[32,128], index: 4, kind: output, shape index: {}]
  %s5 = sld [smem:[#allocation0]]
  $region26: #{_lambda_.22} parent=0
    _
  %s7 = ssub.s32 1, %s5
  %s8 = scalar_select 0, %s7, %s5
  // Predicated region
  $region2: #{_lambda_.22} parent=0 // pred_check
    _
  $region3: #{_lambda_.22} parent=0 // pred_check_branch
    %10 = sbr.rel (0) target = $region5
  $region4: #{_lambda_.22} parent=0 // pred_region
    _
  $region5: #{_lambda_.22} parent=0 // pred_fallthru
    _
  // Predicated region
  $region6: #{_lambda_.22} parent=0 // pred_check
    _
  $region7: #{_lambda_.22} parent=0 // pred_check_branch
    %12 = sbr.rel (0) target = $region9
  $region8: #{_lambda_.22} parent=0 // pred_region
    _
  $region9: #{_lambda_.22} parent=0 // pred_fallthru
    _
  // Predicated region
  $region10: #{_lambda_.22} parent=0 // pred_check
    _
  $region11: #{_lambda_.22} parent=0 // pred_check_branch
    %14 = sbr.rel (0) target = $region13
  $region12: #{_lambda_.22} parent=0 // pred_region
    _
  $region13: #{_lambda_.22} parent=0 // pred_fallthru
    _
  // Predicated region
  $region14: #{_lambda_.22} parent=0 // pred_check
    _
  $region15: #{_lambda_.22} parent=0 // pred_check_branch
    %16 = sbr.rel (0) target = $region17
  $region16: #{_lambda_.22} parent=0 // pred_region
    _
  $region17: #{_lambda_.22} parent=0 // pred_fallthru
    _
  %v18 = vld [vmem:[%s0] sm:$0xf]
  %v19 = vld [vmem:[%s0 + $0x4] sm:$0xf]
  %v20 = vld [vmem:[%s0 + $0x8] sm:$0xf]
  %v21 = vld [vmem:[%s0 + $0xc] sm:$0xf]
  %v22 = vld [vmem:[%s1] sm:$0xf]
  %v23 = vld [vmem:[%s2] sm:$0x1]
  %v25 = vlaneseq
  %v26 = vshrl.u32 %v25, 7
  %v27 = vsub.s32 0, %v26
  %v28 = vrot.slane %v23, %v27
  %v34 = vunpack.c.l.b16 %v18
  %v35 = vunpack.c.l.b16 %v19
  %v36 = vunpack.c.l.b16 %v20
  %v37 = vunpack.c.l.b16 %v21
  %v38 = vpack.c.b16 %v35, %v34
  %v39 = vpack.c.b16 %v37, %v36
  %vm40 = vcmask 64512
  %v42 = vsel %vm40, %v38, 0
  %v45 = vsel %vm40, %v39, 0
  %vm47 = vcmask 1043456
  %v49 = vsel %vm47, %v22, 0
  %51 = vmatprep.subr.bf16.mxu0 0
  %52 = vmatpush1.bf16.msra.mxu0 0
  %53 = vmatprep.subr.bf16.mxu0 0
  %54 = vmatpush1.bf16.msra.mxu0 0
  %55 = vmatprep.subr.bf16.mxu0 0
  %56 = vmatpush1.bf16.msra.mxu0 0
  %57 = vmatprep.subr.bf16.mxu0 0
  %58 = vmatpush1.bf16.msra.mxu0 0
  %59 = vmatprep.subr.bf16.mxu0 0
  %60 = vmatpush1.bf16.msra.mxu0 0
  %61 = vmatprep.subr.bf16.mxu0 0
  %62 = vmatpush1.bf16.msra.mxu0 0
  %63 = vmatprep.subr.bf16.mxu0 0
  %64 = vmatpush1.bf16.msra.mxu0 0
  %65 = vmatprep.subr.bf16.mxu0 0
  %66 = vmatpush1.bf16.msra.mxu0 %v49
  %67 = vmatprep.subr.bf16.mxu0 0
  %68 = vmatpush2.bf16.msra.mxu0 0
  %69 = vmatprep.subr.bf16.mxu0 0
  %70 = vmatpush2.bf16.msra.mxu0 0
  %71 = vmatprep.subr.bf16.mxu0 0
  %72 = vmatpush2.bf16.msra.mxu0 0
  %73 = vmatprep.subr.bf16.mxu0 0
  %74 = vmatpush2.bf16.msra.mxu0 0
  %75 = vmatprep.subr.bf16.mxu0 0
  %76 = vmatpush2.bf16.msra.mxu0 0
  %77 = vmatprep.subr.bf16.mxu0 0
  %78 = vmatpush2.bf16.msra.mxu0 0
  %79 = vmatprep.subr.bf16.mxu0 0
  %80 = vmatpush2.bf16.msra.mxu0 0
  %81 = vmatprep.subr.bf16.mxu0 0
  %82 = vmatpush2.bf16.msra.mxu0 0
  %83 = vmatprep.mubr.bf16.mxu0 0
  %84 = vmatmul.mubr.bf16.gmra.mxu0 %v42
  %v85 = vpop.f32.mrf.mxu0
  %v86 = vadd.f32 %v28, %v85
  %v87 = vpop.f32.mrf.mxu0
  %v88 = vpop.f32.mrf.mxu0
  %v89 = vadd.f32 %v28, %v88
  %v90 = vpop.f32.mrf.mxu0
  %91 = vmatprep.mubr.bf16.mxu0 0
  %92 = vmatmul.mubr.bf16.gmra.mxu0 %v45
  %v93 = vpop.f32.mrf.mxu0
  %v94 = vadd.f32 %v28, %v93
  %v95 = vpop.f32.mrf.mxu0
  %v96 = vpop.f32.mrf.mxu0
  %v97 = vadd.f32 %v28, %v96
  %v98 = vpop.f32.mrf.mxu0
  %99 = vdwg.mxu0
  %v100 = vld [vmem:[%s3] sm:$0xff]
  %v101 = vld [vmem:[%s3 + $0x8] sm:$0xff]
  %v102 = vld [vmem:[%s3 + $0x10] sm:$0xff]
  %v103 = vld [vmem:[%s3 + $0x18] sm:$0xff]
  %v104 = vadd.f32 %v86, %v100
  %v105 = vadd.f32 %v89, %v101
  %v106 = vadd.f32 %v94, %v102
  %v107 = vadd.f32 %v97, %v103
  %108 = vst [vmem:[%s4] sm:$0xff] %v104
  %109 = vst [vmem:[%s4 + $0x8] sm:$0xff] %v105
  %110 = vst [vmem:[%s4 + $0x10] sm:$0xff] %v106
  %111 = vst [vmem:[%s4 + $0x18] sm:$0xff] %v107
  // Predicated region
  $region18: #{_lambda_.22} parent=0 // pred_check
    _
  $region19: #{_lambda_.22} parent=0 // pred_check_branch
    %113 = sbr.rel (0) target = $region21
  $region20: #{_lambda_.22} parent=0 // pred_region
    _
  $region21: #{_lambda_.22} parent=0 // pred_fallthru
    _
  // Predicated region
  $region22: #{_lambda_.22} parent=0 // pred_check
    _
  $region23: #{_lambda_.22} parent=0 // pred_check_branch
    %115 = sbr.rel (0) target = $region25
  $region24: #{_lambda_.22} parent=0 // pred_region
    _
  $region25: #{_lambda_.22} parent=0 // pred_fallthru
    _

// kernel: _lambda_.28
$region0: #{_lambda_.28}
  #allocation0 [shape = 'u32[]', space=smem, size = 0x4, offset = 0x4, fixed_abs, tag = 'smem constant byte address 0x4 - core index']
  #allocation1 [shape = 'u32[144,128]{1,0:T(1,128)}', space=vmem, size = 0x12000, scoped, tag = 'internal scratch']
  %s0 = inlined_call_operand.vmem [shape: bf16[16,144], index: 0, kind: input, shape index: {}]
  %s1 = inlined_call_operand.vmem [shape: bf16[144,128], index: 1, kind: input, shape index: {}]
  %s2 = inlined_call_operand.vmem [shape: f32[1,128], index: 2, kind: input, shape index: {}]
  %s3 = inlined_call_operand.vmem [shape: f32[16,128], index: 3, kind: output, shape index: {}]
  %s4 = sld [smem:[#allocation0]]
  $region22: #{_lambda_.28} parent=0
    _
  %s6 = ssub.s32 1, %s4
  %s7 = scalar_select 0, %s6, %s4
  // Predicated region
  $region2: #{_lambda_.28} parent=0 // pred_check
    _
  $region3: #{_lambda_.28} parent=0 // pred_check_branch
    %9 = sbr.rel (0) target = $region5
  $region4: #{_lambda_.28} parent=0 // pred_region
    _
  $region5: #{_lambda_.28} parent=0 // pred_fallthru
    _
  // Predicated region
  $region6: #{_lambda_.28} parent=0 // pred_check
    _
  $region7: #{_lambda_.28} parent=0 // pred_check_branch
    %11 = sbr.rel (0) target = $region9
  $region8: #{_lambda_.28} parent=0 // pred_region
    _
  $region9: #{_lambda_.28} parent=0 // pred_fallthru
    _
  // Predicated region
  $region10: #{_lambda_.28} parent=0 // pred_check
    _
  $region11: #{_lambda_.28} parent=0 // pred_check_branch
    %13 = sbr.rel (0) target = $region13
  $region12: #{_lambda_.28} parent=0 // pred_region
    _
  $region13: #{_lambda_.28} parent=0 // pred_fallthru
    _
  %v15 = vld [vmem:[%s0] sm:$0xff]
  %v16 = vld [vmem:[%s0 + $0x8] sm:$0xff]
  %v17 = vld [vmem:[%s1] sm:$0xf]
  %v18 = vld [vmem:[%s1 + $0x4] sm:$0xf]
  %v19 = vld [vmem:[%s1 + $0x8] sm:$0xf]
  %v20 = vld [vmem:[%s1 + $0xc] sm:$0xf]
  %v21 = vld [vmem:[%s1 + $0x10] sm:$0xf]
  %v22 = vld [vmem:[%s1 + $0x14] sm:$0xf]
  %v23 = vld [vmem:[%s1 + $0x18] sm:$0xf]
  %v24 = vld [vmem:[%s1 + $0x1c] sm:$0xf]
  %v25 = vld [vmem:[%s1 + $0x20] sm:$0xf]
  %v26 = vld [vmem:[%s1 + $0x24] sm:$0xf]
  %v27 = vld [vmem:[%s1 + $0x28] sm:$0xf]
  %v28 = vld [vmem:[%s1 + $0x2c] sm:$0xf]
  %v29 = vld [vmem:[%s1 + $0x30] sm:$0xf]
  %v30 = vld [vmem:[%s1 + $0x34] sm:$0xf]
  %v31 = vld [vmem:[%s1 + $0x38] sm:$0xf]
  %v32 = vld [vmem:[%s1 + $0x3c] sm:$0xf]
  %v33 = vld [vmem:[%s1 + $0x40] sm:$0xf]
  %v34 = vld [vmem:[%s1 + $0x44] sm:$0xf]
  %v35 = vld [vmem:[%s2] sm:$0x1]
  %v37 = vlaneseq
  %v38 = vshrl.u32 %v37, 7
  %v39 = vsub.s32 0, %v38
  %v40 = vrot.slane %v35, %v39
  %v44 = vunpack.c.l.b16 %v15
  %v45 = vunpack.c.h.b16 %v15
  %v46 = vunpack.c.l.b16 %v16
  %v47 = vunpack.c.h.b16 %v16
  %v48 = vpack.c.b16 %v46, %v44
  %v49 = vpack.c.b16 %v47, %v45
  %v69 = vunpack.c.l.b16 %v17
  %v70 = vunpack.c.l.b16 %v18
  %v71 = vunpack.c.l.b16 %v19
  %v72 = vunpack.c.l.b16 %v20
  %v73 = vunpack.c.l.b16 %v21
  %v74 = vunpack.c.l.b16 %v22
  %v75 = vunpack.c.l.b16 %v23
  %v76 = vunpack.c.l.b16 %v24
  %v77 = vunpack.c.l.b16 %v25
  %v78 = vunpack.c.l.b16 %v26
  %v79 = vunpack.c.l.b16 %v27
  %v80 = vunpack.c.l.b16 %v28
  %v81 = vunpack.c.l.b16 %v29
  %v82 = vunpack.c.l.b16 %v30
  %v83 = vunpack.c.l.b16 %v31
  %v84 = vunpack.c.l.b16 %v32
  %v85 = vunpack.c.l.b16 %v33
  %v86 = vunpack.c.l.b16 %v34
  %v87 = vpack.c.b16 %v70, %v69
  %v88 = vpack.c.b16 %v72, %v71
  %v89 = vpack.c.b16 %v74, %v73
  %v90 = vpack.c.b16 %v76, %v75
  %v91 = vpack.c.b16 %v78, %v77
  %v92 = vpack.c.b16 %v80, %v79
  %v93 = vpack.c.b16 %v82, %v81
  %v94 = vpack.c.b16 %v84, %v83
  %v95 = vpack.c.b16 %v86, %v85
  %vm105 = vcmask 130048
  %v107 = vsel %vm105, %v49, 0
  %109 = vmatprep.subr.bf16.mxu0 0
  %110 = vmatpush1.bf16.msra.mxu0 %v94
  %111 = vmatprep.subr.bf16.mxu0 0
  %112 = vmatpush1.bf16.msra.mxu0 %v93
  %113 = vmatprep.subr.bf16.mxu0 0
  %114 = vmatpush1.bf16.msra.mxu0 %v92
  %115 = vmatprep.subr.bf16.mxu0 0
  %116 = vmatpush1.bf16.msra.mxu0 %v91
  %117 = vmatprep.subr.bf16.mxu0 0
  %118 = vmatpush1.bf16.msra.mxu0 %v90
  %119 = vmatprep.subr.bf16.mxu0 0
  %120 = vmatpush1.bf16.msra.mxu0 %v89
  %121 = vmatprep.subr.bf16.mxu0 0
  %122 = vmatpush1.bf16.msra.mxu0 %v88
  %123 = vmatprep.subr.bf16.mxu0 0
  %124 = vmatpush1.bf16.msra.mxu0 %v87
  %125 = vmatprep.subr.bf16.mxu0 0
  %126 = vmatpush2.bf16.msra.mxu0 0
  %127 = vmatprep.subr.bf16.mxu0 0
  %128 = vmatpush2.bf16.msra.mxu0 0
  %129 = vmatprep.subr.bf16.mxu0 0
  %130 = vmatpush2.bf16.msra.mxu0 0
  %131 = vmatprep.subr.bf16.mxu0 0
  %132 = vmatpush2.bf16.msra.mxu0 0
  %133 = vmatprep.subr.bf16.mxu0 0
  %134 = vmatpush2.bf16.msra.mxu0 0
  %135 = vmatprep.subr.bf16.mxu0 0
  %136 = vmatpush2.bf16.msra.mxu0 0
  %137 = vmatprep.subr.bf16.mxu0 0
  %138 = vmatpush2.bf16.msra.mxu0 0
  %139 = vmatprep.subr.bf16.mxu0 0
  %140 = vmatpush2.bf16.msra.mxu0 %v95
  %141 = vmatprep.mubr.bf16.mxu0 %v107
  %142 = vmatmul.mubr.bf16.gmra.mxu0 %v48
  %v143 = vpop.f32.mrf.mxu0
  %v144 = vadd.f32 %v40, %v143
  %v145 = vpop.f32.mrf.mxu0
  %v146 = vpop.f32.mrf.mxu0
  %v147 = vadd.f32 %v40, %v146
  %v148 = vpop.f32.mrf.mxu0
  %149 = vdwg.mxu0
  %v150 = vand.u32 2147483647, %v144
  %vm151 = vcmp.le.f32.partialorder %v150, 0.7853982
  %vm152 = vcmp.lt.s32.totalorder %v144, 0
  %v153 = vand.u32 %v144, 2139095040
  %v154 = vshrl.u32 %v153, 23
  %v155 = vsub.s32 %v154, 127
  %v156 = vand.u32 2147483647, %v144
  %v157 = vand.u32 %v156, 8388607
  %v158 = vor.u32 %v157, 8388608
  %v159 = vsub.s32 0, %v158
  %v160 = vadd.s32 %v155, 1
  %vm161 = vcmp.gt.s32.totalorder %v160, 0
  %v162 = vsel %vm161, %v160, 0
  %v163 = vshrl.u32 %v162, 5
  %v164 = vand.u32 %v162, 31
  %v165 = vsub.s32 32, %v164
  %v166 = vshrl.u32 683565275, %v165
  %v167 = vshll.u32 683565275, %v164
  %v168 = vshrl.u32 2475754826, %v165
  %v169 = vor.u32 %v167, %v168
  %v170 = vshll.u32 2475754826, %v164
  %v171 = vshrl.u32 2131351028, %v165
  %v172 = vor.u32 %v170, %v171
  %v173 = vshll.u32 2131351028, %v164
  %v174 = vshrl.u32 2102212464, %v165
  %v175 = vor.u32 %v173, %v174
  %v176 = vshll.u32 2102212464, %v164
  %v177 = vshrl.u32 920167782, %v165
  %v178 = vor.u32 %v176, %v177
  %v179 = vshll.u32 920167782, %v164
  %v180 = vshrl.u32 1326507024, %v165
  %v181 = vor.u32 %v179, %v180
  %vm182 = vcmp.lt.s32.totalorder %v163, 1
  %vm183 = vcmp.lt.s32.totalorder %v163, 2
  %vm184 = vcmp.lt.s32.totalorder %v163, 3
  %vm185 = vcmp.lt.s32.totalorder %v163, 4
  %v186 = vsel %vm182, %v166, %v169
  %v187 = vsel %vm185, %v175, 2102212464
  %v188 = vsel %vm184, %v172, %v187
  %v189 = vsel %vm183, %v186, %v188
  %v190 = vsel %vm182, %v169, %v172
  %v191 = vsel %vm185, %v178, 920167782
  %v192 = vsel %vm184, %v175, %v191
  %v193 = vsel %vm183, %v190, %v192
  %v194 = vsel %vm182, %v172, %v175
  %v195 = vsel %vm185, %v181, 1326507024
  %v196 = vsel %vm184, %v178, %v195
  %v197 = vsel %vm183, %v194, %v196
  %v198 = vshll.u32 %v158, 8
  %v199 = vmul.u32.u64.compose %v198, %v197
  %v200 = vextract.low.u32 %v199
  %v201 = vextract.high.u32 %v199
  %v202 = vmul.u32.u64.compose %v198, %v193
  %v203 = vextract.low.u32 %v202
  %v204 = vextract.high.u32 %v202
  %v205 = vmul.u32 %v198, %v189
  %v206 = vadd.s32 %v201, %v203
  %vm207 = vc.u32 %v201, %v203
  %v208 = vadd.s32 %v204, 1
  %v209 = vsel %vm207, %v208, %v204
  %v210 = vadd.s32 %v205, %v209
  %v211 = vadd.s32 %v210, 536870912
  %v212 = vshrl.u32 %v211, 30
  %v213 = vshll.u32 %v212, 30
  %v214 = vsub.s32 %v210, %v213
  %vm215 = vcmp.lt.s32.totalorder %v214, 0
  %v216 = vsub.s32 0, %v214
  %v217 = vsel %vm215, %v216, %v214
  %v218 = vclz %v217
  %v219 = vsub.s32 %v218, 2
  %vm220 = vcmp.gt.s32.totalorder 0, %v219
  %v221 = vsel %vm220, 0, %v219
  %v222 = vsub.s32 32, %v221
  %v223 = vshll.u32 %v214, %v221
  %v224 = vshrl.u32 %v206, %v222
  %v225 = vor.u32 %v223, %v224
  %v226 = vsub.s32 4294967266, %v221
  %v227 = vadd.s32 %v226, 127
  %v228 = vshll.u32 %v227, 23
  %v229 = vor.u32 4788187, %v228
  %v230 = vand.u32 2147483647, %v229
  %v232 = vcvt.s32.f32 %v225
  %v233 = vmul.f32 %v232, %v230
  %v234 = vxor.u32 %v233, 2147483648
  %v235 = vsel %vm152, %v234, %v233
  %v236 = vsub.s32 4, %v212
  %v237 = vsel %vm152, %v236, %v212
  %v238 = vsel %vm151, %v144, %v235
  %v239 = vsel %vm151, 0, %v237
  %v240 = vcosq.f32.pop %v238
  %v241 = vsinq.f32.pop %v238
  %vm242 = vweird.f32 %v144
  %v243 = vadd.s32 %v239, 3
  %v244 = vand.u32 %v243, 3
  %vm245 = vcmp.lt.s32.totalorder %v244, 2
  %vm246 = vcmp.eq.s32.totalorder %v244, 0
  %v247 = vxor.u32 %v241, 2147483648
  %v248 = vsel %vm246, %v240, %v247
  %vm249 = vcmp.eq.s32.totalorder %v244, 2
  %v250 = vxor.u32 %v240, 2147483648
  %v251 = vsel %vm249, %v250, %v241
  %v252 = vsel %vm245, %v248, %v251
  %v253 = vsel %vm242, nan, %v252
  %v254 = vand.u32 2147483647, %v147
  %vm255 = vcmp.le.f32.partialorder %v254, 0.7853982
  %vm256 = vcmp.lt.s32.totalorder %v147, 0
  %v257 = vand.u32 %v147, 2139095040
  %v258 = vshrl.u32 %v257, 23
  %v259 = vsub.s32 %v258, 127
  %v260 = vand.u32 2147483647, %v147
  %v261 = vand.u32 %v260, 8388607
  %v262 = vor.u32 %v261, 8388608
  %v263 = vsub.s32 0, %v262
  %v264 = vadd.s32 %v259, 1
  %vm265 = vcmp.gt.s32.totalorder %v264, 0
  %v266 = vsel %vm265, %v264, 0
  %v267 = vshrl.u32 %v266, 5
  %v268 = vand.u32 %v266, 31
  %v269 = vsub.s32 32, %v268
  %v270 = vshrl.u32 683565275, %v269
  %v271 = vshll.u32 683565275, %v268
  %v272 = vshrl.u32 2475754826, %v269
  %v273 = vor.u32 %v271, %v272
  %v274 = vshll.u32 2475754826, %v268
  %v275 = vshrl.u32 2131351028, %v269
  %v276 = vor.u32 %v274, %v275
  %v277 = vshll.u32 2131351028, %v268
  %v278 = vshrl.u32 2102212464, %v269
  %v279 = vor.u32 %v277, %v278
  %v280 = vshll.u32 2102212464, %v268
  %v281 = vshrl.u32 920167782, %v269
  %v282 = vor.u32 %v280, %v281
  %v283 = vshll.u32 920167782, %v268
  %v284 = vshrl.u32 1326507024, %v269
  %v285 = vor.u32 %v283, %v284
  %vm286 = vcmp.lt.s32.totalorder %v267, 1
  %vm287 = vcmp.lt.s32.totalorder %v267, 2
  %vm288 = vcmp.lt.s32.totalorder %v267, 3
  %vm289 = vcmp.lt.s32.totalorder %v267, 4
  %v290 = vsel %vm286, %v270, %v273
  %v291 = vsel %vm289, %v279, 2102212464
  %v292 = vsel %vm288, %v276, %v291
  %v293 = vsel %vm287, %v290, %v292
  %v294 = vsel %vm286, %v273, %v276
  %v295 = vsel %vm289, %v282, 920167782
  %v296 = vsel %vm288, %v279, %v295
  %v297 = vsel %vm287, %v294, %v296
  %v298 = vsel %vm286, %v276, %v279
  %v299 = vsel %vm289, %v285, 1326507024
  %v300 = vsel %vm288, %v282, %v299
  %v301 = vsel %vm287, %v298, %v300
  %v302 = vshll.u32 %v262, 8
  %v303 = vmul.u32.u64.compose %v302, %v301
  %v304 = vextract.low.u32 %v303
  %v305 = vextract.high.u32 %v303
  %v306 = vmul.u32.u64.compose %v302, %v297
  %v307 = vextract.low.u32 %v306
  %v308 = vextract.high.u32 %v306
  %v309 = vmul.u32 %v302, %v293
  %v310 = vadd.s32 %v305, %v307
  %vm311 = vc.u32 %v305, %v307
  %v312 = vadd.s32 %v308, 1
  %v313 = vsel %vm311, %v312, %v308
  %v314 = vadd.s32 %v309, %v313
  %v315 = vadd.s32 %v314, 536870912
  %v316 = vshrl.u32 %v315, 30
  %v317 = vshll.u32 %v316, 30
  %v318 = vsub.s32 %v314, %v317
  %vm319 = vcmp.lt.s32.totalorder %v318, 0
  %v320 = vsub.s32 0, %v318
  %v321 = vsel %vm319, %v320, %v318
  %v322 = vclz %v321
  %v323 = vsub.s32 %v322, 2
  %vm324 = vcmp.gt.s32.totalorder 0, %v323
  %v325 = vsel %vm324, 0, %v323
  %v326 = vsub.s32 32, %v325
  %v327 = vshll.u32 %v318, %v325
  %v328 = vshrl.u32 %v310, %v326
  %v329 = vor.u32 %v327, %v328
  %v330 = vsub.s32 4294967266, %v325
  %v331 = vadd.s32 %v330, 127
  %v332 = vshll.u32 %v331, 23
  %v333 = vor.u32 4788187, %v332
  %v334 = vand.u32 2147483647, %v333
  %v336 = vcvt.s32.f32 %v329
  %v337 = vmul.f32 %v336, %v334
  %v338 = vxor.u32 %v337, 2147483648
  %v339 = vsel %vm256, %v338, %v337
  %v340 = vsub.s32 4, %v316
  %v341 = vsel %vm256, %v340, %v316
  %v342 = vsel %vm255, %v147, %v339
  %v343 = vsel %vm255, 0, %v341
  %v344 = vcosq.f32.pop %v342
  %v345 = vsinq.f32.pop %v342
  %vm346 = vweird.f32 %v147
  %v347 = vadd.s32 %v343, 3
  %v348 = vand.u32 %v347, 3
  %vm349 = vcmp.lt.s32.totalorder %v348, 2
  %vm350 = vcmp.eq.s32.totalorder %v348, 0
  %v351 = vxor.u32 %v345, 2147483648
  %v352 = vsel %vm350, %v344, %v351
  %vm353 = vcmp.eq.s32.totalorder %v348, 2
  %v354 = vxor.u32 %v344, 2147483648
  %v355 = vsel %vm353, %v354, %v345
  %v356 = vsel %vm349, %v352, %v355
  %v357 = vsel %vm346, nan, %v356
  %358 = vst [vmem:[%s3] sm:$0xff] %v253
  %359 = vst [vmem:[%s3 + $0x8] sm:$0xff] %v357
  // Predicated region
  $region14: #{_lambda_.28} parent=0 // pred_check
    _
  $region15: #{_lambda_.28} parent=0 // pred_check_branch
    %361 = sbr.rel (0) target = $region17
  $region16: #{_lambda_.28} parent=0 // pred_region
    _
  $region17: #{_lambda_.28} parent=0 // pred_fallthru
    _
  // Predicated region
  $region18: #{_lambda_.28} parent=0 // pred_check
    _
  $region19: #{_lambda_.28} parent=0 // pred_check_branch
    %363 = sbr.rel (0) target = $region21
  $region20: #{_lambda_.28} parent=0 // pred_region
    _
  $region21: #{_lambda_.28} parent=0 // pred_fallthru
    _

// kernel: _lambda_.29
$region0: #{_lambda_.29}
  #allocation0 [shape = 'u32[]', space=smem, size = 0x4, offset = 0x4, fixed_abs, tag = 'smem constant byte address 0x4 - core index']
  #allocation1 [shape = 'u32[144,128]{1,0:T(1,128)}', space=vmem, size = 0x12000, scoped, tag = 'internal scratch']
  %s0 = inlined_call_operand.vmem [shape: bf16[16,16], index: 0, kind: input, shape index: {}]
  %s1 = inlined_call_operand.vmem [shape: bf16[16,128], index: 1, kind: input, shape index: {}]
  %s2 = inlined_call_operand.vmem [shape: f32[1,128], index: 2, kind: input, shape index: {}]
  %s3 = inlined_call_operand.vmem [shape: f32[16,128], index: 3, kind: input, shape index: {}]
  %s4 = inlined_call_operand.vmem [shape: f32[16,128], index: 4, kind: output, shape index: {}]
  %s5 = sld [smem:[#allocation0]]
  $region26: #{_lambda_.29} parent=0
    _
  %s7 = ssub.s32 1, %s5
  %s8 = scalar_select 0, %s7, %s5
  // Predicated region
  $region2: #{_lambda_.29} parent=0 // pred_check
    _
  $region3: #{_lambda_.29} parent=0 // pred_check_branch
    %10 = sbr.rel (0) target = $region5
  $region4: #{_lambda_.29} parent=0 // pred_region
    _
  $region5: #{_lambda_.29} parent=0 // pred_fallthru
    _
  // Predicated region
  $region6: #{_lambda_.29} parent=0 // pred_check
    _
  $region7: #{_lambda_.29} parent=0 // pred_check_branch
    %12 = sbr.rel (0) target = $region9
  $region8: #{_lambda_.29} parent=0 // pred_region
    _
  $region9: #{_lambda_.29} parent=0 // pred_fallthru
    _
  // Predicated region
  $region10: #{_lambda_.29} parent=0 // pred_check
    _
  $region11: #{_lambda_.29} parent=0 // pred_check_branch
    %14 = sbr.rel (0) target = $region13
  $region12: #{_lambda_.29} parent=0 // pred_region
    _
  $region13: #{_lambda_.29} parent=0 // pred_fallthru
    _
  // Predicated region
  $region14: #{_lambda_.29} parent=0 // pred_check
    _
  $region15: #{_lambda_.29} parent=0 // pred_check_branch
    %16 = sbr.rel (0) target = $region17
  $region16: #{_lambda_.29} parent=0 // pred_region
    _
  $region17: #{_lambda_.29} parent=0 // pred_fallthru
    _
  %v18 = vld [vmem:[%s0] sm:$0xf]
  %v19 = vld [vmem:[%s0 + $0x4] sm:$0xf]
  %v20 = vld [vmem:[%s1] sm:$0xf]
  %v21 = vld [vmem:[%s1 + $0x4] sm:$0xf]
  %v22 = vld [vmem:[%s2] sm:$0x1]
  %v24 = vlaneseq
  %v25 = vshrl.u32 %v24, 7
  %v26 = vsub.s32 0, %v25
  %v27 = vrot.slane %v22, %v26
  %v31 = vunpack.c.l.b16 %v18
  %v32 = vunpack.c.l.b16 %v19
  %v33 = vpack.c.b16 %v32, %v31
  %v36 = vunpack.c.l.b16 %v20
  %v37 = vunpack.c.l.b16 %v21
  %v38 = vpack.c.b16 %v37, %v36
  %vm40 = vcmask 130048
  %v42 = vsel %vm40, %v33, 0
  %44 = vmatprep.subr.bf16.mxu0 0
  %45 = vmatpush1.bf16.msra.mxu0 0
  %46 = vmatprep.subr.bf16.mxu0 0
  %47 = vmatpush1.bf16.msra.mxu0 0
  %48 = vmatprep.subr.bf16.mxu0 0
  %49 = vmatpush1.bf16.msra.mxu0 0
  %50 = vmatprep.subr.bf16.mxu0 0
  %51 = vmatpush1.bf16.msra.mxu0 0
  %52 = vmatprep.subr.bf16.mxu0 0
  %53 = vmatpush1.bf16.msra.mxu0 0
  %54 = vmatprep.subr.bf16.mxu0 0
  %55 = vmatpush1.bf16.msra.mxu0 0
  %56 = vmatprep.subr.bf16.mxu0 0
  %57 = vmatpush1.bf16.msra.mxu0 0
  %58 = vmatprep.subr.bf16.mxu0 0
  %59 = vmatpush1.bf16.msra.mxu0 %v38
  %60 = vmatprep.subr.bf16.mxu0 0
  %61 = vmatpush2.bf16.msra.mxu0 0
  %62 = vmatprep.subr.bf16.mxu0 0
  %63 = vmatpush2.bf16.msra.mxu0 0
  %64 = vmatprep.subr.bf16.mxu0 0
  %65 = vmatpush2.bf16.msra.mxu0 0
  %66 = vmatprep.subr.bf16.mxu0 0
  %67 = vmatpush2.bf16.msra.mxu0 0
  %68 = vmatprep.subr.bf16.mxu0 0
  %69 = vmatpush2.bf16.msra.mxu0 0
  %70 = vmatprep.subr.bf16.mxu0 0
  %71 = vmatpush2.bf16.msra.mxu0 0
  %72 = vmatprep.subr.bf16.mxu0 0
  %73 = vmatpush2.bf16.msra.mxu0 0
  %74 = vmatprep.subr.bf16.mxu0 0
  %75 = vmatpush2.bf16.msra.mxu0 0
  %76 = vmatprep.mubr.bf16.mxu0 0
  %77 = vmatmul.mubr.bf16.gmra.mxu0 %v42
  %v78 = vpop.f32.mrf.mxu0
  %v79 = vadd.f32 %v27, %v78
  %v80 = vpop.f32.mrf.mxu0
  %v81 = vpop.f32.mrf.mxu0
  %v82 = vadd.f32 %v27, %v81
  %v83 = vpop.f32.mrf.mxu0
  %84 = vdwg.mxu0
  %v85 = vld [vmem:[%s3] sm:$0xff]
  %v86 = vld [vmem:[%s3 + $0x8] sm:$0xff]
  %v87 = vadd.f32 %v79, %v85
  %v88 = vadd.f32 %v82, %v86
  %89 = vst [vmem:[%s4] sm:$0xff] %v87
  %90 = vst [vmem:[%s4 + $0x8] sm:$0xff] %v88
  // Predicated region
  $region18: #{_lambda_.29} parent=0 // pred_check
    _
  $region19: #{_lambda_.29} parent=0 // pred_check_branch
    %92 = sbr.rel (0) target = $region21
  $region20: #{_lambda_.29} parent=0 // pred_region
    _
  $region21: #{_lambda_.29} parent=0 // pred_fallthru
    _
  // Predicated region
  $region22: #{_lambda_.29} parent=0 // pred_check
    _
  $region23: #{_lambda_.29} parent=0 // pred_check_branch
    %94 = sbr.rel (0) target = $region25
  $region24: #{_lambda_.29} parent=0 // pred_region
    _
  $region25: #{_lambda_.29} parent=0 // pred_fallthru
    _

// kernel: _lambda_.26
$region0: #{_lambda_.26}
  #allocation0 [shape = 'u32[]', space=smem, size = 0x4, offset = 0x4, fixed_abs, tag = 'smem constant byte address 0x4 - core index']
  #allocation1 [shape = 'u32[144,128]{1,0:T(1,128)}', space=vmem, size = 0x12000, scoped, tag = 'internal scratch']
  %s0 = inlined_call_operand.vmem [shape: bf16[16,32], index: 0, kind: input, shape index: {}]
  %s1 = inlined_call_operand.vmem [shape: bf16[32,128], index: 1, kind: input, shape index: {}]
  %s2 = inlined_call_operand.vmem [shape: f32[1,128], index: 2, kind: input, shape index: {}]
  %s3 = inlined_call_operand.vmem [shape: f32[16,128], index: 3, kind: output, shape index: {}]
  %s4 = sld [smem:[#allocation0]]
  $region22: #{_lambda_.26} parent=0
    _
  %s6 = ssub.s32 1, %s4
  %s7 = scalar_select 0, %s6, %s4
  // Predicated region
  $region2: #{_lambda_.26} parent=0 // pred_check
    _
  $region3: #{_lambda_.26} parent=0 // pred_check_branch
    %9 = sbr.rel (0) target = $region5
  $region4: #{_lambda_.26} parent=0 // pred_region
    _
  $region5: #{_lambda_.26} parent=0 // pred_fallthru
    _
  // Predicated region
  $region6: #{_lambda_.26} parent=0 // pred_check
    _
  $region7: #{_lambda_.26} parent=0 // pred_check_branch
    %11 = sbr.rel (0) target = $region9
  $region8: #{_lambda_.26} parent=0 // pred_region
    _
  $region9: #{_lambda_.26} parent=0 // pred_fallthru
    _
  // Predicated region
  $region10: #{_lambda_.26} parent=0 // pred_check
    _
  $region11: #{_lambda_.26} parent=0 // pred_check_branch
    %13 = sbr.rel (0) target = $region13
  $region12: #{_lambda_.26} parent=0 // pred_region
    _
  $region13: #{_lambda_.26} parent=0 // pred_fallthru
    _
  %v15 = vld [vmem:[%s0] sm:$0xf]
  %v16 = vld [vmem:[%s0 + $0x4] sm:$0xf]
  %v17 = vld [vmem:[%s1] sm:$0xf]
  %v18 = vld [vmem:[%s1 + $0x4] sm:$0xf]
  %v19 = vld [vmem:[%s1 + $0x8] sm:$0xf]
  %v20 = vld [vmem:[%s1 + $0xc] sm:$0xf]
  %v21 = vld [vmem:[%s2] sm:$0x1]
  %v23 = vlaneseq
  %v24 = vshrl.u32 %v23, 7
  %v25 = vsub.s32 0, %v24
  %v26 = vrot.slane %v21, %v25
  %v30 = vunpack.c.l.b16 %v15
  %v31 = vunpack.c.l.b16 %v16
  %v32 = vpack.c.b16 %v31, %v30
  %v37 = vunpack.c.l.b16 %v17
  %v38 = vunpack.c.l.b16 %v18
  %v39 = vunpack.c.l.b16 %v19
  %v40 = vunpack.c.l.b16 %v20
  %v41 = vpack.c.b16 %v38, %v37
  %v42 = vpack.c.b16 %v40, %v39
  %vm45 = vcmask 261120
  %v47 = vsel %vm45, %v32, 0
  %49 = vmatprep.subr.bf16.mxu0 0
  %50 = vmatpush1.bf16.msra.mxu0 0
  %51 = vmatprep.subr.bf16.mxu0 0
  %52 = vmatpush1.bf16.msra.mxu0 0
  %53 = vmatprep.subr.bf16.mxu0 0
  %54 = vmatpush1.bf16.msra.mxu0 0
  %55 = vmatprep.subr.bf16.mxu0 0
  %56 = vmatpush1.bf16.msra.mxu0 0
  %57 = vmatprep.subr.bf16.mxu0 0
  %58 = vmatpush1.bf16.msra.mxu0 0
  %59 = vmatprep.subr.bf16.mxu0 0
  %60 = vmatpush1.bf16.msra.mxu0 0
  %61 = vmatprep.subr.bf16.mxu0 0
  %62 = vmatpush1.bf16.msra.mxu0 %v42
  %63 = vmatprep.subr.bf16.mxu0 0
  %64 = vmatpush1.bf16.msra.mxu0 %v41
  %65 = vmatprep.subr.bf16.mxu0 0
  %66 = vmatpush2.bf16.msra.mxu0 0
  %67 = vmatprep.subr.bf16.mxu0 0
  %68 = vmatpush2.bf16.msra.mxu0 0
  %69 = vmatprep.subr.bf16.mxu0 0
  %70 = vmatpush2.bf16.msra.mxu0 0
  %71 = vmatprep.subr.bf16.mxu0 0
  %72 = vmatpush2.bf16.msra.mxu0 0
  %73 = vmatprep.subr.bf16.mxu0 0
  %74 = vmatpush2.bf16.msra.mxu0 0
  %75 = vmatprep.subr.bf16.mxu0 0
  %76 = vmatpush2.bf16.msra.mxu0 0
  %77 = vmatprep.subr.bf16.mxu0 0
  %78 = vmatpush2.bf16.msra.mxu0 0
  %79 = vmatprep.subr.bf16.mxu0 0
  %80 = vmatpush2.bf16.msra.mxu0 0
  %81 = vmatprep.mubr.bf16.mxu0 0
  %82 = vmatmul.mubr.bf16.gmra.mxu0 %v47
  %v83 = vpop.f32.mrf.mxu0
  %v84 = vadd.f32 %v26, %v83
  %v85 = vpop.f32.mrf.mxu0
  %v86 = vpop.f32.mrf.mxu0
  %v87 = vadd.f32 %v26, %v86
  %v88 = vpop.f32.mrf.mxu0
  %89 = vdwg.mxu0
  %90 = vst [vmem:[%s3] sm:$0xff] %v84
  %91 = vst [vmem:[%s3 + $0x8] sm:$0xff] %v87
  // Predicated region
  $region14: #{_lambda_.26} parent=0 // pred_check
    _
  $region15: #{_lambda_.26} parent=0 // pred_check_branch
    %93 = sbr.rel (0) target = $region17
  $region16: #{_lambda_.26} parent=0 // pred_region
    _
  $region17: #{_lambda_.26} parent=0 // pred_fallthru
    _
  // Predicated region
  $region18: #{_lambda_.26} parent=0 // pred_check
    _
  $region19: #{_lambda_.26} parent=0 // pred_check_branch
    %95 = sbr.rel (0) target = $region21
  $region20: #{_lambda_.26} parent=0 // pred_region
    _
  $region21: #{_lambda_.26} parent=0 // pred_fallthru
    _

// kernel: _lambda_.30
$region0: #{_lambda_.30}
  #allocation0 [shape = 'u32[]', space=smem, size = 0x4, offset = 0x4, fixed_abs, tag = 'smem constant byte address 0x4 - core index']
  #allocation1 [shape = 'u32[144,128]{1,0:T(1,128)}', space=vmem, size = 0x12000, scoped, tag = 'internal scratch']
  %s0 = inlined_call_operand.vmem [shape: bf16[16,64], index: 0, kind: input, shape index: {}]
  %s1 = inlined_call_operand.vmem [shape: bf16[64,128], index: 1, kind: input, shape index: {}]
  %s2 = inlined_call_operand.vmem [shape: f32[1,128], index: 2, kind: input, shape index: {}]
  %s3 = inlined_call_operand.vmem [shape: f32[16,128], index: 3, kind: output, shape index: {}]
  %s4 = sld [smem:[#allocation0]]
  $region22: #{_lambda_.30} parent=0
    _
  %s6 = ssub.s32 1, %s4
  %s7 = scalar_select 0, %s6, %s4
  // Predicated region
  $region2: #{_lambda_.30} parent=0 // pred_check
    _
  $region3: #{_lambda_.30} parent=0 // pred_check_branch
    %9 = sbr.rel (0) target = $region5
  $region4: #{_lambda_.30} parent=0 // pred_region
    _
  $region5: #{_lambda_.30} parent=0 // pred_fallthru
    _
  // Predicated region
  $region6: #{_lambda_.30} parent=0 // pred_check
    _
  $region7: #{_lambda_.30} parent=0 // pred_check_branch
    %11 = sbr.rel (0) target = $region9
  $region8: #{_lambda_.30} parent=0 // pred_region
    _
  $region9: #{_lambda_.30} parent=0 // pred_fallthru
    _
  // Predicated region
  $region10: #{_lambda_.30} parent=0 // pred_check
    _
  $region11: #{_lambda_.30} parent=0 // pred_check_branch
    %13 = sbr.rel (0) target = $region13
  $region12: #{_lambda_.30} parent=0 // pred_region
    _
  $region13: #{_lambda_.30} parent=0 // pred_fallthru
    _
  %v15 = vld [vmem:[%s0] sm:$0xf]
  %v16 = vld [vmem:[%s0 + $0x4] sm:$0xf]
  %v17 = vld [vmem:[%s1] sm:$0xf]
  %v18 = vld [vmem:[%s1 + $0x4] sm:$0xf]
  %v19 = vld [vmem:[%s1 + $0x8] sm:$0xf]
  %v20 = vld [vmem:[%s1 + $0xc] sm:$0xf]
  %v21 = vld [vmem:[%s1 + $0x10] sm:$0xf]
  %v22 = vld [vmem:[%s1 + $0x14] sm:$0xf]
  %v23 = vld [vmem:[%s1 + $0x18] sm:$0xf]
  %v24 = vld [vmem:[%s1 + $0x1c] sm:$0xf]
  %v25 = vld [vmem:[%s2] sm:$0x1]
  %v27 = vlaneseq
  %v28 = vshrl.u32 %v27, 7
  %v29 = vsub.s32 0, %v28
  %v30 = vrot.slane %v25, %v29
  %v34 = vunpack.c.l.b16 %v15
  %v35 = vunpack.c.l.b16 %v16
  %v36 = vpack.c.b16 %v35, %v34
  %v45 = vunpack.c.l.b16 %v17
  %v46 = vunpack.c.l.b16 %v18
  %v47 = vunpack.c.l.b16 %v19
  %v48 = vunpack.c.l.b16 %v20
  %v49 = vunpack.c.l.b16 %v21
  %v50 = vunpack.c.l.b16 %v22
  %v51 = vunpack.c.l.b16 %v23
  %v52 = vunpack.c.l.b16 %v24
  %v53 = vpack.c.b16 %v46, %v45
  %v54 = vpack.c.b16 %v48, %v47
  %v55 = vpack.c.b16 %v50, %v49
  %v56 = vpack.c.b16 %v52, %v51
  %vm61 = vcmask 523264
  %v63 = vsel %vm61, %v36, 0
  %65 = vmatprep.subr.bf16.mxu0 0
  %66 = vmatpush1.bf16.msra.mxu0 0
  %67 = vmatprep.subr.bf16.mxu0 0
  %68 = vmatpush1.bf16.msra.mxu0 0
  %69 = vmatprep.subr.bf16.mxu0 0
  %70 = vmatpush1.bf16.msra.mxu0 0
  %71 = vmatprep.subr.bf16.mxu0 0
  %72 = vmatpush1.bf16.msra.mxu0 0
  %73 = vmatprep.subr.bf16.mxu0 0
  %74 = vmatpush1.bf16.msra.mxu0 %v56
  %75 = vmatprep.subr.bf16.mxu0 0
  %76 = vmatpush1.bf16.msra.mxu0 %v55
  %77 = vmatprep.subr.bf16.mxu0 0
  %78 = vmatpush1.bf16.msra.mxu0 %v54
  %79 = vmatprep.subr.bf16.mxu0 0
  %80 = vmatpush1.bf16.msra.mxu0 %v53
  %81 = vmatprep.subr.bf16.mxu0 0
  %82 = vmatpush2.bf16.msra.mxu0 0
  %83 = vmatprep.subr.bf16.mxu0 0
  %84 = vmatpush2.bf16.msra.mxu0 0
  %85 = vmatprep.subr.bf16.mxu0 0
  %86 = vmatpush2.bf16.msra.mxu0 0
  %87 = vmatprep.subr.bf16.mxu0 0
  %88 = vmatpush2.bf16.msra.mxu0 0
  %89 = vmatprep.subr.bf16.mxu0 0
  %90 = vmatpush2.bf16.msra.mxu0 0
  %91 = vmatprep.subr.bf16.mxu0 0
  %92 = vmatpush2.bf16.msra.mxu0 0
  %93 = vmatprep.subr.bf16.mxu0 0
  %94 = vmatpush2.bf16.msra.mxu0 0
  %95 = vmatprep.subr.bf16.mxu0 0
  %96 = vmatpush2.bf16.msra.mxu0 0
  %97 = vmatprep.mubr.bf16.mxu0 0
  %98 = vmatmul.mubr.bf16.gmra.mxu0 %v63
  %v99 = vpop.f32.mrf.mxu0
  %v100 = vadd.f32 %v30, %v99
  %v101 = vpop.f32.mrf.mxu0
  %v102 = vpop.f32.mrf.mxu0
  %v103 = vadd.f32 %v30, %v102
  %v104 = vpop.f32.mrf.mxu0
  %105 = vdwg.mxu0
  %v106 = vand.u32 2147483647, %v100
  %vm107 = vcmp.le.f32.partialorder %v106, 0.7853982
  %vm108 = vcmp.lt.s32.totalorder %v100, 0
  %v109 = vand.u32 %v100, 2139095040
  %v110 = vshrl.u32 %v109, 23
  %v111 = vsub.s32 %v110, 127
  %v112 = vand.u32 2147483647, %v100
  %v113 = vand.u32 %v112, 8388607
  %v114 = vor.u32 %v113, 8388608
  %v115 = vsub.s32 0, %v114
  %v116 = vadd.s32 %v111, 1
  %vm117 = vcmp.gt.s32.totalorder %v116, 0
  %v118 = vsel %vm117, %v116, 0
  %v119 = vshrl.u32 %v118, 5
  %v120 = vand.u32 %v118, 31
  %v121 = vsub.s32 32, %v120
  %v122 = vshrl.u32 683565275, %v121
  %v123 = vshll.u32 683565275, %v120
  %v124 = vshrl.u32 2475754826, %v121
  %v125 = vor.u32 %v123, %v124
  %v126 = vshll.u32 2475754826, %v120
  %v127 = vshrl.u32 2131351028, %v121
  %v128 = vor.u32 %v126, %v127
  %v129 = vshll.u32 2131351028, %v120
  %v130 = vshrl.u32 2102212464, %v121
  %v131 = vor.u32 %v129, %v130
  %v132 = vshll.u32 2102212464, %v120
  %v133 = vshrl.u32 920167782, %v121
  %v134 = vor.u32 %v132, %v133
  %v135 = vshll.u32 920167782, %v120
  %v136 = vshrl.u32 1326507024, %v121
  %v137 = vor.u32 %v135, %v136
  %vm138 = vcmp.lt.s32.totalorder %v119, 1
  %vm139 = vcmp.lt.s32.totalorder %v119, 2
  %vm140 = vcmp.lt.s32.totalorder %v119, 3
  %vm141 = vcmp.lt.s32.totalorder %v119, 4
  %v142 = vsel %vm138, %v122, %v125
  %v143 = vsel %vm141, %v131, 2102212464
  %v144 = vsel %vm140, %v128, %v143
  %v145 = vsel %vm139, %v142, %v144
  %v146 = vsel %vm138, %v125, %v128
  %v147 = vsel %vm141, %v134, 920167782
  %v148 = vsel %vm140, %v131, %v147
  %v149 = vsel %vm139, %v146, %v148
  %v150 = vsel %vm138, %v128, %v131
  %v151 = vsel %vm141, %v137, 1326507024
  %v152 = vsel %vm140, %v134, %v151
  %v153 = vsel %vm139, %v150, %v152
  %v154 = vshll.u32 %v114, 8
  %v155 = vmul.u32.u64.compose %v154, %v153
  %v156 = vextract.low.u32 %v155
  %v157 = vextract.high.u32 %v155
  %v158 = vmul.u32.u64.compose %v154, %v149
  %v159 = vextract.low.u32 %v158
  %v160 = vextract.high.u32 %v158
  %v161 = vmul.u32 %v154, %v145
  %v162 = vadd.s32 %v157, %v159
  %vm163 = vc.u32 %v157, %v159
  %v164 = vadd.s32 %v160, 1
  %v165 = vsel %vm163, %v164, %v160
  %v166 = vadd.s32 %v161, %v165
  %v167 = vadd.s32 %v166, 536870912
  %v168 = vshrl.u32 %v167, 30
  %v169 = vshll.u32 %v168, 30
  %v170 = vsub.s32 %v166, %v169
  %vm171 = vcmp.lt.s32.totalorder %v170, 0
  %v172 = vsub.s32 0, %v170
  %v173 = vsel %vm171, %v172, %v170
  %v174 = vclz %v173
  %v175 = vsub.s32 %v174, 2
  %vm176 = vcmp.gt.s32.totalorder 0, %v175
  %v177 = vsel %vm176, 0, %v175
  %v178 = vsub.s32 32, %v177
  %v179 = vshll.u32 %v170, %v177
  %v180 = vshrl.u32 %v162, %v178
  %v181 = vor.u32 %v179, %v180
  %v182 = vsub.s32 4294967266, %v177
  %v183 = vadd.s32 %v182, 127
  %v184 = vshll.u32 %v183, 23
  %v185 = vor.u32 4788187, %v184
  %v186 = vand.u32 2147483647, %v185
  %v188 = vcvt.s32.f32 %v181
  %v189 = vmul.f32 %v188, %v186
  %v190 = vxor.u32 %v189, 2147483648
  %v191 = vsel %vm108, %v190, %v189
  %v192 = vsub.s32 4, %v168
  %v193 = vsel %vm108, %v192, %v168
  %v194 = vsel %vm107, %v100, %v191
  %v195 = vsel %vm107, 0, %v193
  %v196 = vcosq.f32.pop %v194
  %v197 = vsinq.f32.pop %v194
  %vm198 = vweird.f32 %v100
  %v199 = vadd.s32 %v195, 3
  %v200 = vand.u32 %v199, 3
  %vm201 = vcmp.lt.s32.totalorder %v200, 2
  %vm202 = vcmp.eq.s32.totalorder %v200, 0
  %v203 = vxor.u32 %v197, 2147483648
  %v204 = vsel %vm202, %v196, %v203
  %vm205 = vcmp.eq.s32.totalorder %v200, 2
  %v206 = vxor.u32 %v196, 2147483648
  %v207 = vsel %vm205, %v206, %v197
  %v208 = vsel %vm201, %v204, %v207
  %v209 = vsel %vm198, nan, %v208
  %v210 = vand.u32 2147483647, %v103
  %vm211 = vcmp.le.f32.partialorder %v210, 0.7853982
  %vm212 = vcmp.lt.s32.totalorder %v103, 0
  %v213 = vand.u32 %v103, 2139095040
  %v214 = vshrl.u32 %v213, 23
  %v215 = vsub.s32 %v214, 127
  %v216 = vand.u32 2147483647, %v103
  %v217 = vand.u32 %v216, 8388607
  %v218 = vor.u32 %v217, 8388608
  %v219 = vsub.s32 0, %v218
  %v220 = vadd.s32 %v215, 1
  %vm221 = vcmp.gt.s32.totalorder %v220, 0
  %v222 = vsel %vm221, %v220, 0
  %v223 = vshrl.u32 %v222, 5
  %v224 = vand.u32 %v222, 31
  %v225 = vsub.s32 32, %v224
  %v226 = vshrl.u32 683565275, %v225
  %v227 = vshll.u32 683565275, %v224
  %v228 = vshrl.u32 2475754826, %v225
  %v229 = vor.u32 %v227, %v228
  %v230 = vshll.u32 2475754826, %v224
  %v231 = vshrl.u32 2131351028, %v225
  %v232 = vor.u32 %v230, %v231
  %v233 = vshll.u32 2131351028, %v224
  %v234 = vshrl.u32 2102212464, %v225
  %v235 = vor.u32 %v233, %v234
  %v236 = vshll.u32 2102212464, %v224
  %v237 = vshrl.u32 920167782, %v225
  %v238 = vor.u32 %v236, %v237
  %v239 = vshll.u32 920167782, %v224
  %v240 = vshrl.u32 1326507024, %v225
  %v241 = vor.u32 %v239, %v240
  %vm242 = vcmp.lt.s32.totalorder %v223, 1
  %vm243 = vcmp.lt.s32.totalorder %v223, 2
  %vm244 = vcmp.lt.s32.totalorder %v223, 3
  %vm245 = vcmp.lt.s32.totalorder %v223, 4
  %v246 = vsel %vm242, %v226, %v229
  %v247 = vsel %vm245, %v235, 2102212464
  %v248 = vsel %vm244, %v232, %v247
  %v249 = vsel %vm243, %v246, %v248
  %v250 = vsel %vm242, %v229, %v232
  %v251 = vsel %vm245, %v238, 920167782
  %v252 = vsel %vm244, %v235, %v251
  %v253 = vsel %vm243, %v250, %v252
  %v254 = vsel %vm242, %v232, %v235
  %v255 = vsel %vm245, %v241, 1326507024
  %v256 = vsel %vm244, %v238, %v255
  %v257 = vsel %vm243, %v254, %v256
  %v258 = vshll.u32 %v218, 8
  %v259 = vmul.u32.u64.compose %v258, %v257
  %v260 = vextract.low.u32 %v259
  %v261 = vextract.high.u32 %v259
  %v262 = vmul.u32.u64.compose %v258, %v253
  %v263 = vextract.low.u32 %v262
  %v264 = vextract.high.u32 %v262
  %v265 = vmul.u32 %v258, %v249
  %v266 = vadd.s32 %v261, %v263
  %vm267 = vc.u32 %v261, %v263
  %v268 = vadd.s32 %v264, 1
  %v269 = vsel %vm267, %v268, %v264
  %v270 = vadd.s32 %v265, %v269
  %v271 = vadd.s32 %v270, 536870912
  %v272 = vshrl.u32 %v271, 30
  %v273 = vshll.u32 %v272, 30
  %v274 = vsub.s32 %v270, %v273
  %vm275 = vcmp.lt.s32.totalorder %v274, 0
  %v276 = vsub.s32 0, %v274
  %v277 = vsel %vm275, %v276, %v274
  %v278 = vclz %v277
  %v279 = vsub.s32 %v278, 2
  %vm280 = vcmp.gt.s32.totalorder 0, %v279
  %v281 = vsel %vm280, 0, %v279
  %v282 = vsub.s32 32, %v281
  %v283 = vshll.u32 %v274, %v281
  %v284 = vshrl.u32 %v266, %v282
  %v285 = vor.u32 %v283, %v284
  %v286 = vsub.s32 4294967266, %v281
  %v287 = vadd.s32 %v286, 127
  %v288 = vshll.u32 %v287, 23
  %v289 = vor.u32 4788187, %v288
  %v290 = vand.u32 2147483647, %v289
  %v292 = vcvt.s32.f32 %v285
  %v293 = vmul.f32 %v292, %v290
  %v294 = vxor.u32 %v293, 2147483648
  %v295 = vsel %vm212, %v294, %v293
  %v296 = vsub.s32 4, %v272
  %v297 = vsel %vm212, %v296, %v272
  %v298 = vsel %vm211, %v103, %v295
  %v299 = vsel %vm211, 0, %v297
  %v300 = vcosq.f32.pop %v298
  %v301 = vsinq.f32.pop %v298
  %vm302 = vweird.f32 %v103
  %v303 = vadd.s32 %v299, 3
  %v304 = vand.u32 %v303, 3
  %vm305 = vcmp.lt.s32.totalorder %v304, 2
  %vm306 = vcmp.eq.s32.totalorder %v304, 0
  %v307 = vxor.u32 %v301, 2147483648
  %v308 = vsel %vm306, %v300, %v307
  %vm309 = vcmp.eq.s32.totalorder %v304, 2
  %v310 = vxor.u32 %v300, 2147483648
  %v311 = vsel %vm309, %v310, %v301
  %v312 = vsel %vm305, %v308, %v311
  %v313 = vsel %vm302, nan, %v312
  %314 = vst [vmem:[%s3] sm:$0xff] %v209
  %315 = vst [vmem:[%s3 + $0x8] sm:$0xff] %v313
  // Predicated region
  $region14: #{_lambda_.30} parent=0 // pred_check
    _
  $region15: #{_lambda_.30} parent=0 // pred_check_branch
    %317 = sbr.rel (0) target = $region17
  $region16: #{_lambda_.30} parent=0 // pred_region
    _
  $region17: #{_lambda_.30} parent=0 // pred_fallthru
    _
  // Predicated region
  $region18: #{_lambda_.30} parent=0 // pred_check
    _
  $region19: #{_lambda_.30} parent=0 // pred_check_branch
    %319 = sbr.rel (0) target = $region21
  $region20: #{_lambda_.30} parent=0 // pred_region
    _
  $region21: #{_lambda_.30} parent=0 // pred_fallthru
    _

// kernel: _lambda_.33
$region0: #{_lambda_.33}
  #allocation0 [shape = 'u32[]', space=smem, size = 0x4, offset = 0x4, fixed_abs, tag = 'smem constant byte address 0x4 - core index']
  #allocation1 [shape = 'u32[144,128]{1,0:T(1,128)}', space=vmem, size = 0x12000, scoped, tag = 'internal scratch']
  %s0 = inlined_call_operand.vmem [shape: f32[2,4,128], index: 0, kind: input, shape index: {}]
  %s1 = inlined_call_operand.vmem [shape: f32[2,1,128], index: 1, kind: output, shape index: {}]
  %s2 = sld [smem:[#allocation0]]
  $region37: #{_lambda_.33} parent=0
    _
  %s4 = ssub.s32 1, %s2
  %s5 = scalar_select 0, %s4, %s2
  loop: start=0, step=1, limit=4
  $region2: #{_lambda_.33} parent=0 // loop_pre_header
    _
  $region3: #{_lambda_.33} parent=0 // loop_header
    %s7 = sphi 0, %s11
    %p8 = scmp.ge.s32.totalorder %s7, 4
    %s17 = sphi 0, %s19
    %s20 = sphi 0, %s17
    %s21 = sphi 0, %s20
    %s37 = sphi 0, %s21
    %s43 = sphi 0, %s45
    %s46 = sphi 0, %s43
    %s47 = sphi 0, %s46
    %s63 = sphi 0, %s47
  $region4: #{_lambda_.33} parent=0 // loop_header_branch
    %10 = sbr.rel (%p8) target = $region8
  $region5: #{_lambda_.33} parent=0 // loop_body
    %s12 = ssub.s32 %s7, 1
    %s13 = ssub.s32 %s7, 2
    %s14 = sadd.s32 %s7, 1
    %s15 = ssub.s32 %s7, %s14
    %p16 = scmp.eq.s32.totalorder %s15, 0
    %s18 = sadd.s32 %s17, 1
    %s19 = scalar_select %p16, %s17, %s18
    %p22 = pneg %p16
    %p23 = scmp.eq.s32.totalorder %s7, 1
    %p24 = por %p22, %p23
    %p25 = scmp.ne.s32.totalorder %s17, %s20
    %p26 = scmp.eq.s32.totalorder %s7, 0
    %p27 = por %p25, %p26
    %p28 = scmp.ne.s32.totalorder %s17, %s20
    %p29 = scmp.eq.s32.totalorder %s12, 1
    %p30 = por %p28, %p29
    %p31 = scmp.ne.s32.totalorder %s20, %s21
    %p32 = scmp.eq.s32.totalorder %s12, 0
    %p33 = por %p31, %p32
    %p34 = scmp.ne.s32.totalorder %s20, %s21
    %p35 = scmp.eq.s32.totalorder %s13, 1
    %p36 = por %p34, %p35
    %p38 = scmp.ne.s32.totalorder %s21, %s37
    %p39 = scmp.eq.s32.totalorder %s13, 0
    %p40 = por %p38, %p39
    %s41 = ssub.s32 %s7, %s14
    %p42 = scmp.eq.s32.totalorder %s41, 0
    %s44 = sadd.s32 %s43, 1
    %s45 = scalar_select %p42, %s43, %s44
    %p48 = pneg %p42
    %p49 = scmp.eq.s32.totalorder %s7, 1
    %p50 = por %p48, %p49
    %p51 = scmp.ne.s32.totalorder %s43, %s46
    %p52 = scmp.eq.s32.totalorder %s7, 0
    %p53 = por %p51, %p52
    %p54 = scmp.ne.s32.totalorder %s43, %s46
    %p55 = scmp.eq.s32.totalorder %s12, 1
    %p56 = por %p54, %p55
    %p57 = scmp.ne.s32.totalorder %s46, %s47
    %p58 = scmp.eq.s32.totalorder %s12, 0
    %p59 = por %p57, %p58
    %p60 = scmp.ne.s32.totalorder %s46, %s47
    %p61 = scmp.eq.s32.totalorder %s13, 1
    %p62 = por %p60, %p61
    %p64 = scmp.ne.s32.totalorder %s47, %s63
    %p65 = scmp.eq.s32.totalorder %s13, 0
    %p66 = por %p64, %p65
    %p67 = scmp.le.s32.totalorder 1, %s7
    %p68 = scmp.lt.s32.totalorder %s7, 3
    %p69 = pnand %p67, %p68
    %p70 = pneg %p69
    // Predicated region
    $region9: #{_lambda_.33} parent=5 // pred_check
      _
    $region10: #{_lambda_.33} parent=5 // pred_check_branch
      %72 = sbr.rel (%p69) target = $region12
    $region11: #{_lambda_.33} parent=5 // pred_region
      %s73 = ssub.s32 %s7, 1
    $region12: #{_lambda_.33} parent=5 // pred_fallthru
      _
    %p74 = scmp.lt.s32.totalorder %s7, 2
    // Predicated region
    $region13: #{_lambda_.33} parent=5 // pred_check
      %p75 = pneg %p74
    $region14: #{_lambda_.33} parent=5 // pred_check_branch
      %77 = sbr.rel (%p75) target = $region16
    $region15: #{_lambda_.33} parent=5 // pred_region
      // Predicated region
      $region17: #{_lambda_.33} parent=15 // pred_check
        %p78 = pneg %p27
      $region18: #{_lambda_.33} parent=15 // pred_check_branch
        %80 = sbr.rel (%p78) target = $region20
      $region19: #{_lambda_.33} parent=15 // pred_region
        %p81 = scmp.lt.s32.totalorder %s7, 1
        %s82 = scalar_select %p81, %s7, 1
        %s83 = smul.addr %s82, 4
        %s84 = scalar_lea.vmem %s0, %s83
      $region20: #{_lambda_.33} parent=15 // pred_fallthru
        _
    $region16: #{_lambda_.33} parent=5 // pred_fallthru
      _
    %p85 = scmp.le.s32.totalorder 1, %s7
    %p86 = scmp.lt.s32.totalorder %s7, 3
    %p87 = pnand %p85, %p86
    %p88 = pneg %p87
    // Predicated region
    $region21: #{_lambda_.33} parent=5 // pred_check
      _
    $region22: #{_lambda_.33} parent=5 // pred_check_branch
      %90 = sbr.rel (%p87) target = $region24
    $region23: #{_lambda_.33} parent=5 // pred_region
      %s91 = ssub.s32 %s7, 1
      %p92 = scmp.lt.s32.totalorder %s12, 1
      %s93 = scalar_select %p92, %s12, 1
      %s94 = smul.addr %s93, 4
      %s95 = scalar_lea.vmem %s0, %s94
      %p96 = pneg %p33
      %p97 = pneg %p30
      %p98 = pneg %p59
      %p99 = pneg %p56
      %p100 = scmp.lt.s32.totalorder %s12, 1
      %s101 = scalar_select %p100, %s12, 1
      %s102 = scalar_lea.vmem %s1, %s101
      %p103 = scmp.lt.s32.totalorder %s12, 1
      %s104 = scalar_select %p103, %s12, 1
      %s105 = smul.addr %s104, 4
      %s106 = scalar_lea.vmem %s0, %s105
      %p107 = scmp.lt.s32.totalorder %s12, 1
      %s108 = scalar_select %p107, %s12, 1
      %s109 = scalar_lea.vmem %s1, %s108
      %v110 = vld [vmem:[%s106] sm:$0xf]
      %vm111 = vcmask 1043456
      %v112 = vsel %vm111, %v110, 0.0
      %v113 = vrot.slane %v112, 4
      %v114 = vadd.f32 %v112, %v113
      %v115 = vrot.slane %v114, 2
      %v116 = vadd.f32 %v114, %v115
      %v117 = vrot.slane %v116, 1
      %v118 = vadd.f32 %v116, %v117
      %v119 = vrcp.pop 4.0
      %v120 = vmul.f32 %v118, %v119
      %121 = vst [vmem:[%s109] sm:$0x1] %v120
      %p122 = scmp.lt.s32.totalorder %s12, 1
      %s123 = scalar_select %p122, %s12, 1
      %s124 = scalar_lea.vmem %s1, %s123
      // Predicated region
      $region25: #{_lambda_.33} parent=23 // pred_check
        %p125 = pneg %p56
      $region26: #{_lambda_.33} parent=23 // pred_check_branch
        %127 = sbr.rel (%p125) target = $region28
      $region27: #{_lambda_.33} parent=23 // pred_region
        _
      $region28: #{_lambda_.33} parent=23 // pred_fallthru
        _
    $region24: #{_lambda_.33} parent=5 // pred_fallthru
      _
    %p128 = scmp.le.s32.totalorder 2, %s7
    // Predicated region
    $region29: #{_lambda_.33} parent=5 // pred_check
      %p129 = pneg %p128
    $region30: #{_lambda_.33} parent=5 // pred_check_branch
      %131 = sbr.rel (%p129) target = $region32
    $region31: #{_lambda_.33} parent=5 // pred_region
      %s132 = ssub.s32 %s7, 2
      // Predicated region
      $region33: #{_lambda_.33} parent=31 // pred_check
        %p133 = pneg %p62
      $region34: #{_lambda_.33} parent=31 // pred_check_branch
        %135 = sbr.rel (%p133) target = $region36
      $region35: #{_lambda_.33} parent=31 // pred_region
        %p136 = scmp.lt.s32.totalorder %s13, 1
        %s137 = scalar_select %p136, %s13, 1
        %s138 = scalar_lea.vmem %s1, %s137
      $region36: #{_lambda_.33} parent=31 // pred_fallthru
        _
    $region32: #{_lambda_.33} parent=5 // pred_fallthru
      _
  $region6: #{_lambda_.33} parent=0 // loop_footer
    %s11 = sadd.s32 1, %s7
  $region7: #{_lambda_.33} parent=0 // loop_footer_branch
    %6 = sbr.rel target = $region3
  $region8: #{_lambda_.33} parent=0 // loop_exit
    _

</llo_original>
